<compile_context>
chip_gen: v6e
topology: v6e:2x2x1
jax: 0.10.0
libtpu: 0.0.40
codegen_flags: <defaults>
</compile_context>

<pallas_src>
import functools

import jax
import jax.numpy as jnp
from jax.experimental import pallas as pl
from jax.experimental.pallas import tpu as pltpu

# ----------------------------- model configuration --------------------------
CFG = dict(
    hidden=32,          # small stand-in for DNABERT-2's 768
    heads=4,
    layers=2,
    intermediate=64,
    vocab=64,
    max_pos=128,
    num_order=72,       # module default num_labels_order
    num_family=303,     # module default num_labels_family
)

_VMEM_SPEC = pl.BlockSpec(memory_space=pltpu.MemorySpace.VMEM)


# ------------------------------- helpers (in-kernel) --------------------------
def _ln_f32(x, g, b, eps=1e-12):
    """LayerNorm over the lane (last) axis, f32 math. g/b are (1, H)."""
    mu = jnp.mean(x, axis=-1, keepdims=True)
    var = jnp.mean(jnp.square(x - mu), axis=-1, keepdims=True)
    return (x - mu) * jax.lax.rsqrt(var + eps) * g + b


# ------------------------------ fused encoder kernel --------------------------
def _encoder_kernel(x_ref, mask_ref, emb_g_ref, emb_b_ref,
                    wqkv_ref, bqkv_ref, wo_ref, bo_ref, ln1g_ref, ln1b_ref,
                    wff1_ref, bff1_ref, wff2_ref, bff2_ref, ln2g_ref, ln2b_ref,
                    o_ref, h_ref, bias_ref, *, batch, seq, num_heads, scale):
    """One grid step = one transformer layer over the whole (B*S, H) activation.

    Grid = (L,) ("arbitrary"); h_ref (VMEM scratch, (B*S, H) f32) carries the activation
    from layer l to layer l+1.  x_ref / mask_ref have constant block indices so they are
    DMA'd once; per-layer weights are DMA'd exactly once each (block index = l).
    """
    l = pl.program_id(0)
    B, S = batch, seq
    H = h_ref.shape[-1]
    Dh = H // num_heads

    # Layer 0: summed embeddings -> embedding LayerNorm; key-mask bias computed once.
    @pl.when(l == 0)
    def _init():
        x0 = x_ref[...].astype(jnp.float32)                         # (B*S, H)
        h_ref[...] = _ln_f32(x0, emb_g_ref[...], emb_b_ref[...])
        bias_ref[...] = (1.0 - mask_ref[...].astype(jnp.float32)) * -1e9   # (B, 1, S)

    x = h_ref[...]                                                   # (B*S, H) f32
    bias = bias_ref[...]                                             # (B, 1, S)

    # --- self-attention ---------------------------------------------------------------
    # Fused QKV projection: one MXU matmul with M = B*S rows.
    qkv = jnp.dot(x, wqkv_ref[0], preferred_element_type=jnp.float32) + bqkv_ref[0]

    # Static per-head loop (see file header for why this is not a single 4-D batched
    # dot_general).  Each head uses the blessed single-batch-dim einsum patterns and the
    # per-head output projection is accumulated, so there is no concatenate / lane
    # re-assembly of the context.
    attn = jnp.zeros((B * S, H), jnp.float32)
    for hh in range(num_heads):                                      # static unroll
        qh = qkv[:, hh * Dh:(hh + 1) * Dh].reshape(B, S, Dh)
        kh = qkv[:, H + hh * Dh:H + (hh + 1) * Dh].reshape(B, S, Dh)
        vh = qkv[:, 2 * H + hh * Dh:2 * H + (hh + 1) * Dh].reshape(B, S, Dh)

        s = jnp.einsum('bqd,bkd->bqk', qh, kh,
                       preferred_element_type=jnp.float32) * scale + bias
        s = s - jnp.max(s, axis=-1, keepdims=True)
        p = jnp.exp(s)
        p = p * pl.reciprocal(jnp.sum(p, axis=-1, keepdims=True), approx=True)
        ctx = jnp.einsum('bqk,bkd->bqd', p, vh,
                         preferred_element_type=jnp.float32)         # (B, S, Dh)
        # Accumulate the output projection head-by-head (W_o pre-split at init).
        attn = attn + jnp.dot(ctx.reshape(B * S, Dh), wo_ref[0, hh],
                              preferred_element_type=jnp.float32)

    attn = attn + bo_ref[0]
    x = _ln_f32(x + attn, ln1g_ref[0], ln1b_ref[0])                  # residual + LN1

    # --- feed-forward -----------------------------------------------------------------
    ff = jnp.dot(x, wff1_ref[0], preferred_element_type=jnp.float32) + bff1_ref[0]
    # tanh-approx GELU (keeps lowering on the EUP; <1e-3 from exact erf-GELU)
    ff = jax.nn.gelu(ff, approximate=True)
    ff = jnp.dot(ff, wff2_ref[0], preferred_element_type=jnp.float32) + bff2_ref[0]
    x = _ln_f32(x + ff, ln2g_ref[0], ln2b_ref[0])                    # residual + LN2

    h_ref[...] = x                                                   # carry to next layer

    # Single HBM writeback for the whole forward (store slot saved on L-1 layers).
    @pl.when(l == pl.num_programs(0) - 1)
    def _finalize():
        o_ref[...] = x.astype(o_ref.dtype)


def encoder(x_flat, mask, params, batch, seq):
    """x_flat: (B*S, H) summed embeddings; mask: (B, 1, S) float (1 = attend)."""
    BS, H = x_flat.shape
    e = params["enc"]
    L = e["w_qkv"].shape[0]
    I = e["w_ff1"].shape[2]
    nH = CFG["heads"]
    assert H % nH == 0
    Dh = H // nH
    scale = 1.0 / (Dh ** 0.5)

    def shared2(a, c):       # layer-independent 2-D param (DMA'd once; index constant)
        return pl.BlockSpec((a, c), lambda l: (0, 0))

    def per_layer(a, c):     # (L, a, c) stacked param, one block per layer
        return pl.BlockSpec((1, a, c), lambda l: (l, 0, 0))

    in_specs = [
        pl.BlockSpec((BS, H), lambda l: (0, 0)),          # x (read only at l == 0)
        pl.BlockSpec((batch, 1, seq), lambda l: (0, 0, 0)),  # raw attention mask
        shared2(1, H), shared2(1, H),                     # embedding LN
        per_layer(H, 3 * H), per_layer(1, 3 * H),         # fused QKV
        pl.BlockSpec((1, nH, Dh, H), lambda l: (l, 0, 0, 0)),  # attn out-proj, head-split
        per_layer(1, H),                                  # attn out-proj bias
        per_layer(1, H), per_layer(1, H),                 # LN1
        per_layer(H, I), per_layer(1, I),                 # FF1
        per_layer(I, H), per_layer(1, H),                 # FF2
        per_layer(1, H), per_layer(1, H),                 # LN2
    ]

    # NOTE: the x block stays (double-)buffered in VMEM across all L steps although it is
    # only read at l == 0; at real sizes alias it to the output (input_output_aliases) or
    # restrict it to the first grid step.  Negligible at these shapes.
    return pl.pallas_call(
        functools.partial(_encoder_kernel, batch=batch, seq=seq,
                          num_heads=nH, scale=scale),
        out_shape=jax.ShapeDtypeStruct((BS, H), x_flat.dtype),
        grid=(L,),
        in_specs=in_specs,
        out_specs=pl.BlockSpec((BS, H), lambda l: (0, 0)),
        scratch_shapes=[pltpu.VMEM((BS, H), jnp.float32),
                        pltpu.VMEM((batch, 1, seq), jnp.float32)],
        compiler_params=pltpu.CompilerParams(
            dimension_semantics=("arbitrary",)),
    )(x_flat, mask,
      params["emb_ln_g"], params["emb_ln_b"],
      e["w_qkv"], e["b_qkv"], e["w_o"], e["b_o"], e["ln1_g"], e["ln1_b"],
      e["w_ff1"], e["b_ff1"], e["w_ff2"], e["b_ff2"], e["ln2_g"], e["ln2_b"])


# ------------------------------ fused dual-head kernel ------------------------
def _heads_kernel(p_ref, w1_ref, b1_ref, w2_ref, o_ref, *, k_pad):
    # t = [ logits_order | pooled @ Wf1 + b_family | zero pad ]           (B, 384)
    p = p_ref[...].astype(jnp.float32)
    t = jnp.dot(p, w1_ref[...], preferred_element_type=jnp.float32) + b1_ref[...]
    # w2 holds Wf2 in rows [:No] (rows [No:128] are zero), columns [No:No+Nf]; the
    # correction contracts only the first 128 (lane-aligned) columns of t, so
    # out = t + t[:, :128] @ w2 adds logits_order @ Wf2 into the family columns only.
    # Output stays one lane-dense 384-wide slab (unmasked full-lane vst).
    o = t + jnp.dot(t[:, :k_pad], w2_ref[...], preferred_element_type=jnp.float32)
    o_ref[...] = o.astype(o_ref.dtype)


def classifier_heads(pooled, w1, b1, w2, num_order, num_family):
    """logits_order = pooled @ Wo + bo
       logits_family = concat(pooled, logits_order) @ Wf + bf
    as one kernel over pre-packed (init-time) lane-dense weight slabs."""
    B = pooled.shape[0]
    n_pad = w1.shape[1]
    out = pl.pallas_call(
        functools.partial(_heads_kernel, k_pad=w2.shape[0]),
        out_shape=jax.ShapeDtypeStruct((B, n_pad), pooled.dtype),
        in_specs=[_VMEM_SPEC] * 4,
        out_specs=_VMEM_SPEC,
    )(pooled, w1, b1, w2)
    return out[:, :num_order], out[:, num_order:num_order + num_family]


# ------------------------------ parameter init --------------------------------
def init_params(key, cfg):
    H, I, L = cfg["hidden"], cfg["intermediate"], cfg["layers"]
    V, P = cfg["vocab"], cfg["max_pos"]
    No, Nf = cfg["num_order"], cfg["num_family"]
    nH = cfg["heads"]
    Dh = H // nH
    ks = iter(jax.random.split(key, 16))

    def w(shape):
        return jax.random.normal(next(ks), shape, jnp.float32) * 0.02

    # Classifier heads (raw nn.Linear shapes).
    cls_order_w = w((H, No))
    cls_order_b = jnp.zeros((No,), jnp.float32)
    cls_family_w = w((H + No, Nf))          # rows [:H] <- pooled, rows [H:] <- logits_order
    cls_family_b = jnp.zeros((Nf,), jnp.float32)

    # One-time packing into lane-dense slabs (hoisted out of the forward path).
    n_pad = ((No + Nf + 127) // 128) * 128          # 72 + 303 = 375 -> 384 lanes
    k_pad = 128                                     # order-logit K padded to one lane tile
    head_w1 = jnp.zeros((H, n_pad), jnp.float32)
    head_w1 = head_w1.at[:, :No].set(cls_order_w).at[:, No:No + Nf].set(cls_family_w[:H])
    head_b1 = jnp.zeros((1, n_pad), jnp.float32)
    head_b1 = head_b1.at[0, :No].set(cls_order_b).at[0, No:No + Nf].set(cls_family_b)
    head_w2 = jnp.zeros((k_pad, n_pad), jnp.float32)
    head_w2 = head_w2.at[:No, No:No + Nf].set(cls_family_w[H:])

    params = {
        "word_emb": w((V, H)),
        "pos_emb": w((P, H)),
        "type_emb": w((2, H)),
        "emb_ln_g": jnp.ones((1, H), jnp.float32),
        "emb_ln_b": jnp.zeros((1, H), jnp.float32),
        # per-layer weights stacked along a leading L axis so the encoder is one
        # pipelined pallas_call with L as its only grid dimension.
        "enc": {
            "w_qkv": w((L, H, 3 * H)), "b_qkv": jnp.zeros((L, 1, 3 * H), jnp.float32),
            # attention output projection stored head-split: (L, nH, Dh, H)
            "w_o": w((L, H, H)).reshape(L, nH, Dh, H),
            "b_o": jnp.zeros((L, 1, H), jnp.float32),
            "ln1_g": jnp.ones((L, 1, H), jnp.float32),
            "ln1_b": jnp.zeros((L, 1, H), jnp.float32),
            "w_ff1": w((L, H, I)),     "b_ff1": jnp.zeros((L, 1, I), jnp.float32),
            "w_ff2": w((L, I, H)),     "b_ff2": jnp.zeros((L, 1, H), jnp.float32),
            "ln2_g": jnp.ones((L, 1, H), jnp.float32),
            "ln2_b": jnp.zeros((L, 1, H), jnp.float32),
        },
        # raw head weights kept for reference; the packed slabs below are what run.
        "cls_order_w": cls_order_w, "cls_order_b": cls_order_b,
        "cls_family_w": cls_family_w, "cls_family_b": cls_family_b,
        "head_w1": head_w1, "head_b1": head_b1, "head_w2": head_w2,
    }
    return params


# --------------------------------- forward ------------------------------------
def forward(params, input_ids, attention_mask, token_type_ids=None, labels=None):
    B, S = input_ids.shape
    H = CFG["hidden"]
    if token_type_ids is None:
        token_type_ids = jnp.zeros((B, S), jnp.int32)

    # Embedding gathers are XLA glue; the embedding LayerNorm is fused into the encoder
    # kernel at layer index 0.  Batch is pre-flattened into the matmul M dimension.
    x = (params["word_emb"][input_ids]
         + params["pos_emb"][:S][None, :, :]
         + params["type_emb"][token_type_ids])
    x_flat = x.reshape(B * S, H)
    mask = attention_mask.astype(jnp.float32).reshape(B, 1, S)

    seq_flat = encoder(x_flat, mask, params, B, S)   # one pallas_call for the whole stack
    pooled = seq_flat.reshape(B, S, H)[:, 0, :]      # outputs[0][:, 0, :]
    # dropout (p=0.1) in eval mode = identity

    logits_order, logits_family = classifier_heads(
        pooled, params["head_w1"], params["head_b1"], params["head_w2"],
        CFG["num_order"], CFG["num_family"])

    loss = None
    if labels is not None:
        # Plain-JAX cross-entropy glue, matching nn.CrossEntropyLoss (mean reduction).
        def ce(logits, lab):
            logp = jax.nn.log_softmax(logits, axis=-1)
            return -jnp.mean(jnp.take_along_axis(logp, lab[:, None], axis=-1))
        loss = ce(logits_order, labels[:, 0]) + ce(logits_family, labels[:, 1])

    return loss, (logits_order, logits_family)


# ----------------------------------- main --------------------------------------
if __name__ == "__main__":
    key = jax.random.PRNGKey(0)
    pkey, ikey = jax.random.split(key)

    B, S = 2, 8
    params = init_params(pkey, CFG)
    input_ids = jax.random.randint(ikey, (B, S), 0, CFG["vocab"], dtype=jnp.int32)
    attention_mask = jnp.ones((B, S), dtype=jnp.float32)

    fwd = jax.jit(lambda p, ids, mask: forward(p, ids, mask)[1])
    logits_order, logits_family = fwd(params, input_ids, attention_mask)
    jax.block_until_ready((logits_order, logits_family))

    assert logits_order.shape == (B, CFG["num_order"])
    assert logits_family.shape == (B, CFG["num_family"])
    assert bool(jnp.all(jnp.isfinite(logits_order)))
    assert bool(jnp.all(jnp.isfinite(logits_family)))
    print("KERNEL_OK")
</pallas_src>

<mosaic_0001>
module attributes {stable_mosaic.version = 11 : i64} {
  func.func @_heads_kernel(%arg0: memref<2x32xf32, #tpu.memory_space<vmem>>, %arg1: memref<32x384xf32, #tpu.memory_space<vmem>>, %arg2: memref<1x384xf32, #tpu.memory_space<vmem>>, %arg3: memref<128x384xf32, #tpu.memory_space<vmem>>, %arg4: memref<2x384xf32, #tpu.memory_space<vmem>>) attributes {dimension_semantics = [], scalar_prefetch = 0 : i64, scratch_operands = 0 : i64, tpu.core_type = #tpu.core_type<tc>} {
    %c0 = arith.constant 0 : index
    %c0_0 = arith.constant 0 : index
    %0 = vector.load %arg0[%c0, %c0_0] : memref<2x32xf32, #tpu.memory_space<vmem>>, vector<2x32xf32>
    %c0_1 = arith.constant 0 : index
    %c0_2 = arith.constant 0 : index
    %1 = vector.load %arg1[%c0_1, %c0_2] : memref<32x384xf32, #tpu.memory_space<vmem>>, vector<32x384xf32>
    %cst = arith.constant dense<0.000000e+00> : vector<2x384xf32>
    %2 = tpu.matmul %0, %1, %cst {dimension_numbers = #tpu.dot_dimension_numbers<[1], [0], [0], [1], [0, 0, 1, 1], [], []>} : vector<2x32xf32>, vector<32x384xf32>, vector<2x384xf32> -> vector<2x384xf32>
    %c0_3 = arith.constant 0 : index
    %c0_4 = arith.constant 0 : index
    %3 = vector.load %arg2[%c0_3, %c0_4] : memref<1x384xf32, #tpu.memory_space<vmem>>, vector<1x384xf32>
    %4 = vector.broadcast %3 : vector<1x384xf32> to vector<2x384xf32>
    %5 = arith.addf %2, %4 : vector<2x384xf32>
    %6 = vector.extract_strided_slice %5 {offsets = [0, 0], sizes = [2, 128], strides = [1, 1]} : vector<2x384xf32> to vector<2x128xf32>
    %c0_5 = arith.constant 0 : index
    %c0_6 = arith.constant 0 : index
    %7 = vector.load %arg3[%c0_5, %c0_6] : memref<128x384xf32, #tpu.memory_space<vmem>>, vector<128x384xf32>
    %cst_7 = arith.constant dense<0.000000e+00> : vector<2x384xf32>
    %8 = tpu.matmul %6, %7, %cst_7 {dimension_numbers = #tpu.dot_dimension_numbers<[1], [0], [0], [1], [0, 0, 1, 1], [], []>} : vector<2x128xf32>, vector<128x384xf32>, vector<2x384xf32> -> vector<2x384xf32>
    %9 = arith.addf %5, %8 : vector<2x384xf32>
    %c0_8 = arith.constant 0 : index
    %c0_9 = arith.constant 0 : index
    %10 = vector.load %arg4[%c0_8, %c0_9] : memref<2x384xf32, #tpu.memory_space<vmem>>, vector<2x384xf32>
    tpu.vector_store %arg4[%c0_8, %c0_9], %9 {strides = array<i32>} : memref<2x384xf32, #tpu.memory_space<vmem>>, vector<2x384xf32>,
    return
  }
}

module attributes {stable_mosaic.version = 11 : i64} {
  func.func @_encoder_kernel(%arg0: i32, %arg1: memref<16x32xf32, #tpu.memory_space<vmem>>, %arg2: memref<2x1x8xf32, #tpu.memory_space<vmem>>, %arg3: memref<1x32xf32, #tpu.memory_space<vmem>>, %arg4: memref<1x32xf32, #tpu.memory_space<vmem>>, %arg5: memref<1x32x96xf32, #tpu.memory_space<vmem>>, %arg6: memref<1x1x96xf32, #tpu.memory_space<vmem>>, %arg7: memref<1x4x8x32xf32, #tpu.memory_space<vmem>>, %arg8: memref<1x1x32xf32, #tpu.memory_space<vmem>>, %arg9: memref<1x1x32xf32, #tpu.memory_space<vmem>>, %arg10: memref<1x1x32xf32, #tpu.memory_space<vmem>>, %arg11: memref<1x32x64xf32, #tpu.memory_space<vmem>>, %arg12: memref<1x1x64xf32, #tpu.memory_space<vmem>>, %arg13: memref<1x64x32xf32, #tpu.memory_space<vmem>>, %arg14: memref<1x1x32xf32, #tpu.memory_space<vmem>>, %arg15: memref<1x1x32xf32, #tpu.memory_space<vmem>>, %arg16: memref<1x1x32xf32, #tpu.memory_space<vmem>>, %arg17: memref<16x32xf32, #tpu.memory_space<vmem>>, %arg18: memref<16x32xf32, #tpu.memory_space<vmem>>, %arg19: memref<2x1x8xf32, #tpu.memory_space<vmem>>) attributes {dimension_semantics = [#tpu.dimension_semantics<arbitrary>], iteration_bounds = array<i64: 2>, scalar_prefetch = 0 : i64, scratch_operands = 2 : i64, tpu.core_type = #tpu.core_type<tc>, window_params = [{pipeline_mode = #tpu.pipeline_mode<synchronous>, transform_indices = @transform_0, window_bounds = array<i64: 16, 32>}, {pipeline_mode = #tpu.pipeline_mode<synchronous>, transform_indices = @transform_1, window_bounds = array<i64: 2, 1, 8>}, {pipeline_mode = #tpu.pipeline_mode<synchronous>, transform_indices = @transform_2, window_bounds = array<i64: 1, 32>}, {pipeline_mode = #tpu.pipeline_mode<synchronous>, transform_indices = @transform_3, window_bounds = array<i64: 1, 32>}, {transform_indices = @transform_4, window_bounds = array<i64: 1, 32, 96>}, {transform_indices = @transform_5, window_bounds = array<i64: 1, 1, 96>}, {transform_indices = @transform_6, window_bounds = array<i64: 1, 4, 8, 32>}, {transform_indices = @transform_7, window_bounds = array<i64: 1, 1, 32>}, {transform_indices = @transform_8, window_bounds = array<i64: 1, 1, 32>}, {transform_indices = @transform_9, window_bounds = array<i64: 1, 1, 32>}, {transform_indices = @transform_10, window_bounds = array<i64: 1, 32, 64>}, {transform_indices = @transform_11, window_bounds = array<i64: 1, 1, 64>}, {transform_indices = @transform_12, window_bounds = array<i64: 1, 64, 32>}, {transform_indices = @transform_13, window_bounds = array<i64: 1, 1, 32>}, {transform_indices = @transform_14, window_bounds = array<i64: 1, 1, 32>}, {transform_indices = @transform_15, window_bounds = array<i64: 1, 1, 32>}, {pipeline_mode = #tpu.pipeline_mode<synchronous>, transform_indices = @transform_16, window_bounds = array<i64: 16, 32>}]} {
    %c0_i32 = arith.constant 0 : i32
    %0 = arith.cmpi eq, %arg0, %c0_i32 : i32
    %1 = arith.extui %0 : i1 to i32
    %c0_i32_0 = arith.constant 0 : i32
    %2 = arith.cmpi ne, %1, %c0_i32_0 : i32
    scf.if %2 {
      %c0_95 = arith.constant 0 : index
      %c0_96 = arith.constant 0 : index
      %210 = vector.load %arg1[%c0_95, %c0_96] : memref<16x32xf32, #tpu.memory_space<vmem>>, vector<16x32xf32>
      %c0_97 = arith.constant 0 : index
      %c0_98 = arith.constant 0 : index
      %211 = vector.load %arg3[%c0_97, %c0_98] : memref<1x32xf32, #tpu.memory_space<vmem>>, vector<1x32xf32>
      %c0_99 = arith.constant 0 : index
      %c0_100 = arith.constant 0 : index
      %212 = vector.load %arg4[%c0_99, %c0_100] : memref<1x32xf32, #tpu.memory_space<vmem>>, vector<1x32xf32>
      %cst_101 = arith.constant dense<0.000000e+00> : vector<16xf32>
      %213 = vector.multi_reduction <add>, %210, %cst_101 [1] : vector<16x32xf32> to vector<16xf32>
      %214 = vector.shape_cast %213 : vector<16xf32> to vector<16x1xf32>
      %cst_102 = arith.constant 3.200000e+01 : f32
      %215 = vector.broadcast %cst_102 : f32 to vector<16x1xf32>
      %216 = arith.divf %214, %215 : vector<16x1xf32>
      %217 = vector.broadcast %216 : vector<16x1xf32> to vector<16x32xf32>
      %218 = arith.subf %210, %217 : vector<16x32xf32>
      %219 = arith.mulf %218, %218 : vector<16x32xf32>
      %cst_103 = arith.constant dense<0.000000e+00> : vector<16xf32>
      %220 = vector.multi_reduction <add>, %219, %cst_103 [1] : vector<16x32xf32> to vector<16xf32>
      %221 = vector.shape_cast %220 : vector<16xf32> to vector<16x1xf32>
      %cst_104 = arith.constant 3.200000e+01 : f32
      %222 = vector.broadcast %cst_104 : f32 to vector<16x1xf32>
      %223 = arith.divf %221, %222 : vector<16x1xf32>
      %224 = vector.broadcast %216 : vector<16x1xf32> to vector<16x32xf32>
      %225 = arith.subf %210, %224 : vector<16x32xf32>
      %cst_105 = arith.constant 9.99999996E-13 : f32
      %226 = vector.broadcast %cst_105 : f32 to vector<16x1xf32>
      %227 = arith.addf %223, %226 : vector<16x1xf32>
      %228 = math.rsqrt %227 : vector<16x1xf32>
      %229 = vector.broadcast %228 : vector<16x1xf32> to vector<16x32xf32>
      %230 = arith.mulf %225, %229 : vector<16x32xf32>
      %231 = vector.broadcast %211 : vector<1x32xf32> to vector<16x32xf32>
      %232 = arith.mulf %230, %231 : vector<16x32xf32>
      %233 = vector.broadcast %212 : vector<1x32xf32> to vector<16x32xf32>
      %234 = arith.addf %232, %233 : vector<16x32xf32>
      %c0_106 = arith.constant 0 : index
      %c0_107 = arith.constant 0 : index
      %235 = vector.load %arg18[%c0_106, %c0_107] : memref<16x32xf32, #tpu.memory_space<vmem>>, vector<16x32xf32>
      tpu.vector_store %arg18[%c0_106, %c0_107], %234 {strides = array<i32>} : memref<16x32xf32, #tpu.memory_space<vmem>>, vector<16x32xf32>,
      %c0_108 = arith.constant 0 : index
      %c0_109 = arith.constant 0 : index
      %c0_110 = arith.constant 0 : index
      %236 = vector.load %arg2[%c0_108, %c0_109, %c0_110] : memref<2x1x8xf32, #tpu.memory_space<vmem>>, vector<2x1x8xf32>
      %cst_111 = arith.constant 1.000000e+00 : f32
      %237 = vector.broadcast %cst_111 : f32 to vector<2x1x8xf32>
      %238 = arith.subf %237, %236 : vector<2x1x8xf32>
      %cst_112 = arith.constant -1.000000e+09 : f32
      %239 = vector.broadcast %cst_112 : f32 to vector<2x1x8xf32>
      %240 = arith.mulf %238, %239 : vector<2x1x8xf32>
      %c0_113 = arith.constant 0 : index
      %c0_114 = arith.constant 0 : index
      %c0_115 = arith.constant 0 : index
      %241 = vector.load %arg19[%c0_113, %c0_114, %c0_115] : memref<2x1x8xf32, #tpu.memory_space<vmem>>, vector<2x1x8xf32>
      tpu.vector_store %arg19[%c0_113, %c0_114, %c0_115], %240 {strides = array<i32>} : memref<2x1x8xf32, #tpu.memory_space<vmem>>, vector<2x1x8xf32>,
    } else {
    }
    %c0 = arith.constant 0 : index
    %c0_1 = arith.constant 0 : index
    %3 = vector.load %arg18[%c0, %c0_1] : memref<16x32xf32, #tpu.memory_space<vmem>>, vector<16x32xf32>
    %c0_2 = arith.constant 0 : index
    %c0_3 = arith.constant 0 : index
    %c0_4 = arith.constant 0 : index
    %4 = vector.load %arg19[%c0_2, %c0_3, %c0_4] : memref<2x1x8xf32, #tpu.memory_space<vmem>>, vector<2x1x8xf32>
    %c0_5 = arith.constant 0 : index
    %c0_6 = arith.constant 0 : index
    %c0_7 = arith.constant 0 : index
    %5 = vector.load %arg5[%c0_5, %c0_6, %c0_7] : memref<1x32x96xf32, #tpu.memory_space<vmem>>, vector<1x32x96xf32>
    %6 = vector.shape_cast %5 : vector<1x32x96xf32> to vector<32x96xf32>
    %cst = arith.constant dense<0.000000e+00> : vector<16x96xf32>
    %7 = tpu.matmul %3, %6, %cst {dimension_numbers = #tpu.dot_dimension_numbers<[1], [0], [0], [1], [0, 0, 1, 1], [], []>} : vector<16x32xf32>, vector<32x96xf32>, vector<16x96xf32> -> vector<16x96xf32>
    %c0_8 = arith.constant 0 : index
    %c0_9 = arith.constant 0 : index
    %c0_10 = arith.constant 0 : index
    %8 = vector.load %arg6[%c0_8, %c0_9, %c0_10] : memref<1x1x96xf32, #tpu.memory_space<vmem>>, vector<1x1x96xf32>
    %9 = vector.shape_cast %8 : vector<1x1x96xf32> to vector<1x96xf32>
    %10 = vector.broadcast %9 : vector<1x96xf32> to vector<16x96xf32>
    %11 = arith.addf %7, %10 : vector<16x96xf32>
    %cst_11 = arith.constant 0.000000e+00 : f32
    %12 = vector.broadcast %cst_11 : f32 to vector<16x32xf32>
    %13 = vector.extract_strided_slice %11 {offsets = [0, 0], sizes = [16, 8], strides = [1, 1]} : vector<16x96xf32> to vector<16x8xf32>
    %14 = vector.shape_cast %13 : vector<16x8xf32> to vector<2x8x8xf32>
    %15 = vector.extract_strided_slice %11 {offsets = [0, 32], sizes = [16, 8], strides = [1, 1]} : vector<16x96xf32> to vector<16x8xf32>
    %16 = vector.shape_cast %15 : vector<16x8xf32> to vector<2x8x8xf32>
    %17 = vector.extract_strided_slice %11 {offsets = [0, 64], sizes = [16, 8], strides = [1, 1]} : vector<16x96xf32> to vector<16x8xf32>
    %18 = vector.shape_cast %17 : vector<16x8xf32> to vector<2x8x8xf32>
    "tpu.trace_start"() <{level = 10 : i32, message = "bqd,bkd->bqk"}> : () -> ()
    %cst_12 = arith.constant dense<0.000000e+00> : vector<2x8x8xf32>
    %19 = tpu.matmul %14, %16, %cst_12 {dimension_numbers = #tpu.dot_dimension_numbers<[2], [2], [1], [1], [0, 0, 0, 1, 1, 1], [0], [0]>} : vector<2x8x8xf32>, vector<2x8x8xf32>, vector<2x8x8xf32> -> vector<2x8x8xf32>
    "tpu.trace_stop"() : () -> ()
    %cst_13 = arith.constant 0.353553385 : f32
    %20 = vector.broadcast %cst_13 : f32 to vector<2x8x8xf32>
    %21 = arith.mulf %19, %20 : vector<2x8x8xf32>
    %22 = vector.broadcast %4 : vector<2x1x8xf32> to vector<2x8x8xf32>
    %23 = arith.addf %21, %22 : vector<2x8x8xf32>
    %cst_14 = arith.constant dense<0xFF800000> : vector<2x8xf32>
    %24 = vector.multi_reduction <maximumf>, %23, %cst_14 [2] : vector<2x8x8xf32> to vector<2x8xf32>
    %25 = vector.shape_cast %24 : vector<2x8xf32> to vector<2x8x1xf32>
    %26 = vector.broadcast %25 : vector<2x8x1xf32> to vector<2x8x8xf32>
    %27 = arith.subf %23, %26 : vector<2x8x8xf32>
    %28 = math.exp %27 : vector<2x8x8xf32>
    %cst_15 = arith.constant dense<0.000000e+00> : vector<2x8xf32>
    %29 = vector.multi_reduction <add>, %28, %cst_15 [2] : vector<2x8x8xf32> to vector<2x8xf32>
    %30 = vector.shape_cast %29 : vector<2x8xf32> to vector<2x8x1xf32>
    %31 = tpu.reciprocal %30 {approx = true} : vector<2x8x1xf32> -> vector<2x8x1xf32>
    %32 = vector.broadcast %31 : vector<2x8x1xf32> to vector<2x8x8xf32>
    %33 = arith.mulf %28, %32 : vector<2x8x8xf32>
    "tpu.trace_start"() <{level = 10 : i32, message = "bqk,bkd->bqd"}> : () -> ()
    %cst_16 = arith.constant dense<0.000000e+00> : vector<2x8x8xf32>
    %34 = tpu.matmul %33, %18, %cst_16 {dimension_numbers = #tpu.dot_dimension_numbers<[2], [1], [1], [2], [0, 0, 0, 1, 1, 2], [0], [0]>} : vector<2x8x8xf32>, vector<2x8x8xf32>, vector<2x8x8xf32> -> vector<2x8x8xf32>
    "tpu.trace_stop"() : () -> ()
    %35 = vector.shape_cast %34 : vector<2x8x8xf32> to vector<16x8xf32>
    %c0_17 = arith.constant 0 : index
    %c0_18 = arith.constant 0 : index
    %c0_19 = arith.constant 0 : index
    %c0_20 = arith.constant 0 : index
    %36 = vector.load %arg7[%c0_17, %c0_18, %c0_19, %c0_20] : memref<1x4x8x32xf32, #tpu.memory_space<vmem>>, vector<1x1x8x32xf32>
    %37 = vector.shape_cast %36 : vector<1x1x8x32xf32> to vector<8x32xf32>
    %cst_21 = arith.constant dense<0.000000e+00> : vector<16x32xf32>
    %38 = tpu.matmul %35, %37, %cst_21 {dimension_numbers = #tpu.dot_dimension_numbers<[1], [0], [0], [1], [0, 0, 1, 1], [], []>} : vector<16x8xf32>, vector<8x32xf32>, vector<16x32xf32> -> vector<16x32xf32>
    %39 = arith.addf %12, %38 : vector<16x32xf32>
    %40 = vector.extract_strided_slice %11 {offsets = [0, 8], sizes = [16, 8], strides = [1, 1]} : vector<16x96xf32> to vector<16x8xf32>
    %41 = vector.shape_cast %40 : vector<16x8xf32> to vector<2x8x8xf32>
    %42 = vector.extract_strided_slice %11 {offsets = [0, 40], sizes = [16, 8], strides = [1, 1]} : vector<16x96xf32> to vector<16x8xf32>
    %43 = vector.shape_cast %42 : vector<16x8xf32> to vector<2x8x8xf32>
    %44 = vector.extract_strided_slice %11 {offsets = [0, 72], sizes = [16, 8], strides = [1, 1]} : vector<16x96xf32> to vector<16x8xf32>
    %45 = vector.shape_cast %44 : vector<16x8xf32> to vector<2x8x8xf32>
    "tpu.trace_start"() <{level = 10 : i32, message = "bqd,bkd->bqk"}> : () -> ()
    %cst_22 = arith.constant dense<0.000000e+00> : vector<2x8x8xf32>
    %46 = tpu.matmul %41, %43, %cst_22 {dimension_numbers = #tpu.dot_dimension_numbers<[2], [2], [1], [1], [0, 0, 0, 1, 1, 1], [0], [0]>} : vector<2x8x8xf32>, vector<2x8x8xf32>, vector<2x8x8xf32> -> vector<2x8x8xf32>
    "tpu.trace_stop"() : () -> ()
    %cst_23 = arith.constant 0.353553385 : f32
    %47 = vector.broadcast %cst_23 : f32 to vector<2x8x8xf32>
    %48 = arith.mulf %46, %47 : vector<2x8x8xf32>
    %49 = vector.broadcast %4 : vector<2x1x8xf32> to vector<2x8x8xf32>
    %50 = arith.addf %48, %49 : vector<2x8x8xf32>
    %cst_24 = arith.constant dense<0xFF800000> : vector<2x8xf32>
    %51 = vector.multi_reduction <maximumf>, %50, %cst_24 [2] : vector<2x8x8xf32> to vector<2x8xf32>
    %52 = vector.shape_cast %51 : vector<2x8xf32> to vector<2x8x1xf32>
    %53 = vector.broadcast %52 : vector<2x8x1xf32> to vector<2x8x8xf32>
    %54 = arith.subf %50, %53 : vector<2x8x8xf32>
    %55 = math.exp %54 : vector<2x8x8xf32>
    %cst_25 = arith.constant dense<0.000000e+00> : vector<2x8xf32>
    %56 = vector.multi_reduction <add>, %55, %cst_25 [2] : vector<2x8x8xf32> to vector<2x8xf32>
    %57 = vector.shape_cast %56 : vector<2x8xf32> to vector<2x8x1xf32>
    %58 = tpu.reciprocal %57 {approx = true} : vector<2x8x1xf32> -> vector<2x8x1xf32>
    %59 = vector.broadcast %58 : vector<2x8x1xf32> to vector<2x8x8xf32>
    %60 = arith.mulf %55, %59 : vector<2x8x8xf32>
    "tpu.trace_start"() <{level = 10 : i32, message = "bqk,bkd->bqd"}> : () -> ()
    %cst_26 = arith.constant dense<0.000000e+00> : vector<2x8x8xf32>
    %61 = tpu.matmul %60, %45, %cst_26 {dimension_numbers = #tpu.dot_dimension_numbers<[2], [1], [1], [2], [0, 0, 0, 1, 1, 2], [0], [0]>} : vector<2x8x8xf32>, vector<2x8x8xf32>, vector<2x8x8xf32> -> vector<2x8x8xf32>
    "tpu.trace_stop"() : () -> ()
    %62 = vector.shape_cast %61 : vector<2x8x8xf32> to vector<16x8xf32>
    %c0_27 = arith.constant 0 : index
    %c1 = arith.constant 1 : index
    %c0_28 = arith.constant 0 : index
    %c0_29 = arith.constant 0 : index
    %63 = vector.load %arg7[%c0_27, %c1, %c0_28, %c0_29] : memref<1x4x8x32xf32, #tpu.memory_space<vmem>>, vector<1x1x8x32xf32>
    %64 = vector.shape_cast %63 : vector<1x1x8x32xf32> to vector<8x32xf32>
    %cst_30 = arith.constant dense<0.000000e+00> : vector<16x32xf32>
    %65 = tpu.matmul %62, %64, %cst_30 {dimension_numbers = #tpu.dot_dimension_numbers<[1], [0], [0], [1], [0, 0, 1, 1], [], []>} : vector<16x8xf32>, vector<8x32xf32>, vector<16x32xf32> -> vector<16x32xf32>
    %66 = arith.addf %39, %65 : vector<16x32xf32>
    %67 = vector.extract_strided_slice %11 {offsets = [0, 16], sizes = [16, 8], strides = [1, 1]} : vector<16x96xf32> to vector<16x8xf32>
    %68 = vector.shape_cast %67 : vector<16x8xf32> to vector<2x8x8xf32>
    %69 = vector.extract_strided_slice %11 {offsets = [0, 48], sizes = [16, 8], strides = [1, 1]} : vector<16x96xf32> to vector<16x8xf32>
    %70 = vector.shape_cast %69 : vector<16x8xf32> to vector<2x8x8xf32>
    %71 = vector.extract_strided_slice %11 {offsets = [0, 80], sizes = [16, 8], strides = [1, 1]} : vector<16x96xf32> to vector<16x8xf32>
    %72 = vector.shape_cast %71 : vector<16x8xf32> to vector<2x8x8xf32>
    "tpu.trace_start"() <{level = 10 : i32, message = "bqd,bkd->bqk"}> : () -> ()
    %cst_31 = arith.constant dense<0.000000e+00> : vector<2x8x8xf32>
    %73 = tpu.matmul %68, %70, %cst_31 {dimension_numbers = #tpu.dot_dimension_numbers<[2], [2], [1], [1], [0, 0, 0, 1, 1, 1], [0], [0]>} : vector<2x8x8xf32>, vector<2x8x8xf32>, vector<2x8x8xf32> -> vector<2x8x8xf32>
    "tpu.trace_stop"() : () -> ()
    %cst_32 = arith.constant 0.353553385 : f32
    %74 = vector.broadcast %cst_32 : f32 to vector<2x8x8xf32>
    %75 = arith.mulf %73, %74 : vector<2x8x8xf32>
    %76 = vector.broadcast %4 : vector<2x1x8xf32> to vector<2x8x8xf32>
    %77 = arith.addf %75, %76 : vector<2x8x8xf32>
    %cst_33 = arith.constant dense<0xFF800000> : vector<2x8xf32>
    %78 = vector.multi_reduction <maximumf>, %77, %cst_33 [2] : vector<2x8x8xf32> to vector<2x8xf32>
    %79 = vector.shape_cast %78 : vector<2x8xf32> to vector<2x8x1xf32>
    %80 = vector.broadcast %79 : vector<2x8x1xf32> to vector<2x8x8xf32>
    %81 = arith.subf %77, %80 : vector<2x8x8xf32>
    %82 = math.exp %81 : vector<2x8x8xf32>
    %cst_34 = arith.constant dense<0.000000e+00> : vector<2x8xf32>
    %83 = vector.multi_reduction <add>, %82, %cst_34 [2] : vector<2x8x8xf32> to vector<2x8xf32>
    %84 = vector.shape_cast %83 : vector<2x8xf32> to vector<2x8x1xf32>
    %85 = tpu.reciprocal %84 {approx = true} : vector<2x8x1xf32> -> vector<2x8x1xf32>
    %86 = vector.broadcast %85 : vector<2x8x1xf32> to vector<2x8x8xf32>
    %87 = arith.mulf %82, %86 : vector<2x8x8xf32>
    "tpu.trace_start"() <{level = 10 : i32, message = "bqk,bkd->bqd"}> : () -> ()
    %cst_35 = arith.constant dense<0.000000e+00> : vector<2x8x8xf32>
    %88 = tpu.matmul %87, %72, %cst_35 {dimension_numbers = #tpu.dot_dimension_numbers<[2], [1], [1], [2], [0, 0, 0, 1, 1, 2], [0], [0]>} : vector<2x8x8xf32>, vector<2x8x8xf32>, vector<2x8x8xf32> -> vector<2x8x8xf32>
    "tpu.trace_stop"() : () -> ()
    %89 = vector.shape_cast %88 : vector<2x8x8xf32> to vector<16x8xf32>
    %c0_36 = arith.constant 0 : index
    %c2 = arith.constant 2 : index
    %c0_37 = arith.constant 0 : index
    %c0_38 = arith.constant 0 : index
    %90 = vector.load %arg7[%c0_36, %c2, %c0_37, %c0_38] : memref<1x4x8x32xf32, #tpu.memory_space<vmem>>, vector<1x1x8x32xf32>
    %91 = vector.shape_cast %90 : vector<1x1x8x32xf32> to vector<8x32xf32>
    %cst_39 = arith.constant dense<0.000000e+00> : vector<16x32xf32>
    %92 = tpu.matmul %89, %91, %cst_39 {dimension_numbers = #tpu.dot_dimension_numbers<[1], [0], [0], [1], [0, 0, 1, 1], [], []>} : vector<16x8xf32>, vector<8x32xf32>, vector<16x32xf32> -> vector<16x32xf32>
    %93 = arith.addf %66, %92 : vector<16x32xf32>
    %94 = vector.extract_strided_slice %11 {offsets = [0, 24], sizes = [16, 8], strides = [1, 1]} : vector<16x96xf32> to vector<16x8xf32>
    %95 = vector.shape_cast %94 : vector<16x8xf32> to vector<2x8x8xf32>
    %96 = vector.extract_strided_slice %11 {offsets = [0, 56], sizes = [16, 8], strides = [1, 1]} : vector<16x96xf32> to vector<16x8xf32>
    %97 = vector.shape_cast %96 : vector<16x8xf32> to vector<2x8x8xf32>
    %98 = vector.extract_strided_slice %11 {offsets = [0, 88], sizes = [16, 8], strides = [1, 1]} : vector<16x96xf32> to vector<16x8xf32>
    %99 = vector.shape_cast %98 : vector<16x8xf32> to vector<2x8x8xf32>
    "tpu.trace_start"() <{level = 10 : i32, message = "bqd,bkd->bqk"}> : () -> ()
    %cst_40 = arith.constant dense<0.000000e+00> : vector<2x8x8xf32>
    %100 = tpu.matmul %95, %97, %cst_40 {dimension_numbers = #tpu.dot_dimension_numbers<[2], [2], [1], [1], [0, 0, 0, 1, 1, 1], [0], [0]>} : vector<2x8x8xf32>, vector<2x8x8xf32>, vector<2x8x8xf32> -> vector<2x8x8xf32>
    "tpu.trace_stop"() : () -> ()
    %cst_41 = arith.constant 0.353553385 : f32
    %101 = vector.broadcast %cst_41 : f32 to vector<2x8x8xf32>
    %102 = arith.mulf %100, %101 : vector<2x8x8xf32>
    %103 = vector.broadcast %4 : vector<2x1x8xf32> to vector<2x8x8xf32>
    %104 = arith.addf %102, %103 : vector<2x8x8xf32>
    %cst_42 = arith.constant dense<0xFF800000> : vector<2x8xf32>
    %105 = vector.multi_reduction <maximumf>, %104, %cst_42 [2] : vector<2x8x8xf32> to vector<2x8xf32>
    %106 = vector.shape_cast %105 : vector<2x8xf32> to vector<2x8x1xf32>
    %107 = vector.broadcast %106 : vector<2x8x1xf32> to vector<2x8x8xf32>
    %108 = arith.subf %104, %107 : vector<2x8x8xf32>
    %109 = math.exp %108 : vector<2x8x8xf32>
    %cst_43 = arith.constant dense<0.000000e+00> : vector<2x8xf32>
    %110 = vector.multi_reduction <add>, %109, %cst_43 [2] : vector<2x8x8xf32> to vector<2x8xf32>
    %111 = vector.shape_cast %110 : vector<2x8xf32> to vector<2x8x1xf32>
    %112 = tpu.reciprocal %111 {approx = true} : vector<2x8x1xf32> -> vector<2x8x1xf32>
    %113 = vector.broadcast %112 : vector<2x8x1xf32> to vector<2x8x8xf32>
    %114 = arith.mulf %109, %113 : vector<2x8x8xf32>
    "tpu.trace_start"() <{level = 10 : i32, message = "bqk,bkd->bqd"}> : () -> ()
    %cst_44 = arith.constant dense<0.000000e+00> : vector<2x8x8xf32>
    %115 = tpu.matmul %114, %99, %cst_44 {dimension_numbers = #tpu.dot_dimension_numbers<[2], [1], [1], [2], [0, 0, 0, 1, 1, 2], [0], [0]>} : vector<2x8x8xf32>, vector<2x8x8xf32>, vector<2x8x8xf32> -> vector<2x8x8xf32>
    "tpu.trace_stop"() : () -> ()
    %116 = vector.shape_cast %115 : vector<2x8x8xf32> to vector<16x8xf32>
    %c0_45 = arith.constant 0 : index
    %c3 = arith.constant 3 : index
    %c0_46 = arith.constant 0 : index
    %c0_47 = arith.constant 0 : index
    %117 = vector.load %arg7[%c0_45, %c3, %c0_46, %c0_47] : memref<1x4x8x32xf32, #tpu.memory_space<vmem>>, vector<1x1x8x32xf32>
    %118 = vector.shape_cast %117 : vector<1x1x8x32xf32> to vector<8x32xf32>
    %cst_48 = arith.constant dense<0.000000e+00> : vector<16x32xf32>
    %119 = tpu.matmul %116, %118, %cst_48 {dimension_numbers = #tpu.dot_dimension_numbers<[1], [0], [0], [1], [0, 0, 1, 1], [], []>} : vector<16x8xf32>, vector<8x32xf32>, vector<16x32xf32> -> vector<16x32xf32>
    %120 = arith.addf %93, %119 : vector<16x32xf32>
    %c0_49 = arith.constant 0 : index
    %c0_50 = arith.constant 0 : index
    %c0_51 = arith.constant 0 : index
    %121 = vector.load %arg8[%c0_49, %c0_50, %c0_51] : memref<1x1x32xf32, #tpu.memory_space<vmem>>, vector<1x1x32xf32>
    %122 = vector.shape_cast %121 : vector<1x1x32xf32> to vector<1x32xf32>
    %123 = vector.broadcast %122 : vector<1x32xf32> to vector<16x32xf32>
    %124 = arith.addf %120, %123 : vector<16x32xf32>
    %125 = arith.addf %3, %124 : vector<16x32xf32>
    %c0_52 = arith.constant 0 : index
    %c0_53 = arith.constant 0 : index
    %c0_54 = arith.constant 0 : index
    %126 = vector.load %arg9[%c0_52, %c0_53, %c0_54] : memref<1x1x32xf32, #tpu.memory_space<vmem>>, vector<1x1x32xf32>
    %127 = vector.shape_cast %126 : vector<1x1x32xf32> to vector<1x32xf32>
    %c0_55 = arith.constant 0 : index
    %c0_56 = arith.constant 0 : index
    %c0_57 = arith.constant 0 : index
    %128 = vector.load %arg10[%c0_55, %c0_56, %c0_57] : memref<1x1x32xf32, #tpu.memory_space<vmem>>, vector<1x1x32xf32>
    %129 = vector.shape_cast %128 : vector<1x1x32xf32> to vector<1x32xf32>
    %cst_58 = arith.constant dense<0.000000e+00> : vector<16xf32>
    %130 = vector.multi_reduction <add>, %125, %cst_58 [1] : vector<16x32xf32> to vector<16xf32>
    %131 = vector.shape_cast %130 : vector<16xf32> to vector<16x1xf32>
    %cst_59 = arith.constant 3.200000e+01 : f32
    %132 = vector.broadcast %cst_59 : f32 to vector<16x1xf32>
    %133 = arith.divf %131, %132 : vector<16x1xf32>
    %134 = vector.broadcast %133 : vector<16x1xf32> to vector<16x32xf32>
    %135 = arith.subf %125, %134 : vector<16x32xf32>
    %136 = arith.mulf %135, %135 : vector<16x32xf32>
    %cst_60 = arith.constant dense<0.000000e+00> : vector<16xf32>
    %137 = vector.multi_reduction <add>, %136, %cst_60 [1] : vector<16x32xf32> to vector<16xf32>
    %138 = vector.shape_cast %137 : vector<16xf32> to vector<16x1xf32>
    %cst_61 = arith.constant 3.200000e+01 : f32
    %139 = vector.broadcast %cst_61 : f32 to vector<16x1xf32>
    %140 = arith.divf %138, %139 : vector<16x1xf32>
    %141 = vector.broadcast %133 : vector<16x1xf32> to vector<16x32xf32>
    %142 = arith.subf %125, %141 : vector<16x32xf32>
    %cst_62 = arith.constant 9.99999996E-13 : f32
    %143 = vector.broadcast %cst_62 : f32 to vector<16x1xf32>
    %144 = arith.addf %140, %143 : vector<16x1xf32>
    %145 = math.rsqrt %144 : vector<16x1xf32>
    %146 = vector.broadcast %145 : vector<16x1xf32> to vector<16x32xf32>
    %147 = arith.mulf %142, %146 : vector<16x32xf32>
    %148 = vector.broadcast %127 : vector<1x32xf32> to vector<16x32xf32>
    %149 = arith.mulf %147, %148 : vector<16x32xf32>
    %150 = vector.broadcast %129 : vector<1x32xf32> to vector<16x32xf32>
    %151 = arith.addf %149, %150 : vector<16x32xf32>
    %c0_63 = arith.constant 0 : index
    %c0_64 = arith.constant 0 : index
    %c0_65 = arith.constant 0 : index
    %152 = vector.load %arg11[%c0_63, %c0_64, %c0_65] : memref<1x32x64xf32, #tpu.memory_space<vmem>>, vector<1x32x64xf32>
    %153 = vector.shape_cast %152 : vector<1x32x64xf32> to vector<32x64xf32>
    %cst_66 = arith.constant dense<0.000000e+00> : vector<16x64xf32>
    %154 = tpu.matmul %151, %153, %cst_66 {dimension_numbers = #tpu.dot_dimension_numbers<[1], [0], [0], [1], [0, 0, 1, 1], [], []>} : vector<16x32xf32>, vector<32x64xf32>, vector<16x64xf32> -> vector<16x64xf32>
    %c0_67 = arith.constant 0 : index
    %c0_68 = arith.constant 0 : index
    %c0_69 = arith.constant 0 : index
    %155 = vector.load %arg12[%c0_67, %c0_68, %c0_69] : memref<1x1x64xf32, #tpu.memory_space<vmem>>, vector<1x1x64xf32>
    %156 = vector.shape_cast %155 : vector<1x1x64xf32> to vector<1x64xf32>
    %157 = vector.broadcast %156 : vector<1x64xf32> to vector<16x64xf32>
    %158 = arith.addf %154, %157 : vector<16x64xf32>
    %159 = arith.mulf %158, %158 : vector<16x64xf32>
    %160 = arith.mulf %158, %159 : vector<16x64xf32>
    %cst_70 = arith.constant 4.471500e-02 : f32
    %161 = vector.broadcast %cst_70 : f32 to vector<16x64xf32>
    %162 = arith.mulf %161, %160 : vector<16x64xf32>
    %163 = arith.addf %158, %162 : vector<16x64xf32>
    %cst_71 = arith.constant 0.797884583 : f32
    %164 = vector.broadcast %cst_71 : f32 to vector<16x64xf32>
    %165 = arith.mulf %164, %163 : vector<16x64xf32>
    %166 = math.tanh %165 : vector<16x64xf32>
    %cst_72 = arith.constant 1.000000e+00 : f32
    %167 = vector.broadcast %cst_72 : f32 to vector<16x64xf32>
    %168 = arith.addf %167, %166 : vector<16x64xf32>
    %cst_73 = arith.constant 5.000000e-01 : f32
    %169 = vector.broadcast %cst_73 : f32 to vector<16x64xf32>
    %170 = arith.mulf %169, %168 : vector<16x64xf32>
    %171 = arith.mulf %158, %170 : vector<16x64xf32>
    %c0_74 = arith.constant 0 : index
    %c0_75 = arith.constant 0 : index
    %c0_76 = arith.constant 0 : index
    %172 = vector.load %arg13[%c0_74, %c0_75, %c0_76] : memref<1x64x32xf32, #tpu.memory_space<vmem>>, vector<1x64x32xf32>
    %173 = vector.shape_cast %172 : vector<1x64x32xf32> to vector<64x32xf32>
    %cst_77 = arith.constant dense<0.000000e+00> : vector<16x32xf32>
    %174 = tpu.matmul %171, %173, %cst_77 {dimension_numbers = #tpu.dot_dimension_numbers<[1], [0], [0], [1], [0, 0, 1, 1], [], []>} : vector<16x64xf32>, vector<64x32xf32>, vector<16x32xf32> -> vector<16x32xf32>
    %c0_78 = arith.constant 0 : index
    %c0_79 = arith.constant 0 : index
    %c0_80 = arith.constant 0 : index
    %175 = vector.load %arg14[%c0_78, %c0_79, %c0_80] : memref<1x1x32xf32, #tpu.memory_space<vmem>>, vector<1x1x32xf32>
    %176 = vector.shape_cast %175 : vector<1x1x32xf32> to vector<1x32xf32>
    %177 = vector.broadcast %176 : vector<1x32xf32> to vector<16x32xf32>
    %178 = arith.addf %174, %177 : vector<16x32xf32>
    %179 = arith.addf %151, %178 : vector<16x32xf32>
    %c0_81 = arith.constant 0 : index
    %c0_82 = arith.constant 0 : index
    %c0_83 = arith.constant 0 : index
    %180 = vector.load %arg15[%c0_81, %c0_82, %c0_83] : memref<1x1x32xf32, #tpu.memory_space<vmem>>, vector<1x1x32xf32>
    %181 = vector.shape_cast %180 : vector<1x1x32xf32> to vector<1x32xf32>
    %c0_84 = arith.constant 0 : index
    %c0_85 = arith.constant 0 : index
    %c0_86 = arith.constant 0 : index
    %182 = vector.load %arg16[%c0_84, %c0_85, %c0_86] : memref<1x1x32xf32, #tpu.memory_space<vmem>>, vector<1x1x32xf32>
    %183 = vector.shape_cast %182 : vector<1x1x32xf32> to vector<1x32xf32>
    %cst_87 = arith.constant dense<0.000000e+00> : vector<16xf32>
    %184 = vector.multi_reduction <add>, %179, %cst_87 [1] : vector<16x32xf32> to vector<16xf32>
    %185 = vector.shape_cast %184 : vector<16xf32> to vector<16x1xf32>
    %cst_88 = arith.constant 3.200000e+01 : f32
    %186 = vector.broadcast %cst_88 : f32 to vector<16x1xf32>
    %187 = arith.divf %185, %186 : vector<16x1xf32>
    %188 = vector.broadcast %187 : vector<16x1xf32> to vector<16x32xf32>
    %189 = arith.subf %179, %188 : vector<16x32xf32>
    %190 = arith.mulf %189, %189 : vector<16x32xf32>
    %cst_89 = arith.constant dense<0.000000e+00> : vector<16xf32>
    %191 = vector.multi_reduction <add>, %190, %cst_89 [1] : vector<16x32xf32> to vector<16xf32>
    %192 = vector.shape_cast %191 : vector<16xf32> to vector<16x1xf32>
    %cst_90 = arith.constant 3.200000e+01 : f32
    %193 = vector.broadcast %cst_90 : f32 to vector<16x1xf32>
    %194 = arith.divf %192, %193 : vector<16x1xf32>
    %195 = vector.broadcast %187 : vector<16x1xf32> to vector<16x32xf32>
    %196 = arith.subf %179, %195 : vector<16x32xf32>
    %cst_91 = arith.constant 9.99999996E-13 : f32
    %197 = vector.broadcast %cst_91 : f32 to vector<16x1xf32>
    %198 = arith.addf %194, %197 : vector<16x1xf32>
    %199 = math.rsqrt %198 : vector<16x1xf32>
    %200 = vector.broadcast %199 : vector<16x1xf32> to vector<16x32xf32>
    %201 = arith.mulf %196, %200 : vector<16x32xf32>
    %202 = vector.broadcast %181 : vector<1x32xf32> to vector<16x32xf32>
    %203 = arith.mulf %201, %202 : vector<16x32xf32>
    %204 = vector.broadcast %183 : vector<1x32xf32> to vector<16x32xf32>
    %205 = arith.addf %203, %204 : vector<16x32xf32>
    %c0_92 = arith.constant 0 : index
    %c0_93 = arith.constant 0 : index
    %206 = vector.load %arg18[%c0_92, %c0_93] : memref<16x32xf32, #tpu.memory_space<vmem>>, vector<16x32xf32>
    tpu.vector_store %arg18[%c0_92, %c0_93], %205 {strides = array<i32>} : memref<16x32xf32, #tpu.memory_space<vmem>>, vector<16x32xf32>,
    %c1_i32 = arith.constant 1 : i32
    %207 = arith.cmpi eq, %arg0, %c1_i32 : i32
    %208 = arith.extui %207 : i1 to i32
    %c0_i32_94 = arith.constant 0 : i32
    %209 = arith.cmpi ne, %208, %c0_i32_94 : i32
    scf.if %209 {
      %c0_95 = arith.constant 0 : index
      %c0_96 = arith.constant 0 : index
      %210 = vector.load %arg17[%c0_95, %c0_96] : memref<16x32xf32, #tpu.memory_space<vmem>>, vector<16x32xf32>
      tpu.vector_store %arg17[%c0_95, %c0_96], %205 {strides = array<i32>} : memref<16x32xf32, #tpu.memory_space<vmem>>, vector<16x32xf32>,
    } else {
    }
    return
  }
  func.func @transform_0(%arg0: i32) -> (i32, i32) {
    %c0_i32 = arith.constant 0 : i32
    %c0_i32_0 = arith.constant 0 : i32
    %c0_i32_1 = arith.constant 0 : i32
    return %c0_i32, %c0_i32_0 : i32, i32
  }
  func.func @transform_1(%arg0: i32) -> (i32, i32, i32) {
    %c0_i32 = arith.constant 0 : i32
    %c0_i32_0 = arith.constant 0 : i32
    %c0_i32_1 = arith.constant 0 : i32
    %c0_i32_2 = arith.constant 0 : i32
    return %c0_i32, %c0_i32_0, %c0_i32_1 : i32, i32, i32
  }
  func.func @transform_2(%arg0: i32) -> (i32, i32) {
    %c0_i32 = arith.constant 0 : i32
    %c0_i32_0 = arith.constant 0 : i32
    %c0_i32_1 = arith.constant 0 : i32
    return %c0_i32, %c0_i32_0 : i32, i32
  }
  func.func @transform_3(%arg0: i32) -> (i32, i32) {
    %c0_i32 = arith.constant 0 : i32
    %c0_i32_0 = arith.constant 0 : i32
    %c0_i32_1 = arith.constant 0 : i32
    return %c0_i32, %c0_i32_0 : i32, i32
  }
  func.func @transform_4(%arg0: i32) -> (i32, i32, i32) {
    %c0_i32 = arith.constant 0 : i32
    %c0_i32_0 = arith.constant 0 : i32
    %c0_i32_1 = arith.constant 0 : i32
    return %arg0, %c0_i32, %c0_i32_0 : i32, i32, i32
  }
  func.func @transform_5(%arg0: i32) -> (i32, i32, i32) {
    %c0_i32 = arith.constant 0 : i32
    %c0_i32_0 = arith.constant 0 : i32
    %c0_i32_1 = arith.constant 0 : i32
    return %arg0, %c0_i32, %c0_i32_0 : i32, i32, i32
  }
  func.func @transform_6(%arg0: i32) -> (i32, i32, i32, i32) {
    %c0_i32 = arith.constant 0 : i32
    %c0_i32_0 = arith.constant 0 : i32
    %c0_i32_1 = arith.constant 0 : i32
    %c0_i32_2 = arith.constant 0 : i32
    return %arg0, %c0_i32, %c0_i32_0, %c0_i32_1 : i32, i32, i32, i32
  }
  func.func @transform_7(%arg0: i32) -> (i32, i32, i32) {
    %c0_i32 = arith.constant 0 : i32
    %c0_i32_0 = arith.constant 0 : i32
    %c0_i32_1 = arith.constant 0 : i32
    return %arg0, %c0_i32, %c0_i32_0 : i32, i32, i32
  }
  func.func @transform_8(%arg0: i32) -> (i32, i32, i32) {
    %c0_i32 = arith.constant 0 : i32
    %c0_i32_0 = arith.constant 0 : i32
    %c0_i32_1 = arith.constant 0 : i32
    return %arg0, %c0_i32, %c0_i32_0 : i32, i32, i32
  }
  func.func @transform_9(%arg0: i32) -> (i32, i32, i32) {
    %c0_i32 = arith.constant 0 : i32
    %c0_i32_0 = arith.constant 0 : i32
    %c0_i32_1 = arith.constant 0 : i32
    return %arg0, %c0_i32, %c0_i32_0 : i32, i32, i32
  }
  func.func @transform_10(%arg0: i32) -> (i32, i32, i32) {
    %c0_i32 = arith.constant 0 : i32
    %c0_i32_0 = arith.constant 0 : i32
    %c0_i32_1 = arith.constant 0 : i32
    return %arg0, %c0_i32, %c0_i32_0 : i32, i32, i32
  }
  func.func @transform_11(%arg0: i32) -> (i32, i32, i32) {
    %c0_i32 = arith.constant 0 : i32
    %c0_i32_0 = arith.constant 0 : i32
    %c0_i32_1 = arith.constant 0 : i32
    return %arg0, %c0_i32, %c0_i32_0 : i32, i32, i32
  }
  func.func @transform_12(%arg0: i32) -> (i32, i32, i32) {
    %c0_i32 = arith.constant 0 : i32
    %c0_i32_0 = arith.constant 0 : i32
    %c0_i32_1 = arith.constant 0 : i32
    return %arg0, %c0_i32, %c0_i32_0 : i32, i32, i32
  }
  func.func @transform_13(%arg0: i32) -> (i32, i32, i32) {
    %c0_i32 = arith.constant 0 : i32
    %c0_i32_0 = arith.constant 0 : i32
    %c0_i32_1 = arith.constant 0 : i32
    return %arg0, %c0_i32, %c0_i32_0 : i32, i32, i32
  }
  func.func @transform_14(%arg0: i32) -> (i32, i32, i32) {
    %c0_i32 = arith.constant 0 : i32
    %c0_i32_0 = arith.constant 0 : i32
    %c0_i32_1 = arith.constant 0 : i32
    return %arg0, %c0_i32, %c0_i32_0 : i32, i32, i32
  }
  func.func @transform_15(%arg0: i32) -> (i32, i32, i32) {
    %c0_i32 = arith.constant 0 : i32
    %c0_i32_0 = arith.constant 0 : i32
    %c0_i32_1 = arith.constant 0 : i32
    return %arg0, %c0_i32, %c0_i32_0 : i32, i32, i32
  }
  func.func @transform_16(%arg0: i32) -> (i32, i32) {
    %c0_i32 = arith.constant 0 : i32
    %c0_i32_0 = arith.constant 0 : i32
    %c0_i32_1 = arith.constant 0 : i32
    return %c0_i32, %c0_i32_0 : i32, i32
  }
}

</mosaic_0001>

<llo_original>
// kernel: _lambda_.3
$region0: #{_lambda_.3}
  #allocation0 [shape = 'u32[]', space=smem, size = 0x4, offset = 0x4, fixed_abs, tag = 'smem constant byte address 0x4 - core index']
  #allocation1 [shape = 'u32[144,128]{1,0:T(1,128)}', space=vmem, size = 0x12000, scoped, tag = 'internal scratch']
  %s0 = inlined_call_operand.vmem [shape: f32[2,32], index: 0, kind: input, shape index: {}]
  %s1 = inlined_call_operand.vmem [shape: f32[32,384], index: 1, kind: input, shape index: {}]
  %s2 = inlined_call_operand.vmem [shape: f32[1,384], index: 2, kind: input, shape index: {}]
  %s3 = inlined_call_operand.vmem [shape: f32[128,384], index: 3, kind: input, shape index: {}]
  %s4 = inlined_call_operand.vmem [shape: f32[2,384], index: 4, kind: output, shape index: {}]
  %s5 = sld [smem:[#allocation0]]
  $region26: #{_lambda_.3} parent=0
    _
  %s7 = ssub.s32 1, %s5
  %s8 = scalar_select 0, %s7, %s5
  // Predicated region
  $region2: #{_lambda_.3} parent=0 // pred_check
    _
  $region3: #{_lambda_.3} parent=0 // pred_check_branch
    %10 = sbr.rel (0) target = $region5
  $region4: #{_lambda_.3} parent=0 // pred_region
    _
  $region5: #{_lambda_.3} parent=0 // pred_fallthru
    _
  // Predicated region
  $region6: #{_lambda_.3} parent=0 // pred_check
    _
  $region7: #{_lambda_.3} parent=0 // pred_check_branch
    %12 = sbr.rel (0) target = $region9
  $region8: #{_lambda_.3} parent=0 // pred_region
    _
  $region9: #{_lambda_.3} parent=0 // pred_fallthru
    _
  // Predicated region
  $region10: #{_lambda_.3} parent=0 // pred_check
    _
  $region11: #{_lambda_.3} parent=0 // pred_check_branch
    %14 = sbr.rel (0) target = $region13
  $region12: #{_lambda_.3} parent=0 // pred_region
    _
  $region13: #{_lambda_.3} parent=0 // pred_fallthru
    _
  // Predicated region
  $region14: #{_lambda_.3} parent=0 // pred_check
    _
  $region15: #{_lambda_.3} parent=0 // pred_check_branch
    %16 = sbr.rel (0) target = $region17
  $region16: #{_lambda_.3} parent=0 // pred_region
    _
  $region17: #{_lambda_.3} parent=0 // pred_fallthru
    _
  %v17 = vld [vmem:[%s0] sm:$0x3]
  %v18 = vld [vmem:[%s1] sm:$0xff]
  %v19 = vld [vmem:[%s1 + $0x8] sm:$0xff]
  %v20 = vld [vmem:[%s1 + $0x10] sm:$0xff]
  %v21 = vld [vmem:[%s1 + $0x18] sm:$0xff]
  %v22 = vld [vmem:[%s1 + $0x20] sm:$0xff]
  %v23 = vld [vmem:[%s1 + $0x28] sm:$0xff]
  %v24 = vld [vmem:[%s1 + $0x30] sm:$0xff]
  %v25 = vld [vmem:[%s1 + $0x38] sm:$0xff]
  %v26 = vld [vmem:[%s1 + $0x40] sm:$0xff]
  %v27 = vld [vmem:[%s1 + $0x48] sm:$0xff]
  %v28 = vld [vmem:[%s1 + $0x50] sm:$0xff]
  %v29 = vld [vmem:[%s1 + $0x58] sm:$0xff]
  %v30 = vld [vmem:[%s2] sm:$0x7]
  %v32 = vlaneseq
  %v33 = vshrl.u32 %v32, 7
  %v34 = vsub.s32 0, %v33
  %v35 = vrot.slane %v30, %v34
  %v36 = vlaneseq
  %v37 = vshrl.u32 %v36, 7
  %v38 = vsub.s32 1, %v37
  %v39 = vrot.slane %v30, %v38
  %v40 = vlaneseq
  %v41 = vshrl.u32 %v40, 7
  %v42 = vsub.s32 2, %v41
  %v43 = vrot.slane %v30, %v42
  %vm47 = vcmask 261120
  %v49 = vsel %vm47, %v17, 0
  %51 = vmatprep.subr.mxu0 0.0
  %52 = vmatpush1.msra.mxu0 0.0
  %53 = vmatprep.subr.mxu0 0.0
  %54 = vmatpush1.msra.mxu0 0.0
  %55 = vmatprep.subr.mxu0 0.0
  %56 = vmatpush1.msra.mxu0 0.0
  %57 = vmatprep.subr.mxu0 0.0
  %58 = vmatpush1.msra.mxu0 0.0
  %59 = vmatprep.subr.mxu0 0.0
  %60 = vmatpush1.msra.mxu0 0.0
  %61 = vmatprep.subr.mxu0 0.0
  %62 = vmatpush1.msra.mxu0 0.0
  %63 = vmatprep.subr.mxu0 0.0
  %64 = vmatpush1.msra.mxu0 0.0
  %65 = vmatprep.subr.mxu0 0.0
  %66 = vmatpush1.msra.mxu0 0.0
  %67 = vmatprep.subr.mxu0 0.0
  %68 = vmatpush1.msra.mxu0 0.0
  %69 = vmatprep.subr.mxu0 0.0
  %70 = vmatpush1.msra.mxu0 0.0
  %71 = vmatprep.subr.mxu0 0.0
  %72 = vmatpush1.msra.mxu0 0.0
  %73 = vmatprep.subr.mxu0 0.0
  %74 = vmatpush1.msra.mxu0 0.0
  %75 = vmatprep.subr.mxu0 %v28
  %76 = vmatpush1.msra.mxu0 %v27
  %77 = vmatprep.subr.mxu0 %v25
  %78 = vmatpush1.msra.mxu0 %v24
  %79 = vmatprep.subr.mxu0 %v22
  %80 = vmatpush1.msra.mxu0 %v21
  %81 = vmatprep.subr.mxu0 %v19
  %82 = vmatpush1.msra.mxu0 %v18
  %83 = vmatprep.subr.mxu0 0.0
  %84 = vmatpush2.msra.mxu0 0.0
  %85 = vmatprep.subr.mxu0 0.0
  %86 = vmatpush2.msra.mxu0 0.0
  %87 = vmatprep.subr.mxu0 0.0
  %88 = vmatpush2.msra.mxu0 0.0
  %89 = vmatprep.subr.mxu0 0.0
  %90 = vmatpush2.msra.mxu0 0.0
  %91 = vmatprep.subr.mxu0 0.0
  %92 = vmatpush2.msra.mxu0 0.0
  %93 = vmatprep.subr.mxu0 0.0
  %94 = vmatpush2.msra.mxu0 0.0
  %95 = vmatprep.subr.mxu0 0.0
  %96 = vmatpush2.msra.mxu0 0.0
  %97 = vmatprep.subr.mxu0 0.0
  %98 = vmatpush2.msra.mxu0 0.0
  %99 = vmatprep.subr.mxu0 0.0
  %100 = vmatpush2.msra.mxu0 0.0
  %101 = vmatprep.subr.mxu0 0.0
  %102 = vmatpush2.msra.mxu0 0.0
  %103 = vmatprep.subr.mxu0 0.0
  %104 = vmatpush2.msra.mxu0 0.0
  %105 = vmatprep.subr.mxu0 0.0
  %106 = vmatpush2.msra.mxu0 0.0
  %107 = vmatprep.subr.mxu0 0.0
  %108 = vmatpush2.msra.mxu0 0.0
  %109 = vmatprep.subr.mxu0 0.0
  %110 = vmatpush2.msra.mxu0 0.0
  %111 = vmatprep.subr.mxu0 0.0
  %112 = vmatpush2.msra.mxu0 0.0
  %113 = vmatprep.subr.mxu0 0.0
  %114 = vmatpush2.msra.mxu0 0.0
  %115 = vmatprep.mubr.f32.mxu0 0.0
  %116 = vmatmul.mubr.f32.gmra.mxu0 %v49
  %v117 = vpop.f32.mrf.mxu0
  %v118 = vadd.f32 %v35, %v117
  %v119 = vpop.f32.mrf.mxu0
  %v120 = vadd.f32 %v39, %v119
  %121 = vdwg.mxu0
  %122 = vmatprep.subr.mxu0 0.0
  %123 = vmatpush1.msra.mxu0 0.0
  %124 = vmatprep.subr.mxu0 0.0
  %125 = vmatpush1.msra.mxu0 0.0
  %126 = vmatprep.subr.mxu0 0.0
  %127 = vmatpush1.msra.mxu0 0.0
  %128 = vmatprep.subr.mxu0 0.0
  %129 = vmatpush1.msra.mxu0 0.0
  %130 = vmatprep.subr.mxu0 0.0
  %131 = vmatpush1.msra.mxu0 0.0
  %132 = vmatprep.subr.mxu0 0.0
  %133 = vmatpush1.msra.mxu0 0.0
  %134 = vmatprep.subr.mxu0 0.0
  %135 = vmatpush1.msra.mxu0 0.0
  %136 = vmatprep.subr.mxu0 0.0
  %137 = vmatpush1.msra.mxu0 0.0
  %138 = vmatprep.subr.mxu0 0.0
  %139 = vmatpush1.msra.mxu0 0.0
  %140 = vmatprep.subr.mxu0 0.0
  %141 = vmatpush1.msra.mxu0 0.0
  %142 = vmatprep.subr.mxu0 0.0
  %143 = vmatpush1.msra.mxu0 0.0
  %144 = vmatprep.subr.mxu0 0.0
  %145 = vmatpush1.msra.mxu0 0.0
  %146 = vmatprep.subr.mxu0 0.0
  %147 = vmatpush1.msra.mxu0 %v29
  %148 = vmatprep.subr.mxu0 0.0
  %149 = vmatpush1.msra.mxu0 %v26
  %150 = vmatprep.subr.mxu0 0.0
  %151 = vmatpush1.msra.mxu0 %v23
  %152 = vmatprep.subr.mxu0 0.0
  %153 = vmatpush1.msra.mxu0 %v20
  %154 = vmatprep.subr.mxu0 0.0
  %155 = vmatpush2.msra.mxu0 0.0
  %156 = vmatprep.subr.mxu0 0.0
  %157 = vmatpush2.msra.mxu0 0.0
  %158 = vmatprep.subr.mxu0 0.0
  %159 = vmatpush2.msra.mxu0 0.0
  %160 = vmatprep.subr.mxu0 0.0
  %161 = vmatpush2.msra.mxu0 0.0
  %162 = vmatprep.subr.mxu0 0.0
  %163 = vmatpush2.msra.mxu0 0.0
  %164 = vmatprep.subr.mxu0 0.0
  %165 = vmatpush2.msra.mxu0 0.0
  %166 = vmatprep.subr.mxu0 0.0
  %167 = vmatpush2.msra.mxu0 0.0
  %168 = vmatprep.subr.mxu0 0.0
  %169 = vmatpush2.msra.mxu0 0.0
  %170 = vmatprep.subr.mxu0 0.0
  %171 = vmatpush2.msra.mxu0 0.0
  %172 = vmatprep.subr.mxu0 0.0
  %173 = vmatpush2.msra.mxu0 0.0
  %174 = vmatprep.subr.mxu0 0.0
  %175 = vmatpush2.msra.mxu0 0.0
  %176 = vmatprep.subr.mxu0 0.0
  %177 = vmatpush2.msra.mxu0 0.0
  %178 = vmatprep.subr.mxu0 0.0
  %179 = vmatpush2.msra.mxu0 0.0
  %180 = vmatprep.subr.mxu0 0.0
  %181 = vmatpush2.msra.mxu0 0.0
  %182 = vmatprep.subr.mxu0 0.0
  %183 = vmatpush2.msra.mxu0 0.0
  %184 = vmatprep.subr.mxu0 0.0
  %185 = vmatpush2.msra.mxu0 0.0
  %186 = vmatprep.mubr.f32.mxu0 0.0
  %187 = vmatmul.mubr.f32.gmra.mxu0 %v49
  %v188 = vpop.f32.mrf.mxu0
  %v189 = vadd.f32 %v43, %v188
  %v190 = vpop.f32.mrf.mxu0
  %191 = vdwg.mxu0
  %v192 = vld [vmem:[%s3] sm:$0xff]
  %v193 = vld [vmem:[%s3 + $0x8] sm:$0xff]
  %v194 = vld [vmem:[%s3 + $0x10] sm:$0xff]
  %v195 = vld [vmem:[%s3 + $0x18] sm:$0xff]
  %v196 = vld [vmem:[%s3 + $0x20] sm:$0xff]
  %v197 = vld [vmem:[%s3 + $0x28] sm:$0xff]
  %v198 = vld [vmem:[%s3 + $0x30] sm:$0xff]
  %v199 = vld [vmem:[%s3 + $0x38] sm:$0xff]
  %v200 = vld [vmem:[%s3 + $0x40] sm:$0xff]
  %v201 = vld [vmem:[%s3 + $0x48] sm:$0xff]
  %v202 = vld [vmem:[%s3 + $0x50] sm:$0xff]
  %v203 = vld [vmem:[%s3 + $0x58] sm:$0xff]
  %v204 = vld [vmem:[%s3 + $0x60] sm:$0xff]
  %v205 = vld [vmem:[%s3 + $0x68] sm:$0xff]
  %v206 = vld [vmem:[%s3 + $0x70] sm:$0xff]
  %v207 = vld [vmem:[%s3 + $0x78] sm:$0xff]
  %v208 = vld [vmem:[%s3 + $0x80] sm:$0xff]
  %v209 = vld [vmem:[%s3 + $0x88] sm:$0xff]
  %v210 = vld [vmem:[%s3 + $0x90] sm:$0xff]
  %v211 = vld [vmem:[%s3 + $0x98] sm:$0xff]
  %v212 = vld [vmem:[%s3 + $0xa0] sm:$0xff]
  %v213 = vld [vmem:[%s3 + $0xa8] sm:$0xff]
  %v214 = vld [vmem:[%s3 + $0xb0] sm:$0xff]
  %v215 = vld [vmem:[%s3 + $0xb8] sm:$0xff]
  %v216 = vld [vmem:[%s3 + $0xc0] sm:$0xff]
  %v217 = vld [vmem:[%s3 + $0xc8] sm:$0xff]
  %v218 = vld [vmem:[%s3 + $0xd0] sm:$0xff]
  %v219 = vld [vmem:[%s3 + $0xd8] sm:$0xff]
  %v220 = vld [vmem:[%s3 + $0xe0] sm:$0xff]
  %v221 = vld [vmem:[%s3 + $0xe8] sm:$0xff]
  %v222 = vld [vmem:[%s3 + $0xf0] sm:$0xff]
  %v223 = vld [vmem:[%s3 + $0xf8] sm:$0xff]
  %v224 = vld [vmem:[%s3 + $0x100] sm:$0xff]
  %v225 = vld [vmem:[%s3 + $0x108] sm:$0xff]
  %v226 = vld [vmem:[%s3 + $0x110] sm:$0xff]
  %v227 = vld [vmem:[%s3 + $0x118] sm:$0xff]
  %v228 = vld [vmem:[%s3 + $0x120] sm:$0xff]
  %v229 = vld [vmem:[%s3 + $0x128] sm:$0xff]
  %v230 = vld [vmem:[%s3 + $0x130] sm:$0xff]
  %v231 = vld [vmem:[%s3 + $0x138] sm:$0xff]
  %v232 = vld [vmem:[%s3 + $0x140] sm:$0xff]
  %v233 = vld [vmem:[%s3 + $0x148] sm:$0xff]
  %v234 = vld [vmem:[%s3 + $0x150] sm:$0xff]
  %v235 = vld [vmem:[%s3 + $0x158] sm:$0xff]
  %v236 = vld [vmem:[%s3 + $0x160] sm:$0xff]
  %v237 = vld [vmem:[%s3 + $0x168] sm:$0xff]
  %v238 = vld [vmem:[%s3 + $0x170] sm:$0xff]
  %v239 = vld [vmem:[%s3 + $0x178] sm:$0xff]
  %240 = vmatprep.subr.mxu0 %v238
  %241 = vmatpush1.msra.mxu0 %v237
  %242 = vmatprep.subr.mxu0 %v235
  %243 = vmatpush1.msra.mxu0 %v234
  %244 = vmatprep.subr.mxu0 %v232
  %245 = vmatpush1.msra.mxu0 %v231
  %246 = vmatprep.subr.mxu0 %v229
  %247 = vmatpush1.msra.mxu0 %v228
  %248 = vmatprep.subr.mxu0 %v226
  %249 = vmatpush1.msra.mxu0 %v225
  %250 = vmatprep.subr.mxu0 %v223
  %251 = vmatpush1.msra.mxu0 %v222
  %252 = vmatprep.subr.mxu0 %v220
  %253 = vmatpush1.msra.mxu0 %v219
  %254 = vmatprep.subr.mxu0 %v217
  %255 = vmatpush1.msra.mxu0 %v216
  %256 = vmatprep.subr.mxu0 %v214
  %257 = vmatpush1.msra.mxu0 %v213
  %258 = vmatprep.subr.mxu0 %v211
  %259 = vmatpush1.msra.mxu0 %v210
  %260 = vmatprep.subr.mxu0 %v208
  %261 = vmatpush1.msra.mxu0 %v207
  %262 = vmatprep.subr.mxu0 %v205
  %263 = vmatpush1.msra.mxu0 %v204
  %264 = vmatprep.subr.mxu0 %v202
  %265 = vmatpush1.msra.mxu0 %v201
  %266 = vmatprep.subr.mxu0 %v199
  %267 = vmatpush1.msra.mxu0 %v198
  %268 = vmatprep.subr.mxu0 %v196
  %269 = vmatpush1.msra.mxu0 %v195
  %270 = vmatprep.subr.mxu0 %v193
  %271 = vmatpush1.msra.mxu0 %v192
  %272 = vmatprep.subr.mxu0 0.0
  %273 = vmatpush2.msra.mxu0 0.0
  %274 = vmatprep.subr.mxu0 0.0
  %275 = vmatpush2.msra.mxu0 0.0
  %276 = vmatprep.subr.mxu0 0.0
  %277 = vmatpush2.msra.mxu0 0.0
  %278 = vmatprep.subr.mxu0 0.0
  %279 = vmatpush2.msra.mxu0 0.0
  %280 = vmatprep.subr.mxu0 0.0
  %281 = vmatpush2.msra.mxu0 0.0
  %282 = vmatprep.subr.mxu0 0.0
  %283 = vmatpush2.msra.mxu0 0.0
  %284 = vmatprep.subr.mxu0 0.0
  %285 = vmatpush2.msra.mxu0 0.0
  %286 = vmatprep.subr.mxu0 0.0
  %287 = vmatpush2.msra.mxu0 0.0
  %288 = vmatprep.subr.mxu0 0.0
  %289 = vmatpush2.msra.mxu0 0.0
  %290 = vmatprep.subr.mxu0 0.0
  %291 = vmatpush2.msra.mxu0 0.0
  %292 = vmatprep.subr.mxu0 0.0
  %293 = vmatpush2.msra.mxu0 0.0
  %294 = vmatprep.subr.mxu0 0.0
  %295 = vmatpush2.msra.mxu0 0.0
  %296 = vmatprep.subr.mxu0 0.0
  %297 = vmatpush2.msra.mxu0 0.0
  %298 = vmatprep.subr.mxu0 0.0
  %299 = vmatpush2.msra.mxu0 0.0
  %300 = vmatprep.subr.mxu0 0.0
  %301 = vmatpush2.msra.mxu0 0.0
  %302 = vmatprep.subr.mxu0 0.0
  %303 = vmatpush2.msra.mxu0 0.0
  %304 = vmatprep.mubr.f32.mxu0 0.0
  %305 = vmatmul.mubr.f32.gmra.mxu0 %v118
  %v306 = vpop.f32.mrf.mxu0
  %v307 = vadd.f32 0.0, %v306
  %v308 = vpop.f32.mrf.mxu0
  %v309 = vadd.f32 0.0, %v308
  %310 = vdwg.mxu0
  %311 = vmatprep.subr.mxu0 0.0
  %312 = vmatpush1.msra.mxu0 %v239
  %313 = vmatprep.subr.mxu0 0.0
  %314 = vmatpush1.msra.mxu0 %v236
  %315 = vmatprep.subr.mxu0 0.0
  %316 = vmatpush1.msra.mxu0 %v233
  %317 = vmatprep.subr.mxu0 0.0
  %318 = vmatpush1.msra.mxu0 %v230
  %319 = vmatprep.subr.mxu0 0.0
  %320 = vmatpush1.msra.mxu0 %v227
  %321 = vmatprep.subr.mxu0 0.0
  %322 = vmatpush1.msra.mxu0 %v224
  %323 = vmatprep.subr.mxu0 0.0
  %324 = vmatpush1.msra.mxu0 %v221
  %325 = vmatprep.subr.mxu0 0.0
  %326 = vmatpush1.msra.mxu0 %v218
  %327 = vmatprep.subr.mxu0 0.0
  %328 = vmatpush1.msra.mxu0 %v215
  %329 = vmatprep.subr.mxu0 0.0
  %330 = vmatpush1.msra.mxu0 %v212
  %331 = vmatprep.subr.mxu0 0.0
  %332 = vmatpush1.msra.mxu0 %v209
  %333 = vmatprep.subr.mxu0 0.0
  %334 = vmatpush1.msra.mxu0 %v206
  %335 = vmatprep.subr.mxu0 0.0
  %336 = vmatpush1.msra.mxu0 %v203
  %337 = vmatprep.subr.mxu0 0.0
  %338 = vmatpush1.msra.mxu0 %v200
  %339 = vmatprep.subr.mxu0 0.0
  %340 = vmatpush1.msra.mxu0 %v197
  %341 = vmatprep.subr.mxu0 0.0
  %342 = vmatpush1.msra.mxu0 %v194
  %343 = vmatprep.subr.mxu0 0.0
  %344 = vmatpush2.msra.mxu0 0.0
  %345 = vmatprep.subr.mxu0 0.0
  %346 = vmatpush2.msra.mxu0 0.0
  %347 = vmatprep.subr.mxu0 0.0
  %348 = vmatpush2.msra.mxu0 0.0
  %349 = vmatprep.subr.mxu0 0.0
  %350 = vmatpush2.msra.mxu0 0.0
  %351 = vmatprep.subr.mxu0 0.0
  %352 = vmatpush2.msra.mxu0 0.0
  %353 = vmatprep.subr.mxu0 0.0
  %354 = vmatpush2.msra.mxu0 0.0
  %355 = vmatprep.subr.mxu0 0.0
  %356 = vmatpush2.msra.mxu0 0.0
  %357 = vmatprep.subr.mxu0 0.0
  %358 = vmatpush2.msra.mxu0 0.0
  %359 = vmatprep.subr.mxu0 0.0
  %360 = vmatpush2.msra.mxu0 0.0
  %361 = vmatprep.subr.mxu0 0.0
  %362 = vmatpush2.msra.mxu0 0.0
  %363 = vmatprep.subr.mxu0 0.0
  %364 = vmatpush2.msra.mxu0 0.0
  %365 = vmatprep.subr.mxu0 0.0
  %366 = vmatpush2.msra.mxu0 0.0
  %367 = vmatprep.subr.mxu0 0.0
  %368 = vmatpush2.msra.mxu0 0.0
  %369 = vmatprep.subr.mxu0 0.0
  %370 = vmatpush2.msra.mxu0 0.0
  %371 = vmatprep.subr.mxu0 0.0
  %372 = vmatpush2.msra.mxu0 0.0
  %373 = vmatprep.subr.mxu0 0.0
  %374 = vmatpush2.msra.mxu0 0.0
  %375 = vmatprep.mubr.f32.mxu0 0.0
  %376 = vmatmul.mubr.f32.gmra.mxu0 %v118
  %v377 = vpop.f32.mrf.mxu0
  %v378 = vadd.f32 0.0, %v377
  %v379 = vpop.f32.mrf.mxu0
  %380 = vdwg.mxu0
  %v381 = vadd.f32 %v118, %v307
  %v382 = vadd.f32 %v120, %v309
  %v383 = vadd.f32 %v189, %v378
  %v387 = vcombine.low %v381, %v382
  %v389 = vunpack.c.l.s4 1983009808
  %v390 = vunpack.c.0.s8 %v389
  %v391 = vlaneseq
  %v392 = vshrl.u32 %v391, 7
  %v393 = vsub.s32 %v390, %v392
  %v394 = vrot.slane %v387, %v393
  %v396 = vunpack.c.l.s4 1983009808
  %v397 = vunpack.c.0.s8 %v396
  %v398 = vlaneseq
  %v399 = vshrl.u32 %v398, 7
  %v400 = vsub.s32 %v397, %v399
  %v401 = vrot.slane %v383, %v400
  %v402 = vcombine.low %v394, %v401
  %404 = vst [vmem:[%s4] sm:$0x3f] %v402
  // Predicated region
  $region18: #{_lambda_.3} parent=0 // pred_check
    _
  $region19: #{_lambda_.3} parent=0 // pred_check_branch
    %406 = sbr.rel (0) target = $region21
  $region20: #{_lambda_.3} parent=0 // pred_region
    _
  $region21: #{_lambda_.3} parent=0 // pred_fallthru
    _
  // Predicated region
  $region22: #{_lambda_.3} parent=0 // pred_check
    _
  $region23: #{_lambda_.3} parent=0 // pred_check_branch
    %408 = sbr.rel (0) target = $region25
  $region24: #{_lambda_.3} parent=0 // pred_region
    _
  $region25: #{_lambda_.3} parent=0 // pred_fallthru
    _

// kernel: _lambda_.2
$region0: #{_lambda_.2}
  #allocation0 [shape = 'u32[]', space=smem, size = 0x4, offset = 0x4, fixed_abs, tag = 'smem constant byte address 0x4 - core index']
  #allocation1 [shape = 'u32[144,128]{1,0:T(1,128)}', space=vmem, size = 0x12000, scoped, tag = 'internal scratch']
  #allocation2 [shape = 'f32[16,32]{1,0:T(8,128)}', space=vmem, size = 0x2000, scoped, tag = 'scratch operand']
  #allocation3 [shape = 'f32[2,1,8]{2,1,0:T(1,128)}', space=vmem, size = 0x400, scoped, tag = 'scratch operand']
  %s0 = inlined_call_operand.vmem [shape: f32[16,32], index: 0, kind: input, shape index: {}]
  %s1 = inlined_call_operand.vmem [shape: f32[2,1,8], index: 1, kind: input, shape index: {}]
  %s2 = inlined_call_operand.vmem [shape: f32[1,32], index: 2, kind: input, shape index: {}]
  %s3 = inlined_call_operand.vmem [shape: f32[1,32], index: 3, kind: input, shape index: {}]
  %s4 = inlined_call_operand.vmem [shape: f32[2,32,96], index: 4, kind: input, shape index: {}]
  %s5 = inlined_call_operand.vmem [shape: f32[2,1,96], index: 5, kind: input, shape index: {}]
  %s6 = inlined_call_operand.vmem [shape: f32[2,4,8,32], index: 6, kind: input, shape index: {}]
  %s7 = inlined_call_operand.vmem [shape: f32[2,1,32], index: 7, kind: input, shape index: {}]
  %s8 = inlined_call_operand.vmem [shape: f32[2,1,32], index: 8, kind: input, shape index: {}]
  %s9 = inlined_call_operand.vmem [shape: f32[2,1,32], index: 9, kind: input, shape index: {}]
  %s10 = inlined_call_operand.vmem [shape: f32[2,32,64], index: 10, kind: input, shape index: {}]
  %s11 = inlined_call_operand.vmem [shape: f32[2,1,64], index: 11, kind: input, shape index: {}]
  %s12 = inlined_call_operand.vmem [shape: f32[2,64,32], index: 12, kind: input, shape index: {}]
  %s13 = inlined_call_operand.vmem [shape: f32[2,1,32], index: 13, kind: input, shape index: {}]
  %s14 = inlined_call_operand.vmem [shape: f32[2,1,32], index: 14, kind: input, shape index: {}]
  %s15 = inlined_call_operand.vmem [shape: f32[2,1,32], index: 15, kind: input, shape index: {}]
  %s16 = inlined_call_operand.vmem [shape: f32[16,32], index: 16, kind: output, shape index: {}]
  %s17 = sld [smem:[#allocation0]]
  $region105: #{_lambda_.2} parent=0
    _
  %s19 = ssub.s32 1, %s17
  %s20 = scalar_select 0, %s19, %s17
  loop: start=0, step=1, limit=4
  $region2: #{_lambda_.2} parent=0 // loop_pre_header
    _
  $region3: #{_lambda_.2} parent=0 // loop_header
    %s22 = sphi 0, %s26
    %p23 = scmp.ge.s32.totalorder %s22, 4
    %s30 = sphi 0, %s30
    %s32 = sphi 0, %s30
    %s33 = sphi 0, %s32
    %s47 = sphi 0, %s33
    %s51 = sphi 0, %s51
    %s53 = sphi 0, %s51
    %s54 = sphi 0, %s53
    %s68 = sphi 0, %s54
    %s72 = sphi 0, %s72
    %s74 = sphi 0, %s72
    %s75 = sphi 0, %s74
    %s89 = sphi 0, %s75
    %s93 = sphi 0, %s93
    %s95 = sphi 0, %s93
    %s96 = sphi 0, %s95
    %s110 = sphi 0, %s96
    %s116 = sphi 0, %s118
    %s119 = sphi 0, %s116
    %s120 = sphi 0, %s119
    %s136 = sphi 0, %s120
    %s142 = sphi 0, %s144
    %s145 = sphi 0, %s142
    %s146 = sphi 0, %s145
    %s162 = sphi 0, %s146
    %s168 = sphi 0, %s170
    %s171 = sphi 0, %s168
    %s172 = sphi 0, %s171
    %s188 = sphi 0, %s172
    %s194 = sphi 0, %s196
    %s197 = sphi 0, %s194
    %s198 = sphi 0, %s197
    %s214 = sphi 0, %s198
    %s220 = sphi 0, %s222
    %s223 = sphi 0, %s220
    %s224 = sphi 0, %s223
    %s240 = sphi 0, %s224
    %s246 = sphi 0, %s248
    %s249 = sphi 0, %s246
    %s250 = sphi 0, %s249
    %s266 = sphi 0, %s250
    %s272 = sphi 0, %s274
    %s275 = sphi 0, %s272
    %s276 = sphi 0, %s275
    %s292 = sphi 0, %s276
    %s298 = sphi 0, %s300
    %s301 = sphi 0, %s298
    %s302 = sphi 0, %s301
    %s318 = sphi 0, %s302
    %s324 = sphi 0, %s326
    %s327 = sphi 0, %s324
    %s328 = sphi 0, %s327
    %s344 = sphi 0, %s328
    %s350 = sphi 0, %s352
    %s353 = sphi 0, %s350
    %s354 = sphi 0, %s353
    %s370 = sphi 0, %s354
    %s376 = sphi 0, %s378
    %s379 = sphi 0, %s376
    %s380 = sphi 0, %s379
    %s396 = sphi 0, %s380
    %s402 = sphi 0, %s404
    %s405 = sphi 0, %s402
    %s406 = sphi 0, %s405
    %s422 = sphi 0, %s406
    %s426 = sphi 0, %s426
    %s428 = sphi 0, %s426
    %s429 = sphi 0, %s428
    %s443 = sphi 0, %s429
  $region4: #{_lambda_.2} parent=0 // loop_header_branch
    %25 = sbr.rel (%p23) target = $region8
  $region5: #{_lambda_.2} parent=0 // loop_body
    %s27 = ssub.s32 %s22, 1
    %s28 = ssub.s32 %s22, 2
    %s29 = sadd.s32 %s22, 1
    %s31 = sadd.s32 %s30, 1
    %p34 = scmp.eq.s32.totalorder %s22, 1
    %p35 = scmp.ne.s32.totalorder %s30, %s32
    %p36 = scmp.eq.s32.totalorder %s22, 0
    %p37 = por %p35, %p36
    %p38 = scmp.ne.s32.totalorder %s30, %s32
    %p39 = scmp.eq.s32.totalorder %s27, 1
    %p40 = por %p38, %p39
    %p41 = scmp.ne.s32.totalorder %s32, %s33
    %p42 = scmp.eq.s32.totalorder %s27, 0
    %p43 = por %p41, %p42
    %p44 = scmp.ne.s32.totalorder %s32, %s33
    %p45 = scmp.eq.s32.totalorder %s28, 1
    %p46 = por %p44, %p45
    %p48 = scmp.ne.s32.totalorder %s33, %s47
    %p49 = scmp.eq.s32.totalorder %s28, 0
    %p50 = por %p48, %p49
    %s52 = sadd.s32 %s51, 1
    %p55 = scmp.eq.s32.totalorder %s22, 1
    %p56 = scmp.ne.s32.totalorder %s51, %s53
    %p57 = scmp.eq.s32.totalorder %s22, 0
    %p58 = por %p56, %p57
    %p59 = scmp.ne.s32.totalorder %s51, %s53
    %p60 = scmp.eq.s32.totalorder %s27, 1
    %p61 = por %p59, %p60
    %p62 = scmp.ne.s32.totalorder %s53, %s54
    %p63 = scmp.eq.s32.totalorder %s27, 0
    %p64 = por %p62, %p63
    %p65 = scmp.ne.s32.totalorder %s53, %s54
    %p66 = scmp.eq.s32.totalorder %s28, 1
    %p67 = por %p65, %p66
    %p69 = scmp.ne.s32.totalorder %s54, %s68
    %p70 = scmp.eq.s32.totalorder %s28, 0
    %p71 = por %p69, %p70
    %s73 = sadd.s32 %s72, 1
    %p76 = scmp.eq.s32.totalorder %s22, 1
    %p77 = scmp.ne.s32.totalorder %s72, %s74
    %p78 = scmp.eq.s32.totalorder %s22, 0
    %p79 = por %p77, %p78
    %p80 = scmp.ne.s32.totalorder %s72, %s74
    %p81 = scmp.eq.s32.totalorder %s27, 1
    %p82 = por %p80, %p81
    %p83 = scmp.ne.s32.totalorder %s74, %s75
    %p84 = scmp.eq.s32.totalorder %s27, 0
    %p85 = por %p83, %p84
    %p86 = scmp.ne.s32.totalorder %s74, %s75
    %p87 = scmp.eq.s32.totalorder %s28, 1
    %p88 = por %p86, %p87
    %p90 = scmp.ne.s32.totalorder %s75, %s89
    %p91 = scmp.eq.s32.totalorder %s28, 0
    %p92 = por %p90, %p91
    %s94 = sadd.s32 %s93, 1
    %p97 = scmp.eq.s32.totalorder %s22, 1
    %p98 = scmp.ne.s32.totalorder %s93, %s95
    %p99 = scmp.eq.s32.totalorder %s22, 0
    %p100 = por %p98, %p99
    %p101 = scmp.ne.s32.totalorder %s93, %s95
    %p102 = scmp.eq.s32.totalorder %s27, 1
    %p103 = por %p101, %p102
    %p104 = scmp.ne.s32.totalorder %s95, %s96
    %p105 = scmp.eq.s32.totalorder %s27, 0
    %p106 = por %p104, %p105
    %p107 = scmp.ne.s32.totalorder %s95, %s96
    %p108 = scmp.eq.s32.totalorder %s28, 1
    %p109 = por %p107, %p108
    %p111 = scmp.ne.s32.totalorder %s96, %s110
    %p112 = scmp.eq.s32.totalorder %s28, 0
    %p113 = por %p111, %p112
    %s114 = ssub.s32 %s22, %s29
    %p115 = scmp.eq.s32.totalorder %s114, 0
    %s117 = sadd.s32 %s116, 1
    %s118 = scalar_select %p115, %s116, %s117
    %p121 = pneg %p115
    %p122 = scmp.eq.s32.totalorder %s22, 1
    %p123 = por %p121, %p122
    %p124 = scmp.ne.s32.totalorder %s116, %s119
    %p125 = scmp.eq.s32.totalorder %s22, 0
    %p126 = por %p124, %p125
    %p127 = scmp.ne.s32.totalorder %s116, %s119
    %p128 = scmp.eq.s32.totalorder %s27, 1
    %p129 = por %p127, %p128
    %p130 = scmp.ne.s32.totalorder %s119, %s120
    %p131 = scmp.eq.s32.totalorder %s27, 0
    %p132 = por %p130, %p131
    %p133 = scmp.ne.s32.totalorder %s119, %s120
    %p134 = scmp.eq.s32.totalorder %s28, 1
    %p135 = por %p133, %p134
    %p137 = scmp.ne.s32.totalorder %s120, %s136
    %p138 = scmp.eq.s32.totalorder %s28, 0
    %p139 = por %p137, %p138
    %s140 = ssub.s32 %s22, %s29
    %p141 = scmp.eq.s32.totalorder %s140, 0
    %s143 = sadd.s32 %s142, 1
    %s144 = scalar_select %p141, %s142, %s143
    %p147 = pneg %p141
    %p148 = scmp.eq.s32.totalorder %s22, 1
    %p149 = por %p147, %p148
    %p150 = scmp.ne.s32.totalorder %s142, %s145
    %p151 = scmp.eq.s32.totalorder %s22, 0
    %p152 = por %p150, %p151
    %p153 = scmp.ne.s32.totalorder %s142, %s145
    %p154 = scmp.eq.s32.totalorder %s27, 1
    %p155 = por %p153, %p154
    %p156 = scmp.ne.s32.totalorder %s145, %s146
    %p157 = scmp.eq.s32.totalorder %s27, 0
    %p158 = por %p156, %p157
    %p159 = scmp.ne.s32.totalorder %s145, %s146
    %p160 = scmp.eq.s32.totalorder %s28, 1
    %p161 = por %p159, %p160
    %p163 = scmp.ne.s32.totalorder %s146, %s162
    %p164 = scmp.eq.s32.totalorder %s28, 0
    %p165 = por %p163, %p164
    %s166 = ssub.s32 %s22, %s29
    %p167 = scmp.eq.s32.totalorder %s166, 0
    %s169 = sadd.s32 %s168, 1
    %s170 = scalar_select %p167, %s168, %s169
    %p173 = pneg %p167
    %p174 = scmp.eq.s32.totalorder %s22, 1
    %p175 = por %p173, %p174
    %p176 = scmp.ne.s32.totalorder %s168, %s171
    %p177 = scmp.eq.s32.totalorder %s22, 0
    %p178 = por %p176, %p177
    %p179 = scmp.ne.s32.totalorder %s168, %s171
    %p180 = scmp.eq.s32.totalorder %s27, 1
    %p181 = por %p179, %p180
    %p182 = scmp.ne.s32.totalorder %s171, %s172
    %p183 = scmp.eq.s32.totalorder %s27, 0
    %p184 = por %p182, %p183
    %p185 = scmp.ne.s32.totalorder %s171, %s172
    %p186 = scmp.eq.s32.totalorder %s28, 1
    %p187 = por %p185, %p186
    %p189 = scmp.ne.s32.totalorder %s172, %s188
    %p190 = scmp.eq.s32.totalorder %s28, 0
    %p191 = por %p189, %p190
    %s192 = ssub.s32 %s22, %s29
    %p193 = scmp.eq.s32.totalorder %s192, 0
    %s195 = sadd.s32 %s194, 1
    %s196 = scalar_select %p193, %s194, %s195
    %p199 = pneg %p193
    %p200 = scmp.eq.s32.totalorder %s22, 1
    %p201 = por %p199, %p200
    %p202 = scmp.ne.s32.totalorder %s194, %s197
    %p203 = scmp.eq.s32.totalorder %s22, 0
    %p204 = por %p202, %p203
    %p205 = scmp.ne.s32.totalorder %s194, %s197
    %p206 = scmp.eq.s32.totalorder %s27, 1
    %p207 = por %p205, %p206
    %p208 = scmp.ne.s32.totalorder %s197, %s198
    %p209 = scmp.eq.s32.totalorder %s27, 0
    %p210 = por %p208, %p209
    %p211 = scmp.ne.s32.totalorder %s197, %s198
    %p212 = scmp.eq.s32.totalorder %s28, 1
    %p213 = por %p211, %p212
    %p215 = scmp.ne.s32.totalorder %s198, %s214
    %p216 = scmp.eq.s32.totalorder %s28, 0
    %p217 = por %p215, %p216
    %s218 = ssub.s32 %s22, %s29
    %p219 = scmp.eq.s32.totalorder %s218, 0
    %s221 = sadd.s32 %s220, 1
    %s222 = scalar_select %p219, %s220, %s221
    %p225 = pneg %p219
    %p226 = scmp.eq.s32.totalorder %s22, 1
    %p227 = por %p225, %p226
    %p228 = scmp.ne.s32.totalorder %s220, %s223
    %p229 = scmp.eq.s32.totalorder %s22, 0
    %p230 = por %p228, %p229
    %p231 = scmp.ne.s32.totalorder %s220, %s223
    %p232 = scmp.eq.s32.totalorder %s27, 1
    %p233 = por %p231, %p232
    %p234 = scmp.ne.s32.totalorder %s223, %s224
    %p235 = scmp.eq.s32.totalorder %s27, 0
    %p236 = por %p234, %p235
    %p237 = scmp.ne.s32.totalorder %s223, %s224
    %p238 = scmp.eq.s32.totalorder %s28, 1
    %p239 = por %p237, %p238
    %p241 = scmp.ne.s32.totalorder %s224, %s240
    %p242 = scmp.eq.s32.totalorder %s28, 0
    %p243 = por %p241, %p242
    %s244 = ssub.s32 %s22, %s29
    %p245 = scmp.eq.s32.totalorder %s244, 0
    %s247 = sadd.s32 %s246, 1
    %s248 = scalar_select %p245, %s246, %s247
    %p251 = pneg %p245
    %p252 = scmp.eq.s32.totalorder %s22, 1
    %p253 = por %p251, %p252
    %p254 = scmp.ne.s32.totalorder %s246, %s249
    %p255 = scmp.eq.s32.totalorder %s22, 0
    %p256 = por %p254, %p255
    %p257 = scmp.ne.s32.totalorder %s246, %s249
    %p258 = scmp.eq.s32.totalorder %s27, 1
    %p259 = por %p257, %p258
    %p260 = scmp.ne.s32.totalorder %s249, %s250
    %p261 = scmp.eq.s32.totalorder %s27, 0
    %p262 = por %p260, %p261
    %p263 = scmp.ne.s32.totalorder %s249, %s250
    %p264 = scmp.eq.s32.totalorder %s28, 1
    %p265 = por %p263, %p264
    %p267 = scmp.ne.s32.totalorder %s250, %s266
    %p268 = scmp.eq.s32.totalorder %s28, 0
    %p269 = por %p267, %p268
    %s270 = ssub.s32 %s22, %s29
    %p271 = scmp.eq.s32.totalorder %s270, 0
    %s273 = sadd.s32 %s272, 1
    %s274 = scalar_select %p271, %s272, %s273
    %p277 = pneg %p271
    %p278 = scmp.eq.s32.totalorder %s22, 1
    %p279 = por %p277, %p278
    %p280 = scmp.ne.s32.totalorder %s272, %s275
    %p281 = scmp.eq.s32.totalorder %s22, 0
    %p282 = por %p280, %p281
    %p283 = scmp.ne.s32.totalorder %s272, %s275
    %p284 = scmp.eq.s32.totalorder %s27, 1
    %p285 = por %p283, %p284
    %p286 = scmp.ne.s32.totalorder %s275, %s276
    %p287 = scmp.eq.s32.totalorder %s27, 0
    %p288 = por %p286, %p287
    %p289 = scmp.ne.s32.totalorder %s275, %s276
    %p290 = scmp.eq.s32.totalorder %s28, 1
    %p291 = por %p289, %p290
    %p293 = scmp.ne.s32.totalorder %s276, %s292
    %p294 = scmp.eq.s32.totalorder %s28, 0
    %p295 = por %p293, %p294
    %s296 = ssub.s32 %s22, %s29
    %p297 = scmp.eq.s32.totalorder %s296, 0
    %s299 = sadd.s32 %s298, 1
    %s300 = scalar_select %p297, %s298, %s299
    %p303 = pneg %p297
    %p304 = scmp.eq.s32.totalorder %s22, 1
    %p305 = por %p303, %p304
    %p306 = scmp.ne.s32.totalorder %s298, %s301
    %p307 = scmp.eq.s32.totalorder %s22, 0
    %p308 = por %p306, %p307
    %p309 = scmp.ne.s32.totalorder %s298, %s301
    %p310 = scmp.eq.s32.totalorder %s27, 1
    %p311 = por %p309, %p310
    %p312 = scmp.ne.s32.totalorder %s301, %s302
    %p313 = scmp.eq.s32.totalorder %s27, 0
    %p314 = por %p312, %p313
    %p315 = scmp.ne.s32.totalorder %s301, %s302
    %p316 = scmp.eq.s32.totalorder %s28, 1
    %p317 = por %p315, %p316
    %p319 = scmp.ne.s32.totalorder %s302, %s318
    %p320 = scmp.eq.s32.totalorder %s28, 0
    %p321 = por %p319, %p320
    %s322 = ssub.s32 %s22, %s29
    %p323 = scmp.eq.s32.totalorder %s322, 0
    %s325 = sadd.s32 %s324, 1
    %s326 = scalar_select %p323, %s324, %s325
    %p329 = pneg %p323
    %p330 = scmp.eq.s32.totalorder %s22, 1
    %p331 = por %p329, %p330
    %p332 = scmp.ne.s32.totalorder %s324, %s327
    %p333 = scmp.eq.s32.totalorder %s22, 0
    %p334 = por %p332, %p333
    %p335 = scmp.ne.s32.totalorder %s324, %s327
    %p336 = scmp.eq.s32.totalorder %s27, 1
    %p337 = por %p335, %p336
    %p338 = scmp.ne.s32.totalorder %s327, %s328
    %p339 = scmp.eq.s32.totalorder %s27, 0
    %p340 = por %p338, %p339
    %p341 = scmp.ne.s32.totalorder %s327, %s328
    %p342 = scmp.eq.s32.totalorder %s28, 1
    %p343 = por %p341, %p342
    %p345 = scmp.ne.s32.totalorder %s328, %s344
    %p346 = scmp.eq.s32.totalorder %s28, 0
    %p347 = por %p345, %p346
    %s348 = ssub.s32 %s22, %s29
    %p349 = scmp.eq.s32.totalorder %s348, 0
    %s351 = sadd.s32 %s350, 1
    %s352 = scalar_select %p349, %s350, %s351
    %p355 = pneg %p349
    %p356 = scmp.eq.s32.totalorder %s22, 1
    %p357 = por %p355, %p356
    %p358 = scmp.ne.s32.totalorder %s350, %s353
    %p359 = scmp.eq.s32.totalorder %s22, 0
    %p360 = por %p358, %p359
    %p361 = scmp.ne.s32.totalorder %s350, %s353
    %p362 = scmp.eq.s32.totalorder %s27, 1
    %p363 = por %p361, %p362
    %p364 = scmp.ne.s32.totalorder %s353, %s354
    %p365 = scmp.eq.s32.totalorder %s27, 0
    %p366 = por %p364, %p365
    %p367 = scmp.ne.s32.totalorder %s353, %s354
    %p368 = scmp.eq.s32.totalorder %s28, 1
    %p369 = por %p367, %p368
    %p371 = scmp.ne.s32.totalorder %s354, %s370
    %p372 = scmp.eq.s32.totalorder %s28, 0
    %p373 = por %p371, %p372
    %s374 = ssub.s32 %s22, %s29
    %p375 = scmp.eq.s32.totalorder %s374, 0
    %s377 = sadd.s32 %s376, 1
    %s378 = scalar_select %p375, %s376, %s377
    %p381 = pneg %p375
    %p382 = scmp.eq.s32.totalorder %s22, 1
    %p383 = por %p381, %p382
    %p384 = scmp.ne.s32.totalorder %s376, %s379
    %p385 = scmp.eq.s32.totalorder %s22, 0
    %p386 = por %p384, %p385
    %p387 = scmp.ne.s32.totalorder %s376, %s379
    %p388 = scmp.eq.s32.totalorder %s27, 1
    %p389 = por %p387, %p388
    %p390 = scmp.ne.s32.totalorder %s379, %s380
    %p391 = scmp.eq.s32.totalorder %s27, 0
    %p392 = por %p390, %p391
    %p393 = scmp.ne.s32.totalorder %s379, %s380
    %p394 = scmp.eq.s32.totalorder %s28, 1
    %p395 = por %p393, %p394
    %p397 = scmp.ne.s32.totalorder %s380, %s396
    %p398 = scmp.eq.s32.totalorder %s28, 0
    %p399 = por %p397, %p398
    %s400 = ssub.s32 %s22, %s29
    %p401 = scmp.eq.s32.totalorder %s400, 0
    %s403 = sadd.s32 %s402, 1
    %s404 = scalar_select %p401, %s402, %s403
    %p407 = pneg %p401
    %p408 = scmp.eq.s32.totalorder %s22, 1
    %p409 = por %p407, %p408
    %p410 = scmp.ne.s32.totalorder %s402, %s405
    %p411 = scmp.eq.s32.totalorder %s22, 0
    %p412 = por %p410, %p411
    %p413 = scmp.ne.s32.totalorder %s402, %s405
    %p414 = scmp.eq.s32.totalorder %s27, 1
    %p415 = por %p413, %p414
    %p416 = scmp.ne.s32.totalorder %s405, %s406
    %p417 = scmp.eq.s32.totalorder %s27, 0
    %p418 = por %p416, %p417
    %p419 = scmp.ne.s32.totalorder %s405, %s406
    %p420 = scmp.eq.s32.totalorder %s28, 1
    %p421 = por %p419, %p420
    %p423 = scmp.ne.s32.totalorder %s406, %s422
    %p424 = scmp.eq.s32.totalorder %s28, 0
    %p425 = por %p423, %p424
    %s427 = sadd.s32 %s426, 1
    %p430 = scmp.eq.s32.totalorder %s22, 1
    %p431 = scmp.ne.s32.totalorder %s426, %s428
    %p432 = scmp.eq.s32.totalorder %s22, 0
    %p433 = por %p431, %p432
    %p434 = scmp.ne.s32.totalorder %s426, %s428
    %p435 = scmp.eq.s32.totalorder %s27, 1
    %p436 = por %p434, %p435
    %p437 = scmp.ne.s32.totalorder %s428, %s429
    %p438 = scmp.eq.s32.totalorder %s27, 0
    %p439 = por %p437, %p438
    %p440 = scmp.ne.s32.totalorder %s428, %s429
    %p441 = scmp.eq.s32.totalorder %s28, 1
    %p442 = por %p440, %p441
    %p444 = scmp.ne.s32.totalorder %s429, %s443
    %p445 = scmp.eq.s32.totalorder %s28, 0
    %p446 = por %p444, %p445
    %p447 = scmp.le.s32.totalorder 1, %s22
    %p448 = scmp.lt.s32.totalorder %s22, 3
    %p449 = pnand %p447, %p448
    %p450 = pneg %p449
    // Predicated region
    $region9: #{_lambda_.2} parent=5 // pred_check
      _
    $region10: #{_lambda_.2} parent=5 // pred_check_branch
      %452 = sbr.rel (%p449) target = $region12
    $region11: #{_lambda_.2} parent=5 // pred_region
      %s453 = ssub.s32 %s22, 1
      // Predicated region
      $region13: #{_lambda_.2} parent=11 // pred_check
        %p454 = pneg %p43
      $region14: #{_lambda_.2} parent=11 // pred_check_branch
        %456 = sbr.rel (%p454) target = $region16
      $region15: #{_lambda_.2} parent=11 // pred_region
        _
      $region16: #{_lambda_.2} parent=11 // pred_fallthru
        _
      // Predicated region
      $region17: #{_lambda_.2} parent=11 // pred_check
        %p457 = pneg %p64
      $region18: #{_lambda_.2} parent=11 // pred_check_branch
        %459 = sbr.rel (%p457) target = $region20
      $region19: #{_lambda_.2} parent=11 // pred_region
        _
      $region20: #{_lambda_.2} parent=11 // pred_fallthru
        _
      // Predicated region
      $region21: #{_lambda_.2} parent=11 // pred_check
        %p460 = pneg %p85
      $region22: #{_lambda_.2} parent=11 // pred_check_branch
        %462 = sbr.rel (%p460) target = $region24
      $region23: #{_lambda_.2} parent=11 // pred_region
        _
      $region24: #{_lambda_.2} parent=11 // pred_fallthru
        _
      // Predicated region
      $region25: #{_lambda_.2} parent=11 // pred_check
        %p463 = pneg %p106
      $region26: #{_lambda_.2} parent=11 // pred_check_branch
        %465 = sbr.rel (%p463) target = $region28
      $region27: #{_lambda_.2} parent=11 // pred_region
        _
      $region28: #{_lambda_.2} parent=11 // pred_fallthru
        _
    $region12: #{_lambda_.2} parent=5 // pred_fallthru
      _
    %p466 = scmp.lt.s32.totalorder %s22, 2
    // Predicated region
    $region29: #{_lambda_.2} parent=5 // pred_check
      %p467 = pneg %p466
    $region30: #{_lambda_.2} parent=5 // pred_check_branch
      %469 = sbr.rel (%p467) target = $region32
    $region31: #{_lambda_.2} parent=5 // pred_region
      // Predicated region
      $region33: #{_lambda_.2} parent=31 // pred_check
        %p470 = pneg %p126
      $region34: #{_lambda_.2} parent=31 // pred_check_branch
        %472 = sbr.rel (%p470) target = $region36
      $region35: #{_lambda_.2} parent=31 // pred_region
        %p473 = scmp.lt.s32.totalorder %s22, 1
        %s474 = scalar_select %p473, %s22, 1
        %s475 = smul.addr %s474, 4
        %s476 = smul.addr %s475, 8
        %s477 = scalar_lea.vmem %s4, %s476
      $region36: #{_lambda_.2} parent=31 // pred_fallthru
        _
      // Predicated region
      $region37: #{_lambda_.2} parent=31 // pred_check
        %p478 = pneg %p152
      $region38: #{_lambda_.2} parent=31 // pred_check_branch
        %480 = sbr.rel (%p478) target = $region40
      $region39: #{_lambda_.2} parent=31 // pred_region
        %p481 = scmp.lt.s32.totalorder %s22, 1
        %s482 = scalar_select %p481, %s22, 1
        %s483 = scalar_lea.vmem %s5, %s482
      $region40: #{_lambda_.2} parent=31 // pred_fallthru
        _
      // Predicated region
      $region41: #{_lambda_.2} parent=31 // pred_check
        %p484 = pneg %p178
      $region42: #{_lambda_.2} parent=31 // pred_check_branch
        %486 = sbr.rel (%p484) target = $region44
      $region43: #{_lambda_.2} parent=31 // pred_region
        %p487 = scmp.lt.s32.totalorder %s22, 1
        %s488 = scalar_select %p487, %s22, 1
        %s489 = smul.addr %s488, 4
        %s490 = smul.addr %s489, 8
        %s491 = scalar_lea.vmem %s6, %s490
      $region44: #{_lambda_.2} parent=31 // pred_fallthru
        _
      // Predicated region
      $region45: #{_lambda_.2} parent=31 // pred_check
        %p492 = pneg %p204
      $region46: #{_lambda_.2} parent=31 // pred_check_branch
        %494 = sbr.rel (%p492) target = $region48
      $region47: #{_lambda_.2} parent=31 // pred_region
        %p495 = scmp.lt.s32.totalorder %s22, 1
        %s496 = scalar_select %p495, %s22, 1
        %s497 = scalar_lea.vmem %s7, %s496
      $region48: #{_lambda_.2} parent=31 // pred_fallthru
        _
      // Predicated region
      $region49: #{_lambda_.2} parent=31 // pred_check
        %p498 = pneg %p230
      $region50: #{_lambda_.2} parent=31 // pred_check_branch
        %500 = sbr.rel (%p498) target = $region52
      $region51: #{_lambda_.2} parent=31 // pred_region
        %p501 = scmp.lt.s32.totalorder %s22, 1
        %s502 = scalar_select %p501, %s22, 1
        %s503 = scalar_lea.vmem %s8, %s502
      $region52: #{_lambda_.2} parent=31 // pred_fallthru
        _
      // Predicated region
      $region53: #{_lambda_.2} parent=31 // pred_check
        %p504 = pneg %p256
      $region54: #{_lambda_.2} parent=31 // pred_check_branch
        %506 = sbr.rel (%p504) target = $region56
      $region55: #{_lambda_.2} parent=31 // pred_region
        %p507 = scmp.lt.s32.totalorder %s22, 1
        %s508 = scalar_select %p507, %s22, 1
        %s509 = scalar_lea.vmem %s9, %s508
      $region56: #{_lambda_.2} parent=31 // pred_fallthru
        _
      // Predicated region
      $region57: #{_lambda_.2} parent=31 // pred_check
        %p510 = pneg %p282
      $region58: #{_lambda_.2} parent=31 // pred_check_branch
        %512 = sbr.rel (%p510) target = $region60
      $region59: #{_lambda_.2} parent=31 // pred_region
        %p513 = scmp.lt.s32.totalorder %s22, 1
        %s514 = scalar_select %p513, %s22, 1
        %s515 = smul.addr %s514, 4
        %s516 = smul.addr %s515, 8
        %s517 = scalar_lea.vmem %s10, %s516
      $region60: #{_lambda_.2} parent=31 // pred_fallthru
        _
      // Predicated region
      $region61: #{_lambda_.2} parent=31 // pred_check
        %p518 = pneg %p308
      $region62: #{_lambda_.2} parent=31 // pred_check_branch
        %520 = sbr.rel (%p518) target = $region64
      $region63: #{_lambda_.2} parent=31 // pred_region
        %p521 = scmp.lt.s32.totalorder %s22, 1
        %s522 = scalar_select %p521, %s22, 1
        %s523 = scalar_lea.vmem %s11, %s522
      $region64: #{_lambda_.2} parent=31 // pred_fallthru
        _
      // Predicated region
      $region65: #{_lambda_.2} parent=31 // pred_check
        %p524 = pneg %p334
      $region66: #{_lambda_.2} parent=31 // pred_check_branch
        %526 = sbr.rel (%p524) target = $region68
      $region67: #{_lambda_.2} parent=31 // pred_region
        %p527 = scmp.lt.s32.totalorder %s22, 1
        %s528 = scalar_select %p527, %s22, 1
        %s529 = smul.addr %s528, 8
        %s530 = smul.addr %s529, 8
        %s531 = scalar_lea.vmem %s12, %s530
      $region68: #{_lambda_.2} parent=31 // pred_fallthru
        _
      // Predicated region
      $region69: #{_lambda_.2} parent=31 // pred_check
        %p532 = pneg %p360
      $region70: #{_lambda_.2} parent=31 // pred_check_branch
        %534 = sbr.rel (%p532) target = $region72
      $region71: #{_lambda_.2} parent=31 // pred_region
        %p535 = scmp.lt.s32.totalorder %s22, 1
        %s536 = scalar_select %p535, %s22, 1
        %s537 = scalar_lea.vmem %s13, %s536
      $region72: #{_lambda_.2} parent=31 // pred_fallthru
        _
      // Predicated region
      $region73: #{_lambda_.2} parent=31 // pred_check
        %p538 = pneg %p386
      $region74: #{_lambda_.2} parent=31 // pred_check_branch
        %540 = sbr.rel (%p538) target = $region76
      $region75: #{_lambda_.2} parent=31 // pred_region
        %p541 = scmp.lt.s32.totalorder %s22, 1
        %s542 = scalar_select %p541, %s22, 1
        %s543 = scalar_lea.vmem %s14, %s542
      $region76: #{_lambda_.2} parent=31 // pred_fallthru
        _
      // Predicated region
      $region77: #{_lambda_.2} parent=31 // pred_check
        %p544 = pneg %p412
      $region78: #{_lambda_.2} parent=31 // pred_check_branch
        %546 = sbr.rel (%p544) target = $region80
      $region79: #{_lambda_.2} parent=31 // pred_region
        %p547 = scmp.lt.s32.totalorder %s22, 1
        %s548 = scalar_select %p547, %s22, 1
        %s549 = scalar_lea.vmem %s15, %s548
      $region80: #{_lambda_.2} parent=31 // pred_fallthru
        _
    $region32: #{_lambda_.2} parent=5 // pred_fallthru
      _
    %p550 = scmp.le.s32.totalorder 1, %s22
    %p551 = scmp.lt.s32.totalorder %s22, 3
    %p552 = pnand %p550, %p551
    %p553 = pneg %p552
    // Predicated region
    $region81: #{_lambda_.2} parent=5 // pred_check
      _
    $region82: #{_lambda_.2} parent=5 // pred_check_branch
      %555 = sbr.rel (%p552) target = $region84
    $region83: #{_lambda_.2} parent=5 // pred_region
      %s556 = ssub.s32 %s22, 1
      %p557 = pneg %p43
      %p558 = pneg %p40
      %p559 = pneg %p64
      %p560 = pneg %p61
      %p561 = pneg %p85
      %p562 = pneg %p82
      %p563 = pneg %p106
      %p564 = pneg %p103
      %p565 = scmp.lt.s32.totalorder %s27, 1
      %s566 = scalar_select %p565, %s27, 1
      %s567 = smul.addr %s566, 4
      %s568 = smul.addr %s567, 8
      %s569 = scalar_lea.vmem %s4, %s568
      %p570 = pneg %p132
      %p571 = pneg %p129
      %p572 = scmp.lt.s32.totalorder %s27, 1
      %s573 = scalar_select %p572, %s27, 1
      %s574 = scalar_lea.vmem %s5, %s573
      %p575 = pneg %p158
      %p576 = pneg %p155
      %p577 = scmp.lt.s32.totalorder %s27, 1
      %s578 = scalar_select %p577, %s27, 1
      %s579 = smul.addr %s578, 4
      %s580 = smul.addr %s579, 8
      %s581 = scalar_lea.vmem %s6, %s580
      %p582 = pneg %p184
      %p583 = pneg %p181
      %p584 = scmp.lt.s32.totalorder %s27, 1
      %s585 = scalar_select %p584, %s27, 1
      %s586 = scalar_lea.vmem %s7, %s585
      %p587 = pneg %p210
      %p588 = pneg %p207
      %p589 = scmp.lt.s32.totalorder %s27, 1
      %s590 = scalar_select %p589, %s27, 1
      %s591 = scalar_lea.vmem %s8, %s590
      %p592 = pneg %p236
      %p593 = pneg %p233
      %p594 = scmp.lt.s32.totalorder %s27, 1
      %s595 = scalar_select %p594, %s27, 1
      %s596 = scalar_lea.vmem %s9, %s595
      %p597 = pneg %p262
      %p598 = pneg %p259
      %p599 = scmp.lt.s32.totalorder %s27, 1
      %s600 = scalar_select %p599, %s27, 1
      %s601 = smul.addr %s600, 4
      %s602 = smul.addr %s601, 8
      %s603 = scalar_lea.vmem %s10, %s602
      %p604 = pneg %p288
      %p605 = pneg %p285
      %p606 = scmp.lt.s32.totalorder %s27, 1
      %s607 = scalar_select %p606, %s27, 1
      %s608 = scalar_lea.vmem %s11, %s607
      %p609 = pneg %p314
      %p610 = pneg %p311
      %p611 = scmp.lt.s32.totalorder %s27, 1
      %s612 = scalar_select %p611, %s27, 1
      %s613 = smul.addr %s612, 8
      %s614 = smul.addr %s613, 8
      %s615 = scalar_lea.vmem %s12, %s614
      %p616 = pneg %p340
      %p617 = pneg %p337
      %p618 = scmp.lt.s32.totalorder %s27, 1
      %s619 = scalar_select %p618, %s27, 1
      %s620 = scalar_lea.vmem %s13, %s619
      %p621 = pneg %p366
      %p622 = pneg %p363
      %p623 = scmp.lt.s32.totalorder %s27, 1
      %s624 = scalar_select %p623, %s27, 1
      %s625 = scalar_lea.vmem %s14, %s624
      %p626 = pneg %p392
      %p627 = pneg %p389
      %p628 = scmp.lt.s32.totalorder %s27, 1
      %s629 = scalar_select %p628, %s27, 1
      %s630 = scalar_lea.vmem %s15, %s629
      %p631 = pneg %p418
      %p632 = pneg %p415
      %p633 = pneg %p439
      %p634 = pneg %p436
      %p635 = scmp.lt.s32.totalorder %s27, 1
      %s636 = scalar_select %p635, %s27, 1
      %s637 = smul.addr %s636, 4
      %s638 = smul.addr %s637, 8
      %s639 = scalar_lea.vmem %s4, %s638
      %p640 = scmp.lt.s32.totalorder %s27, 1
      %s641 = scalar_select %p640, %s27, 1
      %s642 = scalar_lea.vmem %s5, %s641
      %p643 = scmp.lt.s32.totalorder %s27, 1
      %s644 = scalar_select %p643, %s27, 1
      %s645 = smul.addr %s644, 4
      %s646 = smul.addr %s645, 8
      %s647 = scalar_lea.vmem %s6, %s646
      %p648 = scmp.lt.s32.totalorder %s27, 1
      %s649 = scalar_select %p648, %s27, 1
      %s650 = scalar_lea.vmem %s7, %s649
      %p651 = scmp.lt.s32.totalorder %s27, 1
      %s652 = scalar_select %p651, %s27, 1
      %s653 = scalar_lea.vmem %s8, %s652
      %p654 = scmp.lt.s32.totalorder %s27, 1
      %s655 = scalar_select %p654, %s27, 1
      %s656 = scalar_lea.vmem %s9, %s655
      %p657 = scmp.lt.s32.totalorder %s27, 1
      %s658 = scalar_select %p657, %s27, 1
      %s659 = smul.addr %s658, 4
      %s660 = smul.addr %s659, 8
      %s661 = scalar_lea.vmem %s10, %s660
      %p662 = scmp.lt.s32.totalorder %s27, 1
      %s663 = scalar_select %p662, %s27, 1
      %s664 = scalar_lea.vmem %s11, %s663
      %p665 = scmp.lt.s32.totalorder %s27, 1
      %s666 = scalar_select %p665, %s27, 1
      %s667 = smul.addr %s666, 8
      %s668 = smul.addr %s667, 8
      %s669 = scalar_lea.vmem %s12, %s668
      %p670 = scmp.lt.s32.totalorder %s27, 1
      %s671 = scalar_select %p670, %s27, 1
      %s672 = scalar_lea.vmem %s13, %s671
      %p673 = scmp.lt.s32.totalorder %s27, 1
      %s674 = scalar_select %p673, %s27, 1
      %s675 = scalar_lea.vmem %s14, %s674
      %p676 = scmp.lt.s32.totalorder %s27, 1
      %s677 = scalar_select %p676, %s27, 1
      %s678 = scalar_lea.vmem %s15, %s677
      %p679 = scmp.eq.s32.totalorder %s27, 0
      // Predicated region
      $region85: #{_lambda_.2} parent=83 // pred_check
        %p680 = pneg %p679
      $region86: #{_lambda_.2} parent=83 // pred_check_branch
        %682 = sbr.rel (%p680) target = $region88
      $region87: #{_lambda_.2} parent=83 // pred_region
        %v683 = vld [vmem:[%s0] sm:$0xff]
        %v684 = vld [vmem:[%s0 + $0x8] sm:$0xff]
        %v685 = vld [vmem:[%s2] sm:$0x1]
        %v686 = vld [vmem:[%s3] sm:$0x1]
        %vm687 = vcmask 261120
        %v688 = vsel %vm687, %v683, 0.0
        %689 = vadd.xlane.f32.xlu0 %v688
        %v690 = vpop.xlane.xlu0 %689
        %v691 = vsel %vm687, %v684, 0.0
        %692 = vadd.xlane.f32.xlu0 %v691
        %v693 = vpop.xlane.xlu0 %692
        %v694 = vrcp.pop 32.0
        %v695 = vmul.f32 %v690, %v694
        %v696 = vmul.f32 %v693, %v694
        %v697 = vsub.f32 %v683, %v695
        %v698 = vsub.f32 %v684, %v696
        %v699 = vmul.f32 %v697, %v697
        %v700 = vmul.f32 %v698, %v698
        %v701 = vsel %vm687, %v699, 0.0
        %702 = vadd.xlane.f32.xlu0 %v701
        %v703 = vpop.xlane.xlu0 %702
        %v704 = vsel %vm687, %v700, 0.0
        %705 = vadd.xlane.f32.xlu0 %v704
        %v706 = vpop.xlane.xlu0 %705
        %v707 = vmul.f32 %v703, %v694
        %v708 = vmul.f32 %v706, %v694
        %v709 = vadd.f32 %v707, 1e-12
        %v710 = vadd.f32 %v708, 1e-12
        %v711 = vrsqrt.pop %v709
        %v712 = vrsqrt.pop %v710
        %v713 = vmul.f32 %v697, %v711
        %v714 = vmul.f32 %v698, %v712
        %v716 = vlaneseq
        %v717 = vshrl.u32 %v716, 7
        %v718 = vsub.s32 0, %v717
        %v719 = vrot.slane %v685, %v718
        %v721 = vmul.f32 %v713, %v719
        %v722 = vmul.f32 %v714, %v719
        %v724 = vlaneseq
        %v725 = vshrl.u32 %v724, 7
        %v726 = vsub.s32 0, %v725
        %v727 = vrot.slane %v686, %v726
        %v729 = vadd.f32 %v721, %v727
        %v730 = vadd.f32 %v722, %v727
        %731 = vst.msk [vmem:[#allocation2] sm:$0xff] %vm687, %v729
        %732 = vst.msk [vmem:[#allocation2 + $0x8] sm:$0xff] %vm687, %v730
        %v733 = vld [vmem:[%s1] sm:$0x1]
        %v734 = vld [vmem:[%s1 + $0x1] sm:$0x1]
        %v735 = vsub.f32 1.0, %v733
        %v736 = vsub.f32 1.0, %v734
        %v737 = vmul.f32 %v735, -1e+09
        %v738 = vmul.f32 %v736, -1e+09
        %vm739 = vcmask 57344
        %740 = vst.msk [vmem:[#allocation3] sm:$0x1] %vm739, %v737
        %741 = vst.msk [vmem:[#allocation3 + $0x1] sm:$0x1] %vm739, %v738
      $region88: #{_lambda_.2} parent=83 // pred_fallthru
        _
      %v742 = vld [vmem:[#allocation2] sm:$0xff]
      %v743 = vld [vmem:[#allocation2 + $0x8] sm:$0xff]
      %v744 = vld [vmem:[#allocation3] sm:$0x1]
      %v745 = vld [vmem:[#allocation3 + $0x1] sm:$0x1]
      %v746 = vld [vmem:[%s639] sm:$0xff]
      %v747 = vld [vmem:[%s639 + $0x8] sm:$0xff]
      %v748 = vld [vmem:[%s639 + $0x10] sm:$0xff]
      %v749 = vld [vmem:[%s639 + $0x18] sm:$0xff]
      %v750 = vld [vmem:[%s642] sm:$0x1]
      %v752 = vlaneseq
      %v753 = vshrl.u32 %v752, 7
      %v754 = vsub.s32 0, %v753
      %v755 = vrot.slane %v750, %v754
      %vm757 = vcmask 261120
      %v759 = vsel %vm757, %v742, 0
      %v762 = vsel %vm757, %v743, 0
      %764 = vmatprep.subr.mxu0 0.0
      %765 = vmatpush1.msra.mxu0 0.0
      %766 = vmatprep.subr.mxu0 0.0
      %767 = vmatpush1.msra.mxu0 0.0
      %768 = vmatprep.subr.mxu0 0.0
      %769 = vmatpush1.msra.mxu0 0.0
      %770 = vmatprep.subr.mxu0 0.0
      %771 = vmatpush1.msra.mxu0 0.0
      %772 = vmatprep.subr.mxu0 0.0
      %773 = vmatpush1.msra.mxu0 0.0
      %774 = vmatprep.subr.mxu0 0.0
      %775 = vmatpush1.msra.mxu0 0.0
      %776 = vmatprep.subr.mxu0 0.0
      %777 = vmatpush1.msra.mxu0 0.0
      %778 = vmatprep.subr.mxu0 0.0
      %779 = vmatpush1.msra.mxu0 0.0
      %780 = vmatprep.subr.mxu0 0.0
      %781 = vmatpush1.msra.mxu0 0.0
      %782 = vmatprep.subr.mxu0 0.0
      %783 = vmatpush1.msra.mxu0 0.0
      %784 = vmatprep.subr.mxu0 0.0
      %785 = vmatpush1.msra.mxu0 0.0
      %786 = vmatprep.subr.mxu0 0.0
      %787 = vmatpush1.msra.mxu0 0.0
      %788 = vmatprep.subr.mxu0 0.0
      %789 = vmatpush1.msra.mxu0 %v749
      %790 = vmatprep.subr.mxu0 0.0
      %791 = vmatpush1.msra.mxu0 %v748
      %792 = vmatprep.subr.mxu0 0.0
      %793 = vmatpush1.msra.mxu0 %v747
      %794 = vmatprep.subr.mxu0 0.0
      %795 = vmatpush1.msra.mxu0 %v746
      %796 = vmatprep.subr.mxu0 0.0
      %797 = vmatpush2.msra.mxu0 0.0
      %798 = vmatprep.subr.mxu0 0.0
      %799 = vmatpush2.msra.mxu0 0.0
      %800 = vmatprep.subr.mxu0 0.0
      %801 = vmatpush2.msra.mxu0 0.0
      %802 = vmatprep.subr.mxu0 0.0
      %803 = vmatpush2.msra.mxu0 0.0
      %804 = vmatprep.subr.mxu0 0.0
      %805 = vmatpush2.msra.mxu0 0.0
      %806 = vmatprep.subr.mxu0 0.0
      %807 = vmatpush2.msra.mxu0 0.0
      %808 = vmatprep.subr.mxu0 0.0
      %809 = vmatpush2.msra.mxu0 0.0
      %810 = vmatprep.subr.mxu0 0.0
      %811 = vmatpush2.msra.mxu0 0.0
      %812 = vmatprep.subr.mxu0 0.0
      %813 = vmatpush2.msra.mxu0 0.0
      %814 = vmatprep.subr.mxu0 0.0
      %815 = vmatpush2.msra.mxu0 0.0
      %816 = vmatprep.subr.mxu0 0.0
      %817 = vmatpush2.msra.mxu0 0.0
      %818 = vmatprep.subr.mxu0 0.0
      %819 = vmatpush2.msra.mxu0 0.0
      %820 = vmatprep.subr.mxu0 0.0
      %821 = vmatpush2.msra.mxu0 0.0
      %822 = vmatprep.subr.mxu0 0.0
      %823 = vmatpush2.msra.mxu0 0.0
      %824 = vmatprep.subr.mxu0 0.0
      %825 = vmatpush2.msra.mxu0 0.0
      %826 = vmatprep.subr.mxu0 0.0
      %827 = vmatpush2.msra.mxu0 0.0
      %828 = vmatprep.mubr.f32.mxu0 0.0
      %829 = vmatmul.mubr.f32.gmra.mxu0 %v759
      %v830 = vpop.f32.mrf.mxu0
      %v831 = vadd.f32 %v755, %v830
      %v832 = vpop.f32.mrf.mxu0
      %833 = vmatprep.mubr.f32.mxu0 0.0
      %834 = vmatmul.mubr.f32.gmra.mxu0 %v762
      %v835 = vpop.f32.mrf.mxu0
      %v836 = vadd.f32 %v755, %v835
      %v837 = vpop.f32.mrf.mxu0
      %838 = vdwg.mxu0
      %840 = vrot.lane.b32.xlu0 %v831, 96
      %v841 = vpop.permute.xlu0 %840
      %vm842 = vcmask 64512
      %v843 = vsel %vm842, %v831, 0
      %v845 = vsel %vm842, %v841, 0
      %847 = vmatprep.subr.mxu0 0.0
      %848 = vmatpush1.xpose.msra.mxu0 0.0
      %849 = vmatprep.subr.mxu0 0.0
      %850 = vmatpush1.xpose.msra.mxu0 0.0
      %851 = vmatprep.subr.mxu0 0.0
      %852 = vmatpush1.xpose.msra.mxu0 0.0
      %853 = vmatprep.subr.mxu0 0.0
      %854 = vmatpush1.xpose.msra.mxu0 0.0
      %855 = vmatprep.subr.mxu0 0.0
      %856 = vmatpush1.xpose.msra.mxu0 0.0
      %857 = vmatprep.subr.mxu0 0.0
      %858 = vmatpush1.xpose.msra.mxu0 0.0
      %859 = vmatprep.subr.mxu0 0.0
      %860 = vmatpush1.xpose.msra.mxu0 0.0
      %861 = vmatprep.subr.mxu0 0.0
      %862 = vmatpush1.xpose.msra.mxu0 0.0
      %863 = vmatprep.subr.mxu0 0.0
      %864 = vmatpush1.xpose.msra.mxu0 0.0
      %865 = vmatprep.subr.mxu0 0.0
      %866 = vmatpush1.xpose.msra.mxu0 0.0
      %867 = vmatprep.subr.mxu0 0.0
      %868 = vmatpush1.xpose.msra.mxu0 0.0
      %869 = vmatprep.subr.mxu0 0.0
      %870 = vmatpush1.xpose.msra.mxu0 0.0
      %871 = vmatprep.subr.mxu0 0.0
      %872 = vmatpush1.xpose.msra.mxu0 0.0
      %873 = vmatprep.subr.mxu0 0.0
      %874 = vmatpush1.xpose.msra.mxu0 0.0
      %875 = vmatprep.subr.mxu0 0.0
      %876 = vmatpush1.xpose.msra.mxu0 0.0
      %877 = vmatprep.subr.mxu0 0.0
      %878 = vmatpush1.xpose.msra.mxu0 %v845
      %879 = vmatprep.subr.mxu0 0.0
      %880 = vmatpush2.xpose.msra.mxu0 0.0
      %881 = vmatprep.subr.mxu0 0.0
      %882 = vmatpush2.xpose.msra.mxu0 0.0
      %883 = vmatprep.subr.mxu0 0.0
      %884 = vmatpush2.xpose.msra.mxu0 0.0
      %885 = vmatprep.subr.mxu0 0.0
      %886 = vmatpush2.xpose.msra.mxu0 0.0
      %887 = vmatprep.subr.mxu0 0.0
      %888 = vmatpush2.xpose.msra.mxu0 0.0
      %889 = vmatprep.subr.mxu0 0.0
      %890 = vmatpush2.xpose.msra.mxu0 0.0
      %891 = vmatprep.subr.mxu0 0.0
      %892 = vmatpush2.xpose.msra.mxu0 0.0
      %893 = vmatprep.subr.mxu0 0.0
      %894 = vmatpush2.xpose.msra.mxu0 0.0
      %895 = vmatprep.subr.mxu0 0.0
      %896 = vmatpush2.xpose.msra.mxu0 0.0
      %897 = vmatprep.subr.mxu0 0.0
      %898 = vmatpush2.xpose.msra.mxu0 0.0
      %899 = vmatprep.subr.mxu0 0.0
      %900 = vmatpush2.xpose.msra.mxu0 0.0
      %901 = vmatprep.subr.mxu0 0.0
      %902 = vmatpush2.xpose.msra.mxu0 0.0
      %903 = vmatprep.subr.mxu0 0.0
      %904 = vmatpush2.xpose.msra.mxu0 0.0
      %905 = vmatprep.subr.mxu0 0.0
      %906 = vmatpush2.xpose.msra.mxu0 0.0
      %907 = vmatprep.subr.mxu0 0.0
      %908 = vmatpush2.xpose.msra.mxu0 0.0
      %909 = vmatprep.subr.mxu0 0.0
      %910 = vmatpush2.xpose.msra.mxu0 0.0
      %911 = vmatprep.mubr.f32.mxu0 0.0
      %912 = vmatmul.mubr.f32.gmra.mxu0 %v843
      %v913 = vpop.f32.mrf.mxu0
      %v914 = vadd.f32 0.0, %v913
      %v915 = vpop.f32.mrf.mxu0
      %916 = vdwg.mxu0
      %918 = vrot.lane.b32.xlu0 %v836, 96
      %v919 = vpop.permute.xlu0 %918
      %v920 = vsel %vm842, %v836, 0
      %v922 = vsel %vm842, %v919, 0
      %924 = vmatprep.subr.mxu0 0.0
      %925 = vmatpush1.xpose.msra.mxu0 0.0
      %926 = vmatprep.subr.mxu0 0.0
      %927 = vmatpush1.xpose.msra.mxu0 0.0
      %928 = vmatprep.subr.mxu0 0.0
      %929 = vmatpush1.xpose.msra.mxu0 0.0
      %930 = vmatprep.subr.mxu0 0.0
      %931 = vmatpush1.xpose.msra.mxu0 0.0
      %932 = vmatprep.subr.mxu0 0.0
      %933 = vmatpush1.xpose.msra.mxu0 0.0
      %934 = vmatprep.subr.mxu0 0.0
      %935 = vmatpush1.xpose.msra.mxu0 0.0
      %936 = vmatprep.subr.mxu0 0.0
      %937 = vmatpush1.xpose.msra.mxu0 0.0
      %938 = vmatprep.subr.mxu0 0.0
      %939 = vmatpush1.xpose.msra.mxu0 0.0
      %940 = vmatprep.subr.mxu0 0.0
      %941 = vmatpush1.xpose.msra.mxu0 0.0
      %942 = vmatprep.subr.mxu0 0.0
      %943 = vmatpush1.xpose.msra.mxu0 0.0
      %944 = vmatprep.subr.mxu0 0.0
      %945 = vmatpush1.xpose.msra.mxu0 0.0
      %946 = vmatprep.subr.mxu0 0.0
      %947 = vmatpush1.xpose.msra.mxu0 0.0
      %948 = vmatprep.subr.mxu0 0.0
      %949 = vmatpush1.xpose.msra.mxu0 0.0
      %950 = vmatprep.subr.mxu0 0.0
      %951 = vmatpush1.xpose.msra.mxu0 0.0
      %952 = vmatprep.subr.mxu0 0.0
      %953 = vmatpush1.xpose.msra.mxu0 0.0
      %954 = vmatprep.subr.mxu0 0.0
      %955 = vmatpush1.xpose.msra.mxu0 %v922
      %956 = vmatprep.subr.mxu0 0.0
      %957 = vmatpush2.xpose.msra.mxu0 0.0
      %958 = vmatprep.subr.mxu0 0.0
      %959 = vmatpush2.xpose.msra.mxu0 0.0
      %960 = vmatprep.subr.mxu0 0.0
      %961 = vmatpush2.xpose.msra.mxu0 0.0
      %962 = vmatprep.subr.mxu0 0.0
      %963 = vmatpush2.xpose.msra.mxu0 0.0
      %964 = vmatprep.subr.mxu0 0.0
      %965 = vmatpush2.xpose.msra.mxu0 0.0
      %966 = vmatprep.subr.mxu0 0.0
      %967 = vmatpush2.xpose.msra.mxu0 0.0
      %968 = vmatprep.subr.mxu0 0.0
      %969 = vmatpush2.xpose.msra.mxu0 0.0
      %970 = vmatprep.subr.mxu0 0.0
      %971 = vmatpush2.xpose.msra.mxu0 0.0
      %972 = vmatprep.subr.mxu0 0.0
      %973 = vmatpush2.xpose.msra.mxu0 0.0
      %974 = vmatprep.subr.mxu0 0.0
      %975 = vmatpush2.xpose.msra.mxu0 0.0
      %976 = vmatprep.subr.mxu0 0.0
      %977 = vmatpush2.xpose.msra.mxu0 0.0
      %978 = vmatprep.subr.mxu0 0.0
      %979 = vmatpush2.xpose.msra.mxu0 0.0
      %980 = vmatprep.subr.mxu0 0.0
      %981 = vmatpush2.xpose.msra.mxu0 0.0
      %982 = vmatprep.subr.mxu0 0.0
      %983 = vmatpush2.xpose.msra.mxu0 0.0
      %984 = vmatprep.subr.mxu0 0.0
      %985 = vmatpush2.xpose.msra.mxu0 0.0
      %986 = vmatprep.subr.mxu0 0.0
      %987 = vmatpush2.xpose.msra.mxu0 0.0
      %988 = vmatprep.mubr.f32.mxu0 0.0
      %989 = vmatmul.mubr.f32.gmra.mxu0 %v920
      %v990 = vpop.f32.mrf.mxu0
      %v991 = vadd.f32 0.0, %v990
      %v992 = vpop.f32.mrf.mxu0
      %993 = vdwg.mxu0
      %v994 = vmul.f32 %v914, 0.35355338
      %v995 = vmul.f32 %v991, 0.35355338
      %v998 = vlaneseq
      %v999 = vshrl.u32 %v998, 7
      %v1000 = vsub.s32 0, %v999
      %v1001 = vrot.slane %v744, %v1000
      %v1002 = vlaneseq
      %v1003 = vshrl.u32 %v1002, 7
      %v1004 = vsub.s32 0, %v1003
      %v1005 = vrot.slane %v745, %v1004
      %v1008 = vadd.f32 %v994, %v1001
      %v1009 = vadd.f32 %v995, %v1005
      %v1010 = vsel %vm842, %v1008, -inf
      %1011 = vmax.xlane.f32.xlu0 %v1010
      %v1012 = vpop.xlane.xlu0 %1011
      %v1013 = vsel %vm842, %v1009, -inf
      %1014 = vmax.xlane.f32.xlu0 %v1013
      %v1015 = vpop.xlane.xlu0 %1014
      %v1016 = vsub.f32 %v1008, %v1012
      %v1017 = vsub.f32 %v1009, %v1015
      %v1018 = vmul.f32 %v1016, 1.442695
      %v1019 = vpow.pop %v1018
      %v1020 = vmul.f32 %v1017, 1.442695
      %v1021 = vpow.pop %v1020
      %v1022 = vsel %vm842, %v1019, 0.0
      %1023 = vadd.xlane.f32.xlu0 %v1022
      %v1024 = vpop.xlane.xlu0 %1023
      %v1025 = vsel %vm842, %v1021, 0.0
      %1026 = vadd.xlane.f32.xlu0 %v1025
      %v1027 = vpop.xlane.xlu0 %1026
      %v1028 = vrcp.pop %v1024
      %v1029 = vrcp.pop %v1027
      %v1030 = vmul.f32 %v1019, %v1028
      %v1031 = vmul.f32 %v1021, %v1029
      %1032 = vrot.lane.b32.xlu0 %v831, 64
      %v1033 = vpop.permute.xlu0 %1032
      %v1036 = vsel %vm842, %v1030, 0
      %1038 = vmatprep.subr.mxu0 0.0
      %1039 = vmatpush1.msra.mxu0 0.0
      %1040 = vmatprep.subr.mxu0 0.0
      %1041 = vmatpush1.msra.mxu0 0.0
      %1042 = vmatprep.subr.mxu0 0.0
      %1043 = vmatpush1.msra.mxu0 0.0
      %1044 = vmatprep.subr.mxu0 0.0
      %1045 = vmatpush1.msra.mxu0 0.0
      %1046 = vmatprep.subr.mxu0 0.0
      %1047 = vmatpush1.msra.mxu0 0.0
      %1048 = vmatprep.subr.mxu0 0.0
      %1049 = vmatpush1.msra.mxu0 0.0
      %1050 = vmatprep.subr.mxu0 0.0
      %1051 = vmatpush1.msra.mxu0 0.0
      %1052 = vmatprep.subr.mxu0 0.0
      %1053 = vmatpush1.msra.mxu0 0.0
      %1054 = vmatprep.subr.mxu0 0.0
      %1055 = vmatpush1.msra.mxu0 0.0
      %1056 = vmatprep.subr.mxu0 0.0
      %1057 = vmatpush1.msra.mxu0 0.0
      %1058 = vmatprep.subr.mxu0 0.0
      %1059 = vmatpush1.msra.mxu0 0.0
      %1060 = vmatprep.subr.mxu0 0.0
      %1061 = vmatpush1.msra.mxu0 0.0
      %1062 = vmatprep.subr.mxu0 0.0
      %1063 = vmatpush1.msra.mxu0 0.0
      %1064 = vmatprep.subr.mxu0 0.0
      %1065 = vmatpush1.msra.mxu0 0.0
      %1066 = vmatprep.subr.mxu0 0.0
      %1067 = vmatpush1.msra.mxu0 0.0
      %1068 = vmatprep.subr.mxu0 0.0
      %1069 = vmatpush1.msra.mxu0 %v1033
      %1070 = vmatprep.subr.mxu0 0.0
      %1071 = vmatpush2.msra.mxu0 0.0
      %1072 = vmatprep.subr.mxu0 0.0
      %1073 = vmatpush2.msra.mxu0 0.0
      %1074 = vmatprep.subr.mxu0 0.0
      %1075 = vmatpush2.msra.mxu0 0.0
      %1076 = vmatprep.subr.mxu0 0.0
      %1077 = vmatpush2.msra.mxu0 0.0
      %1078 = vmatprep.subr.mxu0 0.0
      %1079 = vmatpush2.msra.mxu0 0.0
      %1080 = vmatprep.subr.mxu0 0.0
      %1081 = vmatpush2.msra.mxu0 0.0
      %1082 = vmatprep.subr.mxu0 0.0
      %1083 = vmatpush2.msra.mxu0 0.0
      %1084 = vmatprep.subr.mxu0 0.0
      %1085 = vmatpush2.msra.mxu0 0.0
      %1086 = vmatprep.subr.mxu0 0.0
      %1087 = vmatpush2.msra.mxu0 0.0
      %1088 = vmatprep.subr.mxu0 0.0
      %1089 = vmatpush2.msra.mxu0 0.0
      %1090 = vmatprep.subr.mxu0 0.0
      %1091 = vmatpush2.msra.mxu0 0.0
      %1092 = vmatprep.subr.mxu0 0.0
      %1093 = vmatpush2.msra.mxu0 0.0
      %1094 = vmatprep.subr.mxu0 0.0
      %1095 = vmatpush2.msra.mxu0 0.0
      %1096 = vmatprep.subr.mxu0 0.0
      %1097 = vmatpush2.msra.mxu0 0.0
      %1098 = vmatprep.subr.mxu0 0.0
      %1099 = vmatpush2.msra.mxu0 0.0
      %1100 = vmatprep.subr.mxu0 0.0
      %1101 = vmatpush2.msra.mxu0 0.0
      %1102 = vmatprep.mubr.f32.mxu0 0.0
      %1103 = vmatmul.mubr.f32.gmra.mxu0 %v1036
      %v1104 = vpop.f32.mrf.mxu0
      %v1105 = vadd.f32 0.0, %v1104
      %v1106 = vpop.f32.mrf.mxu0
      %1107 = vdwg.mxu0
      %1108 = vrot.lane.b32.xlu0 %v836, 64
      %v1109 = vpop.permute.xlu0 %1108
      %v1112 = vsel %vm842, %v1031, 0
      %1114 = vmatprep.subr.mxu0 0.0
      %1115 = vmatpush1.msra.mxu0 0.0
      %1116 = vmatprep.subr.mxu0 0.0
      %1117 = vmatpush1.msra.mxu0 0.0
      %1118 = vmatprep.subr.mxu0 0.0
      %1119 = vmatpush1.msra.mxu0 0.0
      %1120 = vmatprep.subr.mxu0 0.0
      %1121 = vmatpush1.msra.mxu0 0.0
      %1122 = vmatprep.subr.mxu0 0.0
      %1123 = vmatpush1.msra.mxu0 0.0
      %1124 = vmatprep.subr.mxu0 0.0
      %1125 = vmatpush1.msra.mxu0 0.0
      %1126 = vmatprep.subr.mxu0 0.0
      %1127 = vmatpush1.msra.mxu0 0.0
      %1128 = vmatprep.subr.mxu0 0.0
      %1129 = vmatpush1.msra.mxu0 0.0
      %1130 = vmatprep.subr.mxu0 0.0
      %1131 = vmatpush1.msra.mxu0 0.0
      %1132 = vmatprep.subr.mxu0 0.0
      %1133 = vmatpush1.msra.mxu0 0.0
      %1134 = vmatprep.subr.mxu0 0.0
      %1135 = vmatpush1.msra.mxu0 0.0
      %1136 = vmatprep.subr.mxu0 0.0
      %1137 = vmatpush1.msra.mxu0 0.0
      %1138 = vmatprep.subr.mxu0 0.0
      %1139 = vmatpush1.msra.mxu0 0.0
      %1140 = vmatprep.subr.mxu0 0.0
      %1141 = vmatpush1.msra.mxu0 0.0
      %1142 = vmatprep.subr.mxu0 0.0
      %1143 = vmatpush1.msra.mxu0 0.0
      %1144 = vmatprep.subr.mxu0 0.0
      %1145 = vmatpush1.msra.mxu0 %v1109
      %1146 = vmatprep.subr.mxu0 0.0
      %1147 = vmatpush2.msra.mxu0 0.0
      %1148 = vmatprep.subr.mxu0 0.0
      %1149 = vmatpush2.msra.mxu0 0.0
      %1150 = vmatprep.subr.mxu0 0.0
      %1151 = vmatpush2.msra.mxu0 0.0
      %1152 = vmatprep.subr.mxu0 0.0
      %1153 = vmatpush2.msra.mxu0 0.0
      %1154 = vmatprep.subr.mxu0 0.0
      %1155 = vmatpush2.msra.mxu0 0.0
      %1156 = vmatprep.subr.mxu0 0.0
      %1157 = vmatpush2.msra.mxu0 0.0
      %1158 = vmatprep.subr.mxu0 0.0
      %1159 = vmatpush2.msra.mxu0 0.0
      %1160 = vmatprep.subr.mxu0 0.0
      %1161 = vmatpush2.msra.mxu0 0.0
      %1162 = vmatprep.subr.mxu0 0.0
      %1163 = vmatpush2.msra.mxu0 0.0
      %1164 = vmatprep.subr.mxu0 0.0
      %1165 = vmatpush2.msra.mxu0 0.0
      %1166 = vmatprep.subr.mxu0 0.0
      %1167 = vmatpush2.msra.mxu0 0.0
      %1168 = vmatprep.subr.mxu0 0.0
      %1169 = vmatpush2.msra.mxu0 0.0
      %1170 = vmatprep.subr.mxu0 0.0
      %1171 = vmatpush2.msra.mxu0 0.0
      %1172 = vmatprep.subr.mxu0 0.0
      %1173 = vmatpush2.msra.mxu0 0.0
      %1174 = vmatprep.subr.mxu0 0.0
      %1175 = vmatpush2.msra.mxu0 0.0
      %1176 = vmatprep.subr.mxu0 0.0
      %1177 = vmatpush2.msra.mxu0 0.0
      %1178 = vmatprep.mubr.f32.mxu0 0.0
      %1179 = vmatmul.mubr.f32.gmra.mxu0 %v1112
      %v1180 = vpop.f32.mrf.mxu0
      %v1181 = vadd.f32 0.0, %v1180
      %v1182 = vpop.f32.mrf.mxu0
      %1183 = vdwg.mxu0
      %v1184 = vld [vmem:[%s647] sm:$0xff]
      %1185 = vrot.lane.b32.xlu0 %v831, 120
      %v1186 = vpop.permute.xlu0 %1185
      %1187 = vrot.lane.b32.xlu0 %v831, 88
      %v1188 = vpop.permute.xlu0 %1187
      %v1189 = vsel %vm842, %v1186, 0
      %v1191 = vsel %vm842, %v1188, 0
      %1193 = vmatprep.subr.mxu0 0.0
      %1194 = vmatpush1.xpose.msra.mxu0 0.0
      %1195 = vmatprep.subr.mxu0 0.0
      %1196 = vmatpush1.xpose.msra.mxu0 0.0
      %1197 = vmatprep.subr.mxu0 0.0
      %1198 = vmatpush1.xpose.msra.mxu0 0.0
      %1199 = vmatprep.subr.mxu0 0.0
      %1200 = vmatpush1.xpose.msra.mxu0 0.0
      %1201 = vmatprep.subr.mxu0 0.0
      %1202 = vmatpush1.xpose.msra.mxu0 0.0
      %1203 = vmatprep.subr.mxu0 0.0
      %1204 = vmatpush1.xpose.msra.mxu0 0.0
      %1205 = vmatprep.subr.mxu0 0.0
      %1206 = vmatpush1.xpose.msra.mxu0 0.0
      %1207 = vmatprep.subr.mxu0 0.0
      %1208 = vmatpush1.xpose.msra.mxu0 0.0
      %1209 = vmatprep.subr.mxu0 0.0
      %1210 = vmatpush1.xpose.msra.mxu0 0.0
      %1211 = vmatprep.subr.mxu0 0.0
      %1212 = vmatpush1.xpose.msra.mxu0 0.0
      %1213 = vmatprep.subr.mxu0 0.0
      %1214 = vmatpush1.xpose.msra.mxu0 0.0
      %1215 = vmatprep.subr.mxu0 0.0
      %1216 = vmatpush1.xpose.msra.mxu0 0.0
      %1217 = vmatprep.subr.mxu0 0.0
      %1218 = vmatpush1.xpose.msra.mxu0 0.0
      %1219 = vmatprep.subr.mxu0 0.0
      %1220 = vmatpush1.xpose.msra.mxu0 0.0
      %1221 = vmatprep.subr.mxu0 0.0
      %1222 = vmatpush1.xpose.msra.mxu0 0.0
      %1223 = vmatprep.subr.mxu0 0.0
      %1224 = vmatpush1.xpose.msra.mxu0 %v1191
      %1225 = vmatprep.subr.mxu0 0.0
      %1226 = vmatpush2.xpose.msra.mxu0 0.0
      %1227 = vmatprep.subr.mxu0 0.0
      %1228 = vmatpush2.xpose.msra.mxu0 0.0
      %1229 = vmatprep.subr.mxu0 0.0
      %1230 = vmatpush2.xpose.msra.mxu0 0.0
      %1231 = vmatprep.subr.mxu0 0.0
      %1232 = vmatpush2.xpose.msra.mxu0 0.0
      %1233 = vmatprep.subr.mxu0 0.0
      %1234 = vmatpush2.xpose.msra.mxu0 0.0
      %1235 = vmatprep.subr.mxu0 0.0
      %1236 = vmatpush2.xpose.msra.mxu0 0.0
      %1237 = vmatprep.subr.mxu0 0.0
      %1238 = vmatpush2.xpose.msra.mxu0 0.0
      %1239 = vmatprep.subr.mxu0 0.0
      %1240 = vmatpush2.xpose.msra.mxu0 0.0
      %1241 = vmatprep.subr.mxu0 0.0
      %1242 = vmatpush2.xpose.msra.mxu0 0.0
      %1243 = vmatprep.subr.mxu0 0.0
      %1244 = vmatpush2.xpose.msra.mxu0 0.0
      %1245 = vmatprep.subr.mxu0 0.0
      %1246 = vmatpush2.xpose.msra.mxu0 0.0
      %1247 = vmatprep.subr.mxu0 0.0
      %1248 = vmatpush2.xpose.msra.mxu0 0.0
      %1249 = vmatprep.subr.mxu0 0.0
      %1250 = vmatpush2.xpose.msra.mxu0 0.0
      %1251 = vmatprep.subr.mxu0 0.0
      %1252 = vmatpush2.xpose.msra.mxu0 0.0
      %1253 = vmatprep.subr.mxu0 0.0
      %1254 = vmatpush2.xpose.msra.mxu0 0.0
      %1255 = vmatprep.subr.mxu0 0.0
      %1256 = vmatpush2.xpose.msra.mxu0 0.0
      %1257 = vmatprep.mubr.f32.mxu0 0.0
      %1258 = vmatmul.mubr.f32.gmra.mxu0 %v1189
      %v1259 = vpop.f32.mrf.mxu0
      %v1260 = vadd.f32 0.0, %v1259
      %v1261 = vpop.f32.mrf.mxu0
      %1262 = vdwg.mxu0
      %1263 = vrot.lane.b32.xlu0 %v836, 120
      %v1264 = vpop.permute.xlu0 %1263
      %1265 = vrot.lane.b32.xlu0 %v836, 88
      %v1266 = vpop.permute.xlu0 %1265
      %v1267 = vsel %vm842, %v1264, 0
      %v1269 = vsel %vm842, %v1266, 0
      %1271 = vmatprep.subr.mxu0 0.0
      %1272 = vmatpush1.xpose.msra.mxu0 0.0
      %1273 = vmatprep.subr.mxu0 0.0
      %1274 = vmatpush1.xpose.msra.mxu0 0.0
      %1275 = vmatprep.subr.mxu0 0.0
      %1276 = vmatpush1.xpose.msra.mxu0 0.0
      %1277 = vmatprep.subr.mxu0 0.0
      %1278 = vmatpush1.xpose.msra.mxu0 0.0
      %1279 = vmatprep.subr.mxu0 0.0
      %1280 = vmatpush1.xpose.msra.mxu0 0.0
      %1281 = vmatprep.subr.mxu0 0.0
      %1282 = vmatpush1.xpose.msra.mxu0 0.0
      %1283 = vmatprep.subr.mxu0 0.0
      %1284 = vmatpush1.xpose.msra.mxu0 0.0
      %1285 = vmatprep.subr.mxu0 0.0
      %1286 = vmatpush1.xpose.msra.mxu0 0.0
      %1287 = vmatprep.subr.mxu0 0.0
      %1288 = vmatpush1.xpose.msra.mxu0 0.0
      %1289 = vmatprep.subr.mxu0 0.0
      %1290 = vmatpush1.xpose.msra.mxu0 0.0
      %1291 = vmatprep.subr.mxu0 0.0
      %1292 = vmatpush1.xpose.msra.mxu0 0.0
      %1293 = vmatprep.subr.mxu0 0.0
      %1294 = vmatpush1.xpose.msra.mxu0 0.0
      %1295 = vmatprep.subr.mxu0 0.0
      %1296 = vmatpush1.xpose.msra.mxu0 0.0
      %1297 = vmatprep.subr.mxu0 0.0
      %1298 = vmatpush1.xpose.msra.mxu0 0.0
      %1299 = vmatprep.subr.mxu0 0.0
      %1300 = vmatpush1.xpose.msra.mxu0 0.0
      %1301 = vmatprep.subr.mxu0 0.0
      %1302 = vmatpush1.xpose.msra.mxu0 %v1269
      %1303 = vmatprep.subr.mxu0 0.0
      %1304 = vmatpush2.xpose.msra.mxu0 0.0
      %1305 = vmatprep.subr.mxu0 0.0
      %1306 = vmatpush2.xpose.msra.mxu0 0.0
      %1307 = vmatprep.subr.mxu0 0.0
      %1308 = vmatpush2.xpose.msra.mxu0 0.0
      %1309 = vmatprep.subr.mxu0 0.0
      %1310 = vmatpush2.xpose.msra.mxu0 0.0
      %1311 = vmatprep.subr.mxu0 0.0
      %1312 = vmatpush2.xpose.msra.mxu0 0.0
      %1313 = vmatprep.subr.mxu0 0.0
      %1314 = vmatpush2.xpose.msra.mxu0 0.0
      %1315 = vmatprep.subr.mxu0 0.0
      %1316 = vmatpush2.xpose.msra.mxu0 0.0
      %1317 = vmatprep.subr.mxu0 0.0
      %1318 = vmatpush2.xpose.msra.mxu0 0.0
      %1319 = vmatprep.subr.mxu0 0.0
      %1320 = vmatpush2.xpose.msra.mxu0 0.0
      %1321 = vmatprep.subr.mxu0 0.0
      %1322 = vmatpush2.xpose.msra.mxu0 0.0
      %1323 = vmatprep.subr.mxu0 0.0
      %1324 = vmatpush2.xpose.msra.mxu0 0.0
      %1325 = vmatprep.subr.mxu0 0.0
      %1326 = vmatpush2.xpose.msra.mxu0 0.0
      %1327 = vmatprep.subr.mxu0 0.0
      %1328 = vmatpush2.xpose.msra.mxu0 0.0
      %1329 = vmatprep.subr.mxu0 0.0
      %1330 = vmatpush2.xpose.msra.mxu0 0.0
      %1331 = vmatprep.subr.mxu0 0.0
      %1332 = vmatpush2.xpose.msra.mxu0 0.0
      %1333 = vmatprep.subr.mxu0 0.0
      %1334 = vmatpush2.xpose.msra.mxu0 0.0
      %1335 = vmatprep.mubr.f32.mxu0 0.0
      %1336 = vmatmul.mubr.f32.gmra.mxu0 %v1267
      %v1337 = vpop.f32.mrf.mxu0
      %v1338 = vadd.f32 0.0, %v1337
      %v1339 = vpop.f32.mrf.mxu0
      %1340 = vdwg.mxu0
      %v1341 = vmul.f32 %v1260, 0.35355338
      %v1342 = vmul.f32 %v1338, 0.35355338
      %v1343 = vadd.f32 %v1341, %v1001
      %v1344 = vadd.f32 %v1342, %v1005
      %v1345 = vsel %vm842, %v1343, -inf
      %1346 = vmax.xlane.f32.xlu0 %v1345
      %v1347 = vpop.xlane.xlu0 %1346
      %v1348 = vsel %vm842, %v1344, -inf
      %1349 = vmax.xlane.f32.xlu0 %v1348
      %v1350 = vpop.xlane.xlu0 %1349
      %v1351 = vsub.f32 %v1343, %v1347
      %v1352 = vsub.f32 %v1344, %v1350
      %v1353 = vmul.f32 %v1351, 1.442695
      %v1354 = vpow.pop %v1353
      %v1355 = vmul.f32 %v1352, 1.442695
      %v1356 = vpow.pop %v1355
      %v1357 = vsel %vm842, %v1354, 0.0
      %1358 = vadd.xlane.f32.xlu0 %v1357
      %v1359 = vpop.xlane.xlu0 %1358
      %v1360 = vsel %vm842, %v1356, 0.0
      %1361 = vadd.xlane.f32.xlu0 %v1360
      %v1362 = vpop.xlane.xlu0 %1361
      %v1363 = vrcp.pop %v1359
      %v1364 = vrcp.pop %v1362
      %v1365 = vmul.f32 %v1354, %v1363
      %v1366 = vmul.f32 %v1356, %v1364
      %1367 = vrot.lane.b32.xlu0 %v831, 56
      %v1368 = vpop.permute.xlu0 %1367
      %v1371 = vsel %vm842, %v1365, 0
      %1373 = vmatprep.subr.mxu0 0.0
      %1374 = vmatpush1.msra.mxu0 0.0
      %1375 = vmatprep.subr.mxu0 0.0
      %1376 = vmatpush1.msra.mxu0 0.0
      %1377 = vmatprep.subr.mxu0 0.0
      %1378 = vmatpush1.msra.mxu0 0.0
      %1379 = vmatprep.subr.mxu0 0.0
      %1380 = vmatpush1.msra.mxu0 0.0
      %1381 = vmatprep.subr.mxu0 0.0
      %1382 = vmatpush1.msra.mxu0 0.0
      %1383 = vmatprep.subr.mxu0 0.0
      %1384 = vmatpush1.msra.mxu0 0.0
      %1385 = vmatprep.subr.mxu0 0.0
      %1386 = vmatpush1.msra.mxu0 0.0
      %1387 = vmatprep.subr.mxu0 0.0
      %1388 = vmatpush1.msra.mxu0 0.0
      %1389 = vmatprep.subr.mxu0 0.0
      %1390 = vmatpush1.msra.mxu0 0.0
      %1391 = vmatprep.subr.mxu0 0.0
      %1392 = vmatpush1.msra.mxu0 0.0
      %1393 = vmatprep.subr.mxu0 0.0
      %1394 = vmatpush1.msra.mxu0 0.0
      %1395 = vmatprep.subr.mxu0 0.0
      %1396 = vmatpush1.msra.mxu0 0.0
      %1397 = vmatprep.subr.mxu0 0.0
      %1398 = vmatpush1.msra.mxu0 0.0
      %1399 = vmatprep.subr.mxu0 0.0
      %1400 = vmatpush1.msra.mxu0 0.0
      %1401 = vmatprep.subr.mxu0 0.0
      %1402 = vmatpush1.msra.mxu0 0.0
      %1403 = vmatprep.subr.mxu0 0.0
      %1404 = vmatpush1.msra.mxu0 %v1368
      %1405 = vmatprep.subr.mxu0 0.0
      %1406 = vmatpush2.msra.mxu0 0.0
      %1407 = vmatprep.subr.mxu0 0.0
      %1408 = vmatpush2.msra.mxu0 0.0
      %1409 = vmatprep.subr.mxu0 0.0
      %1410 = vmatpush2.msra.mxu0 0.0
      %1411 = vmatprep.subr.mxu0 0.0
      %1412 = vmatpush2.msra.mxu0 0.0
      %1413 = vmatprep.subr.mxu0 0.0
      %1414 = vmatpush2.msra.mxu0 0.0
      %1415 = vmatprep.subr.mxu0 0.0
      %1416 = vmatpush2.msra.mxu0 0.0
      %1417 = vmatprep.subr.mxu0 0.0
      %1418 = vmatpush2.msra.mxu0 0.0
      %1419 = vmatprep.subr.mxu0 0.0
      %1420 = vmatpush2.msra.mxu0 0.0
      %1421 = vmatprep.subr.mxu0 0.0
      %1422 = vmatpush2.msra.mxu0 0.0
      %1423 = vmatprep.subr.mxu0 0.0
      %1424 = vmatpush2.msra.mxu0 0.0
      %1425 = vmatprep.subr.mxu0 0.0
      %1426 = vmatpush2.msra.mxu0 0.0
      %1427 = vmatprep.subr.mxu0 0.0
      %1428 = vmatpush2.msra.mxu0 0.0
      %1429 = vmatprep.subr.mxu0 0.0
      %1430 = vmatpush2.msra.mxu0 0.0
      %1431 = vmatprep.subr.mxu0 0.0
      %1432 = vmatpush2.msra.mxu0 0.0
      %1433 = vmatprep.subr.mxu0 0.0
      %1434 = vmatpush2.msra.mxu0 0.0
      %1435 = vmatprep.subr.mxu0 0.0
      %1436 = vmatpush2.msra.mxu0 0.0
      %1437 = vmatprep.mubr.f32.mxu0 0.0
      %1438 = vmatmul.mubr.f32.gmra.mxu0 %v1371
      %v1439 = vpop.f32.mrf.mxu0
      %v1440 = vadd.f32 0.0, %v1439
      %v1441 = vpop.f32.mrf.mxu0
      %1442 = vdwg.mxu0
      %1443 = vrot.lane.b32.xlu0 %v836, 56
      %v1444 = vpop.permute.xlu0 %1443
      %v1447 = vsel %vm842, %v1366, 0
      %1449 = vmatprep.subr.mxu0 0.0
      %1450 = vmatpush1.msra.mxu0 0.0
      %1451 = vmatprep.subr.mxu0 0.0
      %1452 = vmatpush1.msra.mxu0 0.0
      %1453 = vmatprep.subr.mxu0 0.0
      %1454 = vmatpush1.msra.mxu0 0.0
      %1455 = vmatprep.subr.mxu0 0.0
      %1456 = vmatpush1.msra.mxu0 0.0
      %1457 = vmatprep.subr.mxu0 0.0
      %1458 = vmatpush1.msra.mxu0 0.0
      %1459 = vmatprep.subr.mxu0 0.0
      %1460 = vmatpush1.msra.mxu0 0.0
      %1461 = vmatprep.subr.mxu0 0.0
      %1462 = vmatpush1.msra.mxu0 0.0
      %1463 = vmatprep.subr.mxu0 0.0
      %1464 = vmatpush1.msra.mxu0 0.0
      %1465 = vmatprep.subr.mxu0 0.0
      %1466 = vmatpush1.msra.mxu0 0.0
      %1467 = vmatprep.subr.mxu0 0.0
      %1468 = vmatpush1.msra.mxu0 0.0
      %1469 = vmatprep.subr.mxu0 0.0
      %1470 = vmatpush1.msra.mxu0 0.0
      %1471 = vmatprep.subr.mxu0 0.0
      %1472 = vmatpush1.msra.mxu0 0.0
      %1473 = vmatprep.subr.mxu0 0.0
      %1474 = vmatpush1.msra.mxu0 0.0
      %1475 = vmatprep.subr.mxu0 0.0
      %1476 = vmatpush1.msra.mxu0 0.0
      %1477 = vmatprep.subr.mxu0 0.0
      %1478 = vmatpush1.msra.mxu0 0.0
      %1479 = vmatprep.subr.mxu0 0.0
      %1480 = vmatpush1.msra.mxu0 %v1444
      %1481 = vmatprep.subr.mxu0 0.0
      %1482 = vmatpush2.msra.mxu0 0.0
      %1483 = vmatprep.subr.mxu0 0.0
      %1484 = vmatpush2.msra.mxu0 0.0
      %1485 = vmatprep.subr.mxu0 0.0
      %1486 = vmatpush2.msra.mxu0 0.0
      %1487 = vmatprep.subr.mxu0 0.0
      %1488 = vmatpush2.msra.mxu0 0.0
      %1489 = vmatprep.subr.mxu0 0.0
      %1490 = vmatpush2.msra.mxu0 0.0
      %1491 = vmatprep.subr.mxu0 0.0
      %1492 = vmatpush2.msra.mxu0 0.0
      %1493 = vmatprep.subr.mxu0 0.0
      %1494 = vmatpush2.msra.mxu0 0.0
      %1495 = vmatprep.subr.mxu0 0.0
      %1496 = vmatpush2.msra.mxu0 0.0
      %1497 = vmatprep.subr.mxu0 0.0
      %1498 = vmatpush2.msra.mxu0 0.0
      %1499 = vmatprep.subr.mxu0 0.0
      %1500 = vmatpush2.msra.mxu0 0.0
      %1501 = vmatprep.subr.mxu0 0.0
      %1502 = vmatpush2.msra.mxu0 0.0
      %1503 = vmatprep.subr.mxu0 0.0
      %1504 = vmatpush2.msra.mxu0 0.0
      %1505 = vmatprep.subr.mxu0 0.0
      %1506 = vmatpush2.msra.mxu0 0.0
      %1507 = vmatprep.subr.mxu0 0.0
      %1508 = vmatpush2.msra.mxu0 0.0
      %1509 = vmatprep.subr.mxu0 0.0
      %1510 = vmatpush2.msra.mxu0 0.0
      %1511 = vmatprep.subr.mxu0 0.0
      %1512 = vmatpush2.msra.mxu0 0.0
      %1513 = vmatprep.mubr.f32.mxu0 0.0
      %1514 = vmatmul.mubr.f32.gmra.mxu0 %v1447
      %v1515 = vpop.f32.mrf.mxu0
      %v1516 = vadd.f32 0.0, %v1515
      %v1517 = vpop.f32.mrf.mxu0
      %1518 = vdwg.mxu0
      %s1519 = scalar_lea.vmem %s647, 8
      %v1520 = vld [vmem:[%s1519] sm:$0xff]
      %v1522 = vsel %vm842, %v1440, 0
      %v1525 = vsel %vm842, %v1516, 0
      %1527 = vmatprep.subr.mxu0 0.0
      %1528 = vmatpush1.msra.mxu0 0.0
      %1529 = vmatprep.subr.mxu0 0.0
      %1530 = vmatpush1.msra.mxu0 0.0
      %1531 = vmatprep.subr.mxu0 0.0
      %1532 = vmatpush1.msra.mxu0 0.0
      %1533 = vmatprep.subr.mxu0 0.0
      %1534 = vmatpush1.msra.mxu0 0.0
      %1535 = vmatprep.subr.mxu0 0.0
      %1536 = vmatpush1.msra.mxu0 0.0
      %1537 = vmatprep.subr.mxu0 0.0
      %1538 = vmatpush1.msra.mxu0 0.0
      %1539 = vmatprep.subr.mxu0 0.0
      %1540 = vmatpush1.msra.mxu0 0.0
      %1541 = vmatprep.subr.mxu0 0.0
      %1542 = vmatpush1.msra.mxu0 0.0
      %1543 = vmatprep.subr.mxu0 0.0
      %1544 = vmatpush1.msra.mxu0 0.0
      %1545 = vmatprep.subr.mxu0 0.0
      %1546 = vmatpush1.msra.mxu0 0.0
      %1547 = vmatprep.subr.mxu0 0.0
      %1548 = vmatpush1.msra.mxu0 0.0
      %1549 = vmatprep.subr.mxu0 0.0
      %1550 = vmatpush1.msra.mxu0 0.0
      %1551 = vmatprep.subr.mxu0 0.0
      %1552 = vmatpush1.msra.mxu0 0.0
      %1553 = vmatprep.subr.mxu0 0.0
      %1554 = vmatpush1.msra.mxu0 0.0
      %1555 = vmatprep.subr.mxu0 0.0
      %1556 = vmatpush1.msra.mxu0 0.0
      %1557 = vmatprep.subr.mxu0 0.0
      %1558 = vmatpush1.msra.mxu0 %v1520
      %1559 = vmatprep.subr.mxu0 0.0
      %1560 = vmatpush2.msra.mxu0 0.0
      %1561 = vmatprep.subr.mxu0 0.0
      %1562 = vmatpush2.msra.mxu0 0.0
      %1563 = vmatprep.subr.mxu0 0.0
      %1564 = vmatpush2.msra.mxu0 0.0
      %1565 = vmatprep.subr.mxu0 0.0
      %1566 = vmatpush2.msra.mxu0 0.0
      %1567 = vmatprep.subr.mxu0 0.0
      %1568 = vmatpush2.msra.mxu0 0.0
      %1569 = vmatprep.subr.mxu0 0.0
      %1570 = vmatpush2.msra.mxu0 0.0
      %1571 = vmatprep.subr.mxu0 0.0
      %1572 = vmatpush2.msra.mxu0 0.0
      %1573 = vmatprep.subr.mxu0 0.0
      %1574 = vmatpush2.msra.mxu0 0.0
      %1575 = vmatprep.subr.mxu0 0.0
      %1576 = vmatpush2.msra.mxu0 0.0
      %1577 = vmatprep.subr.mxu0 0.0
      %1578 = vmatpush2.msra.mxu0 0.0
      %1579 = vmatprep.subr.mxu0 0.0
      %1580 = vmatpush2.msra.mxu0 0.0
      %1581 = vmatprep.subr.mxu0 0.0
      %1582 = vmatpush2.msra.mxu0 0.0
      %1583 = vmatprep.subr.mxu0 0.0
      %1584 = vmatpush2.msra.mxu0 0.0
      %1585 = vmatprep.subr.mxu0 0.0
      %1586 = vmatpush2.msra.mxu0 0.0
      %1587 = vmatprep.subr.mxu0 0.0
      %1588 = vmatpush2.msra.mxu0 0.0
      %1589 = vmatprep.subr.mxu0 0.0
      %1590 = vmatpush2.msra.mxu0 0.0
      %1591 = vmatprep.mubr.f32.mxu0 0.0
      %1592 = vmatmul.mubr.f32.gmra.mxu0 %v1522
      %v1593 = vpop.f32.mrf.mxu0
      %v1594 = vadd.f32 0.0, %v1593
      %v1595 = vpop.f32.mrf.mxu0
      %1596 = vmatprep.mubr.f32.mxu0 0.0
      %1597 = vmatmul.mubr.f32.gmra.mxu0 %v1525
      %v1598 = vpop.f32.mrf.mxu0
      %v1599 = vadd.f32 0.0, %v1598
      %v1600 = vpop.f32.mrf.mxu0
      %1601 = vdwg.mxu0
      %v1603 = vsel %vm842, %v1105, 0
      %v1606 = vsel %vm842, %v1181, 0
      %1608 = vmatprep.subr.mxu0 0.0
      %1609 = vmatpush1.msra.mxu0 0.0
      %1610 = vmatprep.subr.mxu0 0.0
      %1611 = vmatpush1.msra.mxu0 0.0
      %1612 = vmatprep.subr.mxu0 0.0
      %1613 = vmatpush1.msra.mxu0 0.0
      %1614 = vmatprep.subr.mxu0 0.0
      %1615 = vmatpush1.msra.mxu0 0.0
      %1616 = vmatprep.subr.mxu0 0.0
      %1617 = vmatpush1.msra.mxu0 0.0
      %1618 = vmatprep.subr.mxu0 0.0
      %1619 = vmatpush1.msra.mxu0 0.0
      %1620 = vmatprep.subr.mxu0 0.0
      %1621 = vmatpush1.msra.mxu0 0.0
      %1622 = vmatprep.subr.mxu0 0.0
      %1623 = vmatpush1.msra.mxu0 0.0
      %1624 = vmatprep.subr.mxu0 0.0
      %1625 = vmatpush1.msra.mxu0 0.0
      %1626 = vmatprep.subr.mxu0 0.0
      %1627 = vmatpush1.msra.mxu0 0.0
      %1628 = vmatprep.subr.mxu0 0.0
      %1629 = vmatpush1.msra.mxu0 0.0
      %1630 = vmatprep.subr.mxu0 0.0
      %1631 = vmatpush1.msra.mxu0 0.0
      %1632 = vmatprep.subr.mxu0 0.0
      %1633 = vmatpush1.msra.mxu0 0.0
      %1634 = vmatprep.subr.mxu0 0.0
      %1635 = vmatpush1.msra.mxu0 0.0
      %1636 = vmatprep.subr.mxu0 0.0
      %1637 = vmatpush1.msra.mxu0 0.0
      %1638 = vmatprep.subr.mxu0 0.0
      %1639 = vmatpush1.msra.mxu0 %v1184
      %1640 = vmatprep.subr.mxu0 0.0
      %1641 = vmatpush2.msra.mxu0 0.0
      %1642 = vmatprep.subr.mxu0 0.0
      %1643 = vmatpush2.msra.mxu0 0.0
      %1644 = vmatprep.subr.mxu0 0.0
      %1645 = vmatpush2.msra.mxu0 0.0
      %1646 = vmatprep.subr.mxu0 0.0
      %1647 = vmatpush2.msra.mxu0 0.0
      %1648 = vmatprep.subr.mxu0 0.0
      %1649 = vmatpush2.msra.mxu0 0.0
      %1650 = vmatprep.subr.mxu0 0.0
      %1651 = vmatpush2.msra.mxu0 0.0
      %1652 = vmatprep.subr.mxu0 0.0
      %1653 = vmatpush2.msra.mxu0 0.0
      %1654 = vmatprep.subr.mxu0 0.0
      %1655 = vmatpush2.msra.mxu0 0.0
      %1656 = vmatprep.subr.mxu0 0.0
      %1657 = vmatpush2.msra.mxu0 0.0
      %1658 = vmatprep.subr.mxu0 0.0
      %1659 = vmatpush2.msra.mxu0 0.0
      %1660 = vmatprep.subr.mxu0 0.0
      %1661 = vmatpush2.msra.mxu0 0.0
      %1662 = vmatprep.subr.mxu0 0.0
      %1663 = vmatpush2.msra.mxu0 0.0
      %1664 = vmatprep.subr.mxu0 0.0
      %1665 = vmatpush2.msra.mxu0 0.0
      %1666 = vmatprep.subr.mxu0 0.0
      %1667 = vmatpush2.msra.mxu0 0.0
      %1668 = vmatprep.subr.mxu0 0.0
      %1669 = vmatpush2.msra.mxu0 0.0
      %1670 = vmatprep.subr.mxu0 0.0
      %1671 = vmatpush2.msra.mxu0 0.0
      %1672 = vmatprep.mubr.f32.mxu0 0.0
      %1673 = vmatmul.mubr.f32.gmra.mxu0 %v1603
      %v1674 = vpop.f32.mrf.mxu0
      %v1675 = vadd.f32 %v1594, %v1674
      %v1676 = vpop.f32.mrf.mxu0
      %1677 = vmatprep.mubr.f32.mxu0 0.0
      %1678 = vmatmul.mubr.f32.gmra.mxu0 %v1606
      %v1679 = vpop.f32.mrf.mxu0
      %v1680 = vadd.f32 %v1599, %v1679
      %v1681 = vpop.f32.mrf.mxu0
      %1682 = vdwg.mxu0
      %1683 = vrot.lane.b32.xlu0 %v831, 112
      %v1684 = vpop.permute.xlu0 %1683
      %1685 = vrot.lane.b32.xlu0 %v831, 80
      %v1686 = vpop.permute.xlu0 %1685
      %v1687 = vsel %vm842, %v1684, 0
      %v1689 = vsel %vm842, %v1686, 0
      %1691 = vmatprep.subr.mxu0 0.0
      %1692 = vmatpush1.xpose.msra.mxu0 0.0
      %1693 = vmatprep.subr.mxu0 0.0
      %1694 = vmatpush1.xpose.msra.mxu0 0.0
      %1695 = vmatprep.subr.mxu0 0.0
      %1696 = vmatpush1.xpose.msra.mxu0 0.0
      %1697 = vmatprep.subr.mxu0 0.0
      %1698 = vmatpush1.xpose.msra.mxu0 0.0
      %1699 = vmatprep.subr.mxu0 0.0
      %1700 = vmatpush1.xpose.msra.mxu0 0.0
      %1701 = vmatprep.subr.mxu0 0.0
      %1702 = vmatpush1.xpose.msra.mxu0 0.0
      %1703 = vmatprep.subr.mxu0 0.0
      %1704 = vmatpush1.xpose.msra.mxu0 0.0
      %1705 = vmatprep.subr.mxu0 0.0
      %1706 = vmatpush1.xpose.msra.mxu0 0.0
      %1707 = vmatprep.subr.mxu0 0.0
      %1708 = vmatpush1.xpose.msra.mxu0 0.0
      %1709 = vmatprep.subr.mxu0 0.0
      %1710 = vmatpush1.xpose.msra.mxu0 0.0
      %1711 = vmatprep.subr.mxu0 0.0
      %1712 = vmatpush1.xpose.msra.mxu0 0.0
      %1713 = vmatprep.subr.mxu0 0.0
      %1714 = vmatpush1.xpose.msra.mxu0 0.0
      %1715 = vmatprep.subr.mxu0 0.0
      %1716 = vmatpush1.xpose.msra.mxu0 0.0
      %1717 = vmatprep.subr.mxu0 0.0
      %1718 = vmatpush1.xpose.msra.mxu0 0.0
      %1719 = vmatprep.subr.mxu0 0.0
      %1720 = vmatpush1.xpose.msra.mxu0 0.0
      %1721 = vmatprep.subr.mxu0 0.0
      %1722 = vmatpush1.xpose.msra.mxu0 %v1689
      %1723 = vmatprep.subr.mxu0 0.0
      %1724 = vmatpush2.xpose.msra.mxu0 0.0
      %1725 = vmatprep.subr.mxu0 0.0
      %1726 = vmatpush2.xpose.msra.mxu0 0.0
      %1727 = vmatprep.subr.mxu0 0.0
      %1728 = vmatpush2.xpose.msra.mxu0 0.0
      %1729 = vmatprep.subr.mxu0 0.0
      %1730 = vmatpush2.xpose.msra.mxu0 0.0
      %1731 = vmatprep.subr.mxu0 0.0
      %1732 = vmatpush2.xpose.msra.mxu0 0.0
      %1733 = vmatprep.subr.mxu0 0.0
      %1734 = vmatpush2.xpose.msra.mxu0 0.0
      %1735 = vmatprep.subr.mxu0 0.0
      %1736 = vmatpush2.xpose.msra.mxu0 0.0
      %1737 = vmatprep.subr.mxu0 0.0
      %1738 = vmatpush2.xpose.msra.mxu0 0.0
      %1739 = vmatprep.subr.mxu0 0.0
      %1740 = vmatpush2.xpose.msra.mxu0 0.0
      %1741 = vmatprep.subr.mxu0 0.0
      %1742 = vmatpush2.xpose.msra.mxu0 0.0
      %1743 = vmatprep.subr.mxu0 0.0
      %1744 = vmatpush2.xpose.msra.mxu0 0.0
      %1745 = vmatprep.subr.mxu0 0.0
      %1746 = vmatpush2.xpose.msra.mxu0 0.0
      %1747 = vmatprep.subr.mxu0 0.0
      %1748 = vmatpush2.xpose.msra.mxu0 0.0
      %1749 = vmatprep.subr.mxu0 0.0
      %1750 = vmatpush2.xpose.msra.mxu0 0.0
      %1751 = vmatprep.subr.mxu0 0.0
      %1752 = vmatpush2.xpose.msra.mxu0 0.0
      %1753 = vmatprep.subr.mxu0 0.0
      %1754 = vmatpush2.xpose.msra.mxu0 0.0
      %1755 = vmatprep.mubr.f32.mxu0 0.0
      %1756 = vmatmul.mubr.f32.gmra.mxu0 %v1687
      %v1757 = vpop.f32.mrf.mxu0
      %v1758 = vadd.f32 0.0, %v1757
      %v1759 = vpop.f32.mrf.mxu0
      %1760 = vdwg.mxu0
      %1761 = vrot.lane.b32.xlu0 %v836, 112
      %v1762 = vpop.permute.xlu0 %1761
      %1763 = vrot.lane.b32.xlu0 %v836, 80
      %v1764 = vpop.permute.xlu0 %1763
      %v1765 = vsel %vm842, %v1762, 0
      %v1767 = vsel %vm842, %v1764, 0
      %1769 = vmatprep.subr.mxu0 0.0
      %1770 = vmatpush1.xpose.msra.mxu0 0.0
      %1771 = vmatprep.subr.mxu0 0.0
      %1772 = vmatpush1.xpose.msra.mxu0 0.0
      %1773 = vmatprep.subr.mxu0 0.0
      %1774 = vmatpush1.xpose.msra.mxu0 0.0
      %1775 = vmatprep.subr.mxu0 0.0
      %1776 = vmatpush1.xpose.msra.mxu0 0.0
      %1777 = vmatprep.subr.mxu0 0.0
      %1778 = vmatpush1.xpose.msra.mxu0 0.0
      %1779 = vmatprep.subr.mxu0 0.0
      %1780 = vmatpush1.xpose.msra.mxu0 0.0
      %1781 = vmatprep.subr.mxu0 0.0
      %1782 = vmatpush1.xpose.msra.mxu0 0.0
      %1783 = vmatprep.subr.mxu0 0.0
      %1784 = vmatpush1.xpose.msra.mxu0 0.0
      %1785 = vmatprep.subr.mxu0 0.0
      %1786 = vmatpush1.xpose.msra.mxu0 0.0
      %1787 = vmatprep.subr.mxu0 0.0
      %1788 = vmatpush1.xpose.msra.mxu0 0.0
      %1789 = vmatprep.subr.mxu0 0.0
      %1790 = vmatpush1.xpose.msra.mxu0 0.0
      %1791 = vmatprep.subr.mxu0 0.0
      %1792 = vmatpush1.xpose.msra.mxu0 0.0
      %1793 = vmatprep.subr.mxu0 0.0
      %1794 = vmatpush1.xpose.msra.mxu0 0.0
      %1795 = vmatprep.subr.mxu0 0.0
      %1796 = vmatpush1.xpose.msra.mxu0 0.0
      %1797 = vmatprep.subr.mxu0 0.0
      %1798 = vmatpush1.xpose.msra.mxu0 0.0
      %1799 = vmatprep.subr.mxu0 0.0
      %1800 = vmatpush1.xpose.msra.mxu0 %v1767
      %1801 = vmatprep.subr.mxu0 0.0
      %1802 = vmatpush2.xpose.msra.mxu0 0.0
      %1803 = vmatprep.subr.mxu0 0.0
      %1804 = vmatpush2.xpose.msra.mxu0 0.0
      %1805 = vmatprep.subr.mxu0 0.0
      %1806 = vmatpush2.xpose.msra.mxu0 0.0
      %1807 = vmatprep.subr.mxu0 0.0
      %1808 = vmatpush2.xpose.msra.mxu0 0.0
      %1809 = vmatprep.subr.mxu0 0.0
      %1810 = vmatpush2.xpose.msra.mxu0 0.0
      %1811 = vmatprep.subr.mxu0 0.0
      %1812 = vmatpush2.xpose.msra.mxu0 0.0
      %1813 = vmatprep.subr.mxu0 0.0
      %1814 = vmatpush2.xpose.msra.mxu0 0.0
      %1815 = vmatprep.subr.mxu0 0.0
      %1816 = vmatpush2.xpose.msra.mxu0 0.0
      %1817 = vmatprep.subr.mxu0 0.0
      %1818 = vmatpush2.xpose.msra.mxu0 0.0
      %1819 = vmatprep.subr.mxu0 0.0
      %1820 = vmatpush2.xpose.msra.mxu0 0.0
      %1821 = vmatprep.subr.mxu0 0.0
      %1822 = vmatpush2.xpose.msra.mxu0 0.0
      %1823 = vmatprep.subr.mxu0 0.0
      %1824 = vmatpush2.xpose.msra.mxu0 0.0
      %1825 = vmatprep.subr.mxu0 0.0
      %1826 = vmatpush2.xpose.msra.mxu0 0.0
      %1827 = vmatprep.subr.mxu0 0.0
      %1828 = vmatpush2.xpose.msra.mxu0 0.0
      %1829 = vmatprep.subr.mxu0 0.0
      %1830 = vmatpush2.xpose.msra.mxu0 0.0
      %1831 = vmatprep.subr.mxu0 0.0
      %1832 = vmatpush2.xpose.msra.mxu0 0.0
      %1833 = vmatprep.mubr.f32.mxu0 0.0
      %1834 = vmatmul.mubr.f32.gmra.mxu0 %v1765
      %v1835 = vpop.f32.mrf.mxu0
      %v1836 = vadd.f32 0.0, %v1835
      %v1837 = vpop.f32.mrf.mxu0
      %1838 = vdwg.mxu0
      %v1839 = vmul.f32 %v1758, 0.35355338
      %v1840 = vmul.f32 %v1836, 0.35355338
      %v1841 = vadd.f32 %v1839, %v1001
      %v1842 = vadd.f32 %v1840, %v1005
      %v1843 = vsel %vm842, %v1841, -inf
      %1844 = vmax.xlane.f32.xlu0 %v1843
      %v1845 = vpop.xlane.xlu0 %1844
      %v1846 = vsel %vm842, %v1842, -inf
      %1847 = vmax.xlane.f32.xlu0 %v1846
      %v1848 = vpop.xlane.xlu0 %1847
      %v1849 = vsub.f32 %v1841, %v1845
      %v1850 = vsub.f32 %v1842, %v1848
      %v1851 = vmul.f32 %v1849, 1.442695
      %v1852 = vpow.pop %v1851
      %v1853 = vmul.f32 %v1850, 1.442695
      %v1854 = vpow.pop %v1853
      %v1855 = vsel %vm842, %v1852, 0.0
      %1856 = vadd.xlane.f32.xlu0 %v1855
      %v1857 = vpop.xlane.xlu0 %1856
      %v1858 = vsel %vm842, %v1854, 0.0
      %1859 = vadd.xlane.f32.xlu0 %v1858
      %v1860 = vpop.xlane.xlu0 %1859
      %v1861 = vrcp.pop %v1857
      %v1862 = vrcp.pop %v1860
      %v1863 = vmul.f32 %v1852, %v1861
      %v1864 = vmul.f32 %v1854, %v1862
      %1865 = vrot.lane.b32.xlu0 %v831, 48
      %v1866 = vpop.permute.xlu0 %1865
      %v1869 = vsel %vm842, %v1863, 0
      %1871 = vmatprep.subr.mxu0 0.0
      %1872 = vmatpush1.msra.mxu0 0.0
      %1873 = vmatprep.subr.mxu0 0.0
      %1874 = vmatpush1.msra.mxu0 0.0
      %1875 = vmatprep.subr.mxu0 0.0
      %1876 = vmatpush1.msra.mxu0 0.0
      %1877 = vmatprep.subr.mxu0 0.0
      %1878 = vmatpush1.msra.mxu0 0.0
      %1879 = vmatprep.subr.mxu0 0.0
      %1880 = vmatpush1.msra.mxu0 0.0
      %1881 = vmatprep.subr.mxu0 0.0
      %1882 = vmatpush1.msra.mxu0 0.0
      %1883 = vmatprep.subr.mxu0 0.0
      %1884 = vmatpush1.msra.mxu0 0.0
      %1885 = vmatprep.subr.mxu0 0.0
      %1886 = vmatpush1.msra.mxu0 0.0
      %1887 = vmatprep.subr.mxu0 0.0
      %1888 = vmatpush1.msra.mxu0 0.0
      %1889 = vmatprep.subr.mxu0 0.0
      %1890 = vmatpush1.msra.mxu0 0.0
      %1891 = vmatprep.subr.mxu0 0.0
      %1892 = vmatpush1.msra.mxu0 0.0
      %1893 = vmatprep.subr.mxu0 0.0
      %1894 = vmatpush1.msra.mxu0 0.0
      %1895 = vmatprep.subr.mxu0 0.0
      %1896 = vmatpush1.msra.mxu0 0.0
      %1897 = vmatprep.subr.mxu0 0.0
      %1898 = vmatpush1.msra.mxu0 0.0
      %1899 = vmatprep.subr.mxu0 0.0
      %1900 = vmatpush1.msra.mxu0 0.0
      %1901 = vmatprep.subr.mxu0 0.0
      %1902 = vmatpush1.msra.mxu0 %v1866
      %1903 = vmatprep.subr.mxu0 0.0
      %1904 = vmatpush2.msra.mxu0 0.0
      %1905 = vmatprep.subr.mxu0 0.0
      %1906 = vmatpush2.msra.mxu0 0.0
      %1907 = vmatprep.subr.mxu0 0.0
      %1908 = vmatpush2.msra.mxu0 0.0
      %1909 = vmatprep.subr.mxu0 0.0
      %1910 = vmatpush2.msra.mxu0 0.0
      %1911 = vmatprep.subr.mxu0 0.0
      %1912 = vmatpush2.msra.mxu0 0.0
      %1913 = vmatprep.subr.mxu0 0.0
      %1914 = vmatpush2.msra.mxu0 0.0
      %1915 = vmatprep.subr.mxu0 0.0
      %1916 = vmatpush2.msra.mxu0 0.0
      %1917 = vmatprep.subr.mxu0 0.0
      %1918 = vmatpush2.msra.mxu0 0.0
      %1919 = vmatprep.subr.mxu0 0.0
      %1920 = vmatpush2.msra.mxu0 0.0
      %1921 = vmatprep.subr.mxu0 0.0
      %1922 = vmatpush2.msra.mxu0 0.0
      %1923 = vmatprep.subr.mxu0 0.0
      %1924 = vmatpush2.msra.mxu0 0.0
      %1925 = vmatprep.subr.mxu0 0.0
      %1926 = vmatpush2.msra.mxu0 0.0
      %1927 = vmatprep.subr.mxu0 0.0
      %1928 = vmatpush2.msra.mxu0 0.0
      %1929 = vmatprep.subr.mxu0 0.0
      %1930 = vmatpush2.msra.mxu0 0.0
      %1931 = vmatprep.subr.mxu0 0.0
      %1932 = vmatpush2.msra.mxu0 0.0
      %1933 = vmatprep.subr.mxu0 0.0
      %1934 = vmatpush2.msra.mxu0 0.0
      %1935 = vmatprep.mubr.f32.mxu0 0.0
      %1936 = vmatmul.mubr.f32.gmra.mxu0 %v1869
      %v1937 = vpop.f32.mrf.mxu0
      %v1938 = vadd.f32 0.0, %v1937
      %v1939 = vpop.f32.mrf.mxu0
      %1940 = vdwg.mxu0
      %1941 = vrot.lane.b32.xlu0 %v836, 48
      %v1942 = vpop.permute.xlu0 %1941
      %v1945 = vsel %vm842, %v1864, 0
      %1947 = vmatprep.subr.mxu0 0.0
      %1948 = vmatpush1.msra.mxu0 0.0
      %1949 = vmatprep.subr.mxu0 0.0
      %1950 = vmatpush1.msra.mxu0 0.0
      %1951 = vmatprep.subr.mxu0 0.0
      %1952 = vmatpush1.msra.mxu0 0.0
      %1953 = vmatprep.subr.mxu0 0.0
      %1954 = vmatpush1.msra.mxu0 0.0
      %1955 = vmatprep.subr.mxu0 0.0
      %1956 = vmatpush1.msra.mxu0 0.0
      %1957 = vmatprep.subr.mxu0 0.0
      %1958 = vmatpush1.msra.mxu0 0.0
      %1959 = vmatprep.subr.mxu0 0.0
      %1960 = vmatpush1.msra.mxu0 0.0
      %1961 = vmatprep.subr.mxu0 0.0
      %1962 = vmatpush1.msra.mxu0 0.0
      %1963 = vmatprep.subr.mxu0 0.0
      %1964 = vmatpush1.msra.mxu0 0.0
      %1965 = vmatprep.subr.mxu0 0.0
      %1966 = vmatpush1.msra.mxu0 0.0
      %1967 = vmatprep.subr.mxu0 0.0
      %1968 = vmatpush1.msra.mxu0 0.0
      %1969 = vmatprep.subr.mxu0 0.0
      %1970 = vmatpush1.msra.mxu0 0.0
      %1971 = vmatprep.subr.mxu0 0.0
      %1972 = vmatpush1.msra.mxu0 0.0
      %1973 = vmatprep.subr.mxu0 0.0
      %1974 = vmatpush1.msra.mxu0 0.0
      %1975 = vmatprep.subr.mxu0 0.0
      %1976 = vmatpush1.msra.mxu0 0.0
      %1977 = vmatprep.subr.mxu0 0.0
      %1978 = vmatpush1.msra.mxu0 %v1942
      %1979 = vmatprep.subr.mxu0 0.0
      %1980 = vmatpush2.msra.mxu0 0.0
      %1981 = vmatprep.subr.mxu0 0.0
      %1982 = vmatpush2.msra.mxu0 0.0
      %1983 = vmatprep.subr.mxu0 0.0
      %1984 = vmatpush2.msra.mxu0 0.0
      %1985 = vmatprep.subr.mxu0 0.0
      %1986 = vmatpush2.msra.mxu0 0.0
      %1987 = vmatprep.subr.mxu0 0.0
      %1988 = vmatpush2.msra.mxu0 0.0
      %1989 = vmatprep.subr.mxu0 0.0
      %1990 = vmatpush2.msra.mxu0 0.0
      %1991 = vmatprep.subr.mxu0 0.0
      %1992 = vmatpush2.msra.mxu0 0.0
      %1993 = vmatprep.subr.mxu0 0.0
      %1994 = vmatpush2.msra.mxu0 0.0
      %1995 = vmatprep.subr.mxu0 0.0
      %1996 = vmatpush2.msra.mxu0 0.0
      %1997 = vmatprep.subr.mxu0 0.0
      %1998 = vmatpush2.msra.mxu0 0.0
      %1999 = vmatprep.subr.mxu0 0.0
      %2000 = vmatpush2.msra.mxu0 0.0
      %2001 = vmatprep.subr.mxu0 0.0
      %2002 = vmatpush2.msra.mxu0 0.0
      %2003 = vmatprep.subr.mxu0 0.0
      %2004 = vmatpush2.msra.mxu0 0.0
      %2005 = vmatprep.subr.mxu0 0.0
      %2006 = vmatpush2.msra.mxu0 0.0
      %2007 = vmatprep.subr.mxu0 0.0
      %2008 = vmatpush2.msra.mxu0 0.0
      %2009 = vmatprep.subr.mxu0 0.0
      %2010 = vmatpush2.msra.mxu0 0.0
      %2011 = vmatprep.mubr.f32.mxu0 0.0
      %2012 = vmatmul.mubr.f32.gmra.mxu0 %v1945
      %v2013 = vpop.f32.mrf.mxu0
      %v2014 = vadd.f32 0.0, %v2013
      %v2015 = vpop.f32.mrf.mxu0
      %2016 = vdwg.mxu0
      %s2017 = scalar_lea.vmem %s647, 16
      %v2018 = vld [vmem:[%s2017] sm:$0xff]
      %v2020 = vsel %vm842, %v1938, 0
      %v2023 = vsel %vm842, %v2014, 0
      %2025 = vmatprep.subr.mxu0 0.0
      %2026 = vmatpush1.msra.mxu0 0.0
      %2027 = vmatprep.subr.mxu0 0.0
      %2028 = vmatpush1.msra.mxu0 0.0
      %2029 = vmatprep.subr.mxu0 0.0
      %2030 = vmatpush1.msra.mxu0 0.0
      %2031 = vmatprep.subr.mxu0 0.0
      %2032 = vmatpush1.msra.mxu0 0.0
      %2033 = vmatprep.subr.mxu0 0.0
      %2034 = vmatpush1.msra.mxu0 0.0
      %2035 = vmatprep.subr.mxu0 0.0
      %2036 = vmatpush1.msra.mxu0 0.0
      %2037 = vmatprep.subr.mxu0 0.0
      %2038 = vmatpush1.msra.mxu0 0.0
      %2039 = vmatprep.subr.mxu0 0.0
      %2040 = vmatpush1.msra.mxu0 0.0
      %2041 = vmatprep.subr.mxu0 0.0
      %2042 = vmatpush1.msra.mxu0 0.0
      %2043 = vmatprep.subr.mxu0 0.0
      %2044 = vmatpush1.msra.mxu0 0.0
      %2045 = vmatprep.subr.mxu0 0.0
      %2046 = vmatpush1.msra.mxu0 0.0
      %2047 = vmatprep.subr.mxu0 0.0
      %2048 = vmatpush1.msra.mxu0 0.0
      %2049 = vmatprep.subr.mxu0 0.0
      %2050 = vmatpush1.msra.mxu0 0.0
      %2051 = vmatprep.subr.mxu0 0.0
      %2052 = vmatpush1.msra.mxu0 0.0
      %2053 = vmatprep.subr.mxu0 0.0
      %2054 = vmatpush1.msra.mxu0 0.0
      %2055 = vmatprep.subr.mxu0 0.0
      %2056 = vmatpush1.msra.mxu0 %v2018
      %2057 = vmatprep.subr.mxu0 0.0
      %2058 = vmatpush2.msra.mxu0 0.0
      %2059 = vmatprep.subr.mxu0 0.0
      %2060 = vmatpush2.msra.mxu0 0.0
      %2061 = vmatprep.subr.mxu0 0.0
      %2062 = vmatpush2.msra.mxu0 0.0
      %2063 = vmatprep.subr.mxu0 0.0
      %2064 = vmatpush2.msra.mxu0 0.0
      %2065 = vmatprep.subr.mxu0 0.0
      %2066 = vmatpush2.msra.mxu0 0.0
      %2067 = vmatprep.subr.mxu0 0.0
      %2068 = vmatpush2.msra.mxu0 0.0
      %2069 = vmatprep.subr.mxu0 0.0
      %2070 = vmatpush2.msra.mxu0 0.0
      %2071 = vmatprep.subr.mxu0 0.0
      %2072 = vmatpush2.msra.mxu0 0.0
      %2073 = vmatprep.subr.mxu0 0.0
      %2074 = vmatpush2.msra.mxu0 0.0
      %2075 = vmatprep.subr.mxu0 0.0
      %2076 = vmatpush2.msra.mxu0 0.0
      %2077 = vmatprep.subr.mxu0 0.0
      %2078 = vmatpush2.msra.mxu0 0.0
      %2079 = vmatprep.subr.mxu0 0.0
      %2080 = vmatpush2.msra.mxu0 0.0
      %2081 = vmatprep.subr.mxu0 0.0
      %2082 = vmatpush2.msra.mxu0 0.0
      %2083 = vmatprep.subr.mxu0 0.0
      %2084 = vmatpush2.msra.mxu0 0.0
      %2085 = vmatprep.subr.mxu0 0.0
      %2086 = vmatpush2.msra.mxu0 0.0
      %2087 = vmatprep.subr.mxu0 0.0
      %2088 = vmatpush2.msra.mxu0 0.0
      %2089 = vmatprep.mubr.f32.mxu0 0.0
      %2090 = vmatmul.mubr.f32.gmra.mxu0 %v2020
      %v2091 = vpop.f32.mrf.mxu0
      %v2092 = vadd.f32 0.0, %v2091
      %v2093 = vpop.f32.mrf.mxu0
      %2094 = vmatprep.mubr.f32.mxu0 0.0
      %2095 = vmatmul.mubr.f32.gmra.mxu0 %v2023
      %v2096 = vpop.f32.mrf.mxu0
      %v2097 = vadd.f32 0.0, %v2096
      %v2098 = vpop.f32.mrf.mxu0
      %2099 = vdwg.mxu0
      %v2100 = vadd.f32 %v1675, %v2092
      %v2101 = vadd.f32 %v1680, %v2097
      %2102 = vrot.lane.b32.xlu0 %v831, 104
      %v2103 = vpop.permute.xlu0 %2102
      %2104 = vrot.lane.b32.xlu0 %v831, 72
      %v2105 = vpop.permute.xlu0 %2104
      %v2106 = vsel %vm842, %v2103, 0
      %v2108 = vsel %vm842, %v2105, 0
      %2110 = vmatprep.subr.mxu0 0.0
      %2111 = vmatpush1.xpose.msra.mxu0 0.0
      %2112 = vmatprep.subr.mxu0 0.0
      %2113 = vmatpush1.xpose.msra.mxu0 0.0
      %2114 = vmatprep.subr.mxu0 0.0
      %2115 = vmatpush1.xpose.msra.mxu0 0.0
      %2116 = vmatprep.subr.mxu0 0.0
      %2117 = vmatpush1.xpose.msra.mxu0 0.0
      %2118 = vmatprep.subr.mxu0 0.0
      %2119 = vmatpush1.xpose.msra.mxu0 0.0
      %2120 = vmatprep.subr.mxu0 0.0
      %2121 = vmatpush1.xpose.msra.mxu0 0.0
      %2122 = vmatprep.subr.mxu0 0.0
      %2123 = vmatpush1.xpose.msra.mxu0 0.0
      %2124 = vmatprep.subr.mxu0 0.0
      %2125 = vmatpush1.xpose.msra.mxu0 0.0
      %2126 = vmatprep.subr.mxu0 0.0
      %2127 = vmatpush1.xpose.msra.mxu0 0.0
      %2128 = vmatprep.subr.mxu0 0.0
      %2129 = vmatpush1.xpose.msra.mxu0 0.0
      %2130 = vmatprep.subr.mxu0 0.0
      %2131 = vmatpush1.xpose.msra.mxu0 0.0
      %2132 = vmatprep.subr.mxu0 0.0
      %2133 = vmatpush1.xpose.msra.mxu0 0.0
      %2134 = vmatprep.subr.mxu0 0.0
      %2135 = vmatpush1.xpose.msra.mxu0 0.0
      %2136 = vmatprep.subr.mxu0 0.0
      %2137 = vmatpush1.xpose.msra.mxu0 0.0
      %2138 = vmatprep.subr.mxu0 0.0
      %2139 = vmatpush1.xpose.msra.mxu0 0.0
      %2140 = vmatprep.subr.mxu0 0.0
      %2141 = vmatpush1.xpose.msra.mxu0 %v2108
      %2142 = vmatprep.subr.mxu0 0.0
      %2143 = vmatpush2.xpose.msra.mxu0 0.0
      %2144 = vmatprep.subr.mxu0 0.0
      %2145 = vmatpush2.xpose.msra.mxu0 0.0
      %2146 = vmatprep.subr.mxu0 0.0
      %2147 = vmatpush2.xpose.msra.mxu0 0.0
      %2148 = vmatprep.subr.mxu0 0.0
      %2149 = vmatpush2.xpose.msra.mxu0 0.0
      %2150 = vmatprep.subr.mxu0 0.0
      %2151 = vmatpush2.xpose.msra.mxu0 0.0
      %2152 = vmatprep.subr.mxu0 0.0
      %2153 = vmatpush2.xpose.msra.mxu0 0.0
      %2154 = vmatprep.subr.mxu0 0.0
      %2155 = vmatpush2.xpose.msra.mxu0 0.0
      %2156 = vmatprep.subr.mxu0 0.0
      %2157 = vmatpush2.xpose.msra.mxu0 0.0
      %2158 = vmatprep.subr.mxu0 0.0
      %2159 = vmatpush2.xpose.msra.mxu0 0.0
      %2160 = vmatprep.subr.mxu0 0.0
      %2161 = vmatpush2.xpose.msra.mxu0 0.0
      %2162 = vmatprep.subr.mxu0 0.0
      %2163 = vmatpush2.xpose.msra.mxu0 0.0
      %2164 = vmatprep.subr.mxu0 0.0
      %2165 = vmatpush2.xpose.msra.mxu0 0.0
      %2166 = vmatprep.subr.mxu0 0.0
      %2167 = vmatpush2.xpose.msra.mxu0 0.0
      %2168 = vmatprep.subr.mxu0 0.0
      %2169 = vmatpush2.xpose.msra.mxu0 0.0
      %2170 = vmatprep.subr.mxu0 0.0
      %2171 = vmatpush2.xpose.msra.mxu0 0.0
      %2172 = vmatprep.subr.mxu0 0.0
      %2173 = vmatpush2.xpose.msra.mxu0 0.0
      %2174 = vmatprep.mubr.f32.mxu0 0.0
      %2175 = vmatmul.mubr.f32.gmra.mxu0 %v2106
      %v2176 = vpop.f32.mrf.mxu0
      %v2177 = vadd.f32 0.0, %v2176
      %v2178 = vpop.f32.mrf.mxu0
      %2179 = vdwg.mxu0
      %2180 = vrot.lane.b32.xlu0 %v836, 104
      %v2181 = vpop.permute.xlu0 %2180
      %2182 = vrot.lane.b32.xlu0 %v836, 72
      %v2183 = vpop.permute.xlu0 %2182
      %v2184 = vsel %vm842, %v2181, 0
      %v2186 = vsel %vm842, %v2183, 0
      %2188 = vmatprep.subr.mxu0 0.0
      %2189 = vmatpush1.xpose.msra.mxu0 0.0
      %2190 = vmatprep.subr.mxu0 0.0
      %2191 = vmatpush1.xpose.msra.mxu0 0.0
      %2192 = vmatprep.subr.mxu0 0.0
      %2193 = vmatpush1.xpose.msra.mxu0 0.0
      %2194 = vmatprep.subr.mxu0 0.0
      %2195 = vmatpush1.xpose.msra.mxu0 0.0
      %2196 = vmatprep.subr.mxu0 0.0
      %2197 = vmatpush1.xpose.msra.mxu0 0.0
      %2198 = vmatprep.subr.mxu0 0.0
      %2199 = vmatpush1.xpose.msra.mxu0 0.0
      %2200 = vmatprep.subr.mxu0 0.0
      %2201 = vmatpush1.xpose.msra.mxu0 0.0
      %2202 = vmatprep.subr.mxu0 0.0
      %2203 = vmatpush1.xpose.msra.mxu0 0.0
      %2204 = vmatprep.subr.mxu0 0.0
      %2205 = vmatpush1.xpose.msra.mxu0 0.0
      %2206 = vmatprep.subr.mxu0 0.0
      %2207 = vmatpush1.xpose.msra.mxu0 0.0
      %2208 = vmatprep.subr.mxu0 0.0
      %2209 = vmatpush1.xpose.msra.mxu0 0.0
      %2210 = vmatprep.subr.mxu0 0.0
      %2211 = vmatpush1.xpose.msra.mxu0 0.0
      %2212 = vmatprep.subr.mxu0 0.0
      %2213 = vmatpush1.xpose.msra.mxu0 0.0
      %2214 = vmatprep.subr.mxu0 0.0
      %2215 = vmatpush1.xpose.msra.mxu0 0.0
      %2216 = vmatprep.subr.mxu0 0.0
      %2217 = vmatpush1.xpose.msra.mxu0 0.0
      %2218 = vmatprep.subr.mxu0 0.0
      %2219 = vmatpush1.xpose.msra.mxu0 %v2186
      %2220 = vmatprep.subr.mxu0 0.0
      %2221 = vmatpush2.xpose.msra.mxu0 0.0
      %2222 = vmatprep.subr.mxu0 0.0
      %2223 = vmatpush2.xpose.msra.mxu0 0.0
      %2224 = vmatprep.subr.mxu0 0.0
      %2225 = vmatpush2.xpose.msra.mxu0 0.0
      %2226 = vmatprep.subr.mxu0 0.0
      %2227 = vmatpush2.xpose.msra.mxu0 0.0
      %2228 = vmatprep.subr.mxu0 0.0
      %2229 = vmatpush2.xpose.msra.mxu0 0.0
      %2230 = vmatprep.subr.mxu0 0.0
      %2231 = vmatpush2.xpose.msra.mxu0 0.0
      %2232 = vmatprep.subr.mxu0 0.0
      %2233 = vmatpush2.xpose.msra.mxu0 0.0
      %2234 = vmatprep.subr.mxu0 0.0
      %2235 = vmatpush2.xpose.msra.mxu0 0.0
      %2236 = vmatprep.subr.mxu0 0.0
      %2237 = vmatpush2.xpose.msra.mxu0 0.0
      %2238 = vmatprep.subr.mxu0 0.0
      %2239 = vmatpush2.xpose.msra.mxu0 0.0
      %2240 = vmatprep.subr.mxu0 0.0
      %2241 = vmatpush2.xpose.msra.mxu0 0.0
      %2242 = vmatprep.subr.mxu0 0.0
      %2243 = vmatpush2.xpose.msra.mxu0 0.0
      %2244 = vmatprep.subr.mxu0 0.0
      %2245 = vmatpush2.xpose.msra.mxu0 0.0
      %2246 = vmatprep.subr.mxu0 0.0
      %2247 = vmatpush2.xpose.msra.mxu0 0.0
      %2248 = vmatprep.subr.mxu0 0.0
      %2249 = vmatpush2.xpose.msra.mxu0 0.0
      %2250 = vmatprep.subr.mxu0 0.0
      %2251 = vmatpush2.xpose.msra.mxu0 0.0
      %2252 = vmatprep.mubr.f32.mxu0 0.0
      %2253 = vmatmul.mubr.f32.gmra.mxu0 %v2184
      %v2254 = vpop.f32.mrf.mxu0
      %v2255 = vadd.f32 0.0, %v2254
      %v2256 = vpop.f32.mrf.mxu0
      %2257 = vdwg.mxu0
      %v2258 = vmul.f32 %v2177, 0.35355338
      %v2259 = vmul.f32 %v2255, 0.35355338
      %v2260 = vadd.f32 %v2258, %v1001
      %v2261 = vadd.f32 %v2259, %v1005
      %v2262 = vsel %vm842, %v2260, -inf
      %2263 = vmax.xlane.f32.xlu0 %v2262
      %v2264 = vpop.xlane.xlu0 %2263
      %v2265 = vsel %vm842, %v2261, -inf
      %2266 = vmax.xlane.f32.xlu0 %v2265
      %v2267 = vpop.xlane.xlu0 %2266
      %v2268 = vsub.f32 %v2260, %v2264
      %v2269 = vsub.f32 %v2261, %v2267
      %v2270 = vmul.f32 %v2268, 1.442695
      %v2271 = vpow.pop %v2270
      %v2272 = vmul.f32 %v2269, 1.442695
      %v2273 = vpow.pop %v2272
      %v2274 = vsel %vm842, %v2271, 0.0
      %2275 = vadd.xlane.f32.xlu0 %v2274
      %v2276 = vpop.xlane.xlu0 %2275
      %v2277 = vsel %vm842, %v2273, 0.0
      %2278 = vadd.xlane.f32.xlu0 %v2277
      %v2279 = vpop.xlane.xlu0 %2278
      %v2280 = vrcp.pop %v2276
      %v2281 = vrcp.pop %v2279
      %v2282 = vmul.f32 %v2271, %v2280
      %v2283 = vmul.f32 %v2273, %v2281
      %2284 = vrot.lane.b32.xlu0 %v831, 40
      %v2285 = vpop.permute.xlu0 %2284
      %v2288 = vsel %vm842, %v2282, 0
      %2290 = vmatprep.subr.mxu0 0.0
      %2291 = vmatpush1.msra.mxu0 0.0
      %2292 = vmatprep.subr.mxu0 0.0
      %2293 = vmatpush1.msra.mxu0 0.0
      %2294 = vmatprep.subr.mxu0 0.0
      %2295 = vmatpush1.msra.mxu0 0.0
      %2296 = vmatprep.subr.mxu0 0.0
      %2297 = vmatpush1.msra.mxu0 0.0
      %2298 = vmatprep.subr.mxu0 0.0
      %2299 = vmatpush1.msra.mxu0 0.0
      %2300 = vmatprep.subr.mxu0 0.0
      %2301 = vmatpush1.msra.mxu0 0.0
      %2302 = vmatprep.subr.mxu0 0.0
      %2303 = vmatpush1.msra.mxu0 0.0
      %2304 = vmatprep.subr.mxu0 0.0
      %2305 = vmatpush1.msra.mxu0 0.0
      %2306 = vmatprep.subr.mxu0 0.0
      %2307 = vmatpush1.msra.mxu0 0.0
      %2308 = vmatprep.subr.mxu0 0.0
      %2309 = vmatpush1.msra.mxu0 0.0
      %2310 = vmatprep.subr.mxu0 0.0
      %2311 = vmatpush1.msra.mxu0 0.0
      %2312 = vmatprep.subr.mxu0 0.0
      %2313 = vmatpush1.msra.mxu0 0.0
      %2314 = vmatprep.subr.mxu0 0.0
      %2315 = vmatpush1.msra.mxu0 0.0
      %2316 = vmatprep.subr.mxu0 0.0
      %2317 = vmatpush1.msra.mxu0 0.0
      %2318 = vmatprep.subr.mxu0 0.0
      %2319 = vmatpush1.msra.mxu0 0.0
      %2320 = vmatprep.subr.mxu0 0.0
      %2321 = vmatpush1.msra.mxu0 %v2285
      %2322 = vmatprep.subr.mxu0 0.0
      %2323 = vmatpush2.msra.mxu0 0.0
      %2324 = vmatprep.subr.mxu0 0.0
      %2325 = vmatpush2.msra.mxu0 0.0
      %2326 = vmatprep.subr.mxu0 0.0
      %2327 = vmatpush2.msra.mxu0 0.0
      %2328 = vmatprep.subr.mxu0 0.0
      %2329 = vmatpush2.msra.mxu0 0.0
      %2330 = vmatprep.subr.mxu0 0.0
      %2331 = vmatpush2.msra.mxu0 0.0
      %2332 = vmatprep.subr.mxu0 0.0
      %2333 = vmatpush2.msra.mxu0 0.0
      %2334 = vmatprep.subr.mxu0 0.0
      %2335 = vmatpush2.msra.mxu0 0.0
      %2336 = vmatprep.subr.mxu0 0.0
      %2337 = vmatpush2.msra.mxu0 0.0
      %2338 = vmatprep.subr.mxu0 0.0
      %2339 = vmatpush2.msra.mxu0 0.0
      %2340 = vmatprep.subr.mxu0 0.0
      %2341 = vmatpush2.msra.mxu0 0.0
      %2342 = vmatprep.subr.mxu0 0.0
      %2343 = vmatpush2.msra.mxu0 0.0
      %2344 = vmatprep.subr.mxu0 0.0
      %2345 = vmatpush2.msra.mxu0 0.0
      %2346 = vmatprep.subr.mxu0 0.0
      %2347 = vmatpush2.msra.mxu0 0.0
      %2348 = vmatprep.subr.mxu0 0.0
      %2349 = vmatpush2.msra.mxu0 0.0
      %2350 = vmatprep.subr.mxu0 0.0
      %2351 = vmatpush2.msra.mxu0 0.0
      %2352 = vmatprep.subr.mxu0 0.0
      %2353 = vmatpush2.msra.mxu0 0.0
      %2354 = vmatprep.mubr.f32.mxu0 0.0
      %2355 = vmatmul.mubr.f32.gmra.mxu0 %v2288
      %v2356 = vpop.f32.mrf.mxu0
      %v2357 = vadd.f32 0.0, %v2356
      %v2358 = vpop.f32.mrf.mxu0
      %2359 = vdwg.mxu0
      %2360 = vrot.lane.b32.xlu0 %v836, 40
      %v2361 = vpop.permute.xlu0 %2360
      %v2364 = vsel %vm842, %v2283, 0
      %2366 = vmatprep.subr.mxu0 0.0
      %2367 = vmatpush1.msra.mxu0 0.0
      %2368 = vmatprep.subr.mxu0 0.0
      %2369 = vmatpush1.msra.mxu0 0.0
      %2370 = vmatprep.subr.mxu0 0.0
      %2371 = vmatpush1.msra.mxu0 0.0
      %2372 = vmatprep.subr.mxu0 0.0
      %2373 = vmatpush1.msra.mxu0 0.0
      %2374 = vmatprep.subr.mxu0 0.0
      %2375 = vmatpush1.msra.mxu0 0.0
      %2376 = vmatprep.subr.mxu0 0.0
      %2377 = vmatpush1.msra.mxu0 0.0
      %2378 = vmatprep.subr.mxu0 0.0
      %2379 = vmatpush1.msra.mxu0 0.0
      %2380 = vmatprep.subr.mxu0 0.0
      %2381 = vmatpush1.msra.mxu0 0.0
      %2382 = vmatprep.subr.mxu0 0.0
      %2383 = vmatpush1.msra.mxu0 0.0
      %2384 = vmatprep.subr.mxu0 0.0
      %2385 = vmatpush1.msra.mxu0 0.0
      %2386 = vmatprep.subr.mxu0 0.0
      %2387 = vmatpush1.msra.mxu0 0.0
      %2388 = vmatprep.subr.mxu0 0.0
      %2389 = vmatpush1.msra.mxu0 0.0
      %2390 = vmatprep.subr.mxu0 0.0
      %2391 = vmatpush1.msra.mxu0 0.0
      %2392 = vmatprep.subr.mxu0 0.0
      %2393 = vmatpush1.msra.mxu0 0.0
      %2394 = vmatprep.subr.mxu0 0.0
      %2395 = vmatpush1.msra.mxu0 0.0
      %2396 = vmatprep.subr.mxu0 0.0
      %2397 = vmatpush1.msra.mxu0 %v2361
      %2398 = vmatprep.subr.mxu0 0.0
      %2399 = vmatpush2.msra.mxu0 0.0
      %2400 = vmatprep.subr.mxu0 0.0
      %2401 = vmatpush2.msra.mxu0 0.0
      %2402 = vmatprep.subr.mxu0 0.0
      %2403 = vmatpush2.msra.mxu0 0.0
      %2404 = vmatprep.subr.mxu0 0.0
      %2405 = vmatpush2.msra.mxu0 0.0
      %2406 = vmatprep.subr.mxu0 0.0
      %2407 = vmatpush2.msra.mxu0 0.0
      %2408 = vmatprep.subr.mxu0 0.0
      %2409 = vmatpush2.msra.mxu0 0.0
      %2410 = vmatprep.subr.mxu0 0.0
      %2411 = vmatpush2.msra.mxu0 0.0
      %2412 = vmatprep.subr.mxu0 0.0
      %2413 = vmatpush2.msra.mxu0 0.0
      %2414 = vmatprep.subr.mxu0 0.0
      %2415 = vmatpush2.msra.mxu0 0.0
      %2416 = vmatprep.subr.mxu0 0.0
      %2417 = vmatpush2.msra.mxu0 0.0
      %2418 = vmatprep.subr.mxu0 0.0
      %2419 = vmatpush2.msra.mxu0 0.0
      %2420 = vmatprep.subr.mxu0 0.0
      %2421 = vmatpush2.msra.mxu0 0.0
      %2422 = vmatprep.subr.mxu0 0.0
      %2423 = vmatpush2.msra.mxu0 0.0
      %2424 = vmatprep.subr.mxu0 0.0
      %2425 = vmatpush2.msra.mxu0 0.0
      %2426 = vmatprep.subr.mxu0 0.0
      %2427 = vmatpush2.msra.mxu0 0.0
      %2428 = vmatprep.subr.mxu0 0.0
      %2429 = vmatpush2.msra.mxu0 0.0
      %2430 = vmatprep.mubr.f32.mxu0 0.0
      %2431 = vmatmul.mubr.f32.gmra.mxu0 %v2364
      %v2432 = vpop.f32.mrf.mxu0
      %v2433 = vadd.f32 0.0, %v2432
      %v2434 = vpop.f32.mrf.mxu0
      %2435 = vdwg.mxu0
      %s2436 = scalar_lea.vmem %s647, 24
      %v2437 = vld [vmem:[%s2436] sm:$0xff]
      %v2439 = vsel %vm842, %v2357, 0
      %v2442 = vsel %vm842, %v2433, 0
      %2444 = vmatprep.subr.mxu0 0.0
      %2445 = vmatpush1.msra.mxu0 0.0
      %2446 = vmatprep.subr.mxu0 0.0
      %2447 = vmatpush1.msra.mxu0 0.0
      %2448 = vmatprep.subr.mxu0 0.0
      %2449 = vmatpush1.msra.mxu0 0.0
      %2450 = vmatprep.subr.mxu0 0.0
      %2451 = vmatpush1.msra.mxu0 0.0
      %2452 = vmatprep.subr.mxu0 0.0
      %2453 = vmatpush1.msra.mxu0 0.0
      %2454 = vmatprep.subr.mxu0 0.0
      %2455 = vmatpush1.msra.mxu0 0.0
      %2456 = vmatprep.subr.mxu0 0.0
      %2457 = vmatpush1.msra.mxu0 0.0
      %2458 = vmatprep.subr.mxu0 0.0
      %2459 = vmatpush1.msra.mxu0 0.0
      %2460 = vmatprep.subr.mxu0 0.0
      %2461 = vmatpush1.msra.mxu0 0.0
      %2462 = vmatprep.subr.mxu0 0.0
      %2463 = vmatpush1.msra.mxu0 0.0
      %2464 = vmatprep.subr.mxu0 0.0
      %2465 = vmatpush1.msra.mxu0 0.0
      %2466 = vmatprep.subr.mxu0 0.0
      %2467 = vmatpush1.msra.mxu0 0.0
      %2468 = vmatprep.subr.mxu0 0.0
      %2469 = vmatpush1.msra.mxu0 0.0
      %2470 = vmatprep.subr.mxu0 0.0
      %2471 = vmatpush1.msra.mxu0 0.0
      %2472 = vmatprep.subr.mxu0 0.0
      %2473 = vmatpush1.msra.mxu0 0.0
      %2474 = vmatprep.subr.mxu0 0.0
      %2475 = vmatpush1.msra.mxu0 %v2437
      %2476 = vmatprep.subr.mxu0 0.0
      %2477 = vmatpush2.msra.mxu0 0.0
      %2478 = vmatprep.subr.mxu0 0.0
      %2479 = vmatpush2.msra.mxu0 0.0
      %2480 = vmatprep.subr.mxu0 0.0
      %2481 = vmatpush2.msra.mxu0 0.0
      %2482 = vmatprep.subr.mxu0 0.0
      %2483 = vmatpush2.msra.mxu0 0.0
      %2484 = vmatprep.subr.mxu0 0.0
      %2485 = vmatpush2.msra.mxu0 0.0
      %2486 = vmatprep.subr.mxu0 0.0
      %2487 = vmatpush2.msra.mxu0 0.0
      %2488 = vmatprep.subr.mxu0 0.0
      %2489 = vmatpush2.msra.mxu0 0.0
      %2490 = vmatprep.subr.mxu0 0.0
      %2491 = vmatpush2.msra.mxu0 0.0
      %2492 = vmatprep.subr.mxu0 0.0
      %2493 = vmatpush2.msra.mxu0 0.0
      %2494 = vmatprep.subr.mxu0 0.0
      %2495 = vmatpush2.msra.mxu0 0.0
      %2496 = vmatprep.subr.mxu0 0.0
      %2497 = vmatpush2.msra.mxu0 0.0
      %2498 = vmatprep.subr.mxu0 0.0
      %2499 = vmatpush2.msra.mxu0 0.0
      %2500 = vmatprep.subr.mxu0 0.0
      %2501 = vmatpush2.msra.mxu0 0.0
      %2502 = vmatprep.subr.mxu0 0.0
      %2503 = vmatpush2.msra.mxu0 0.0
      %2504 = vmatprep.subr.mxu0 0.0
      %2505 = vmatpush2.msra.mxu0 0.0
      %2506 = vmatprep.subr.mxu0 0.0
      %2507 = vmatpush2.msra.mxu0 0.0
      %2508 = vmatprep.mubr.f32.mxu0 0.0
      %2509 = vmatmul.mubr.f32.gmra.mxu0 %v2439
      %v2510 = vpop.f32.mrf.mxu0
      %v2511 = vadd.f32 0.0, %v2510
      %v2512 = vpop.f32.mrf.mxu0
      %2513 = vmatprep.mubr.f32.mxu0 0.0
      %2514 = vmatmul.mubr.f32.gmra.mxu0 %v2442
      %v2515 = vpop.f32.mrf.mxu0
      %v2516 = vadd.f32 0.0, %v2515
      %v2517 = vpop.f32.mrf.mxu0
      %2518 = vdwg.mxu0
      %v2519 = vadd.f32 %v2100, %v2511
      %v2520 = vadd.f32 %v2101, %v2516
      %v2521 = vld [vmem:[%s650] sm:$0x1]
      %v2523 = vlaneseq
      %v2524 = vshrl.u32 %v2523, 7
      %v2525 = vsub.s32 0, %v2524
      %v2526 = vrot.slane %v2521, %v2525
      %v2528 = vadd.f32 %v2519, %v2526
      %v2529 = vadd.f32 %v2520, %v2526
      %v2530 = vadd.f32 %v742, %v2528
      %v2531 = vadd.f32 %v743, %v2529
      %v2532 = vld [vmem:[%s653] sm:$0x1]
      %v2533 = vld [vmem:[%s656] sm:$0x1]
      %v2534 = vsel %vm757, %v2530, 0.0
      %2535 = vadd.xlane.f32.xlu0 %v2534
      %v2536 = vpop.xlane.xlu0 %2535
      %v2537 = vsel %vm757, %v2531, 0.0
      %2538 = vadd.xlane.f32.xlu0 %v2537
      %v2539 = vpop.xlane.xlu0 %2538
      %v2540 = vrcp.pop 32.0
      %v2541 = vmul.f32 %v2536, %v2540
      %v2542 = vmul.f32 %v2539, %v2540
      %v2543 = vsub.f32 %v2530, %v2541
      %v2544 = vsub.f32 %v2531, %v2542
      %v2545 = vmul.f32 %v2543, %v2543
      %v2546 = vmul.f32 %v2544, %v2544
      %v2547 = vsel %vm757, %v2545, 0.0
      %2548 = vadd.xlane.f32.xlu0 %v2547
      %v2549 = vpop.xlane.xlu0 %2548
      %v2550 = vsel %vm757, %v2546, 0.0
      %2551 = vadd.xlane.f32.xlu0 %v2550
      %v2552 = vpop.xlane.xlu0 %2551
      %v2553 = vmul.f32 %v2549, %v2540
      %v2554 = vmul.f32 %v2552, %v2540
      %v2555 = vadd.f32 %v2553, 1e-12
      %v2556 = vadd.f32 %v2554, 1e-12
      %v2557 = vrsqrt.pop %v2555
      %v2558 = vrsqrt.pop %v2556
      %v2559 = vmul.f32 %v2543, %v2557
      %v2560 = vmul.f32 %v2544, %v2558
      %v2562 = vlaneseq
      %v2563 = vshrl.u32 %v2562, 7
      %v2564 = vsub.s32 0, %v2563
      %v2565 = vrot.slane %v2532, %v2564
      %v2567 = vmul.f32 %v2559, %v2565
      %v2568 = vmul.f32 %v2560, %v2565
      %v2570 = vlaneseq
      %v2571 = vshrl.u32 %v2570, 7
      %v2572 = vsub.s32 0, %v2571
      %v2573 = vrot.slane %v2533, %v2572
      %v2575 = vadd.f32 %v2567, %v2573
      %v2576 = vadd.f32 %v2568, %v2573
      %v2577 = vld [vmem:[%s661] sm:$0xff]
      %v2578 = vld [vmem:[%s661 + $0x8] sm:$0xff]
      %v2579 = vld [vmem:[%s661 + $0x10] sm:$0xff]
      %v2580 = vld [vmem:[%s661 + $0x18] sm:$0xff]
      %v2581 = vld [vmem:[%s664] sm:$0x1]
      %v2583 = vlaneseq
      %v2584 = vshrl.u32 %v2583, 7
      %v2585 = vsub.s32 0, %v2584
      %v2586 = vrot.slane %v2581, %v2585
      %v2589 = vsel %vm757, %v2575, 0
      %v2592 = vsel %vm757, %v2576, 0
      %2594 = vmatprep.subr.mxu0 0.0
      %2595 = vmatpush1.msra.mxu0 0.0
      %2596 = vmatprep.subr.mxu0 0.0
      %2597 = vmatpush1.msra.mxu0 0.0
      %2598 = vmatprep.subr.mxu0 0.0
      %2599 = vmatpush1.msra.mxu0 0.0
      %2600 = vmatprep.subr.mxu0 0.0
      %2601 = vmatpush1.msra.mxu0 0.0
      %2602 = vmatprep.subr.mxu0 0.0
      %2603 = vmatpush1.msra.mxu0 0.0
      %2604 = vmatprep.subr.mxu0 0.0
      %2605 = vmatpush1.msra.mxu0 0.0
      %2606 = vmatprep.subr.mxu0 0.0
      %2607 = vmatpush1.msra.mxu0 0.0
      %2608 = vmatprep.subr.mxu0 0.0
      %2609 = vmatpush1.msra.mxu0 0.0
      %2610 = vmatprep.subr.mxu0 0.0
      %2611 = vmatpush1.msra.mxu0 0.0
      %2612 = vmatprep.subr.mxu0 0.0
      %2613 = vmatpush1.msra.mxu0 0.0
      %2614 = vmatprep.subr.mxu0 0.0
      %2615 = vmatpush1.msra.mxu0 0.0
      %2616 = vmatprep.subr.mxu0 0.0
      %2617 = vmatpush1.msra.mxu0 0.0
      %2618 = vmatprep.subr.mxu0 0.0
      %2619 = vmatpush1.msra.mxu0 %v2580
      %2620 = vmatprep.subr.mxu0 0.0
      %2621 = vmatpush1.msra.mxu0 %v2579
      %2622 = vmatprep.subr.mxu0 0.0
      %2623 = vmatpush1.msra.mxu0 %v2578
      %2624 = vmatprep.subr.mxu0 0.0
      %2625 = vmatpush1.msra.mxu0 %v2577
      %2626 = vmatprep.subr.mxu0 0.0
      %2627 = vmatpush2.msra.mxu0 0.0
      %2628 = vmatprep.subr.mxu0 0.0
      %2629 = vmatpush2.msra.mxu0 0.0
      %2630 = vmatprep.subr.mxu0 0.0
      %2631 = vmatpush2.msra.mxu0 0.0
      %2632 = vmatprep.subr.mxu0 0.0
      %2633 = vmatpush2.msra.mxu0 0.0
      %2634 = vmatprep.subr.mxu0 0.0
      %2635 = vmatpush2.msra.mxu0 0.0
      %2636 = vmatprep.subr.mxu0 0.0
      %2637 = vmatpush2.msra.mxu0 0.0
      %2638 = vmatprep.subr.mxu0 0.0
      %2639 = vmatpush2.msra.mxu0 0.0
      %2640 = vmatprep.subr.mxu0 0.0
      %2641 = vmatpush2.msra.mxu0 0.0
      %2642 = vmatprep.subr.mxu0 0.0
      %2643 = vmatpush2.msra.mxu0 0.0
      %2644 = vmatprep.subr.mxu0 0.0
      %2645 = vmatpush2.msra.mxu0 0.0
      %2646 = vmatprep.subr.mxu0 0.0
      %2647 = vmatpush2.msra.mxu0 0.0
      %2648 = vmatprep.subr.mxu0 0.0
      %2649 = vmatpush2.msra.mxu0 0.0
      %2650 = vmatprep.subr.mxu0 0.0
      %2651 = vmatpush2.msra.mxu0 0.0
      %2652 = vmatprep.subr.mxu0 0.0
      %2653 = vmatpush2.msra.mxu0 0.0
      %2654 = vmatprep.subr.mxu0 0.0
      %2655 = vmatpush2.msra.mxu0 0.0
      %2656 = vmatprep.subr.mxu0 0.0
      %2657 = vmatpush2.msra.mxu0 0.0
      %2658 = vmatprep.mubr.f32.mxu0 0.0
      %2659 = vmatmul.mubr.f32.gmra.mxu0 %v2589
      %v2660 = vpop.f32.mrf.mxu0
      %v2661 = vadd.f32 %v2586, %v2660
      %v2662 = vpop.f32.mrf.mxu0
      %2663 = vmatprep.mubr.f32.mxu0 0.0
      %2664 = vmatmul.mubr.f32.gmra.mxu0 %v2592
      %v2665 = vpop.f32.mrf.mxu0
      %v2666 = vadd.f32 %v2586, %v2665
      %v2667 = vpop.f32.mrf.mxu0
      %2668 = vdwg.mxu0
      %v2669 = vmul.f32 %v2661, %v2661
      %v2670 = vmul.f32 %v2666, %v2666
      %v2671 = vmul.f32 %v2661, %v2669
      %v2672 = vmul.f32 %v2666, %v2670
      %v2673 = vmul.f32 %v2671, 0.044715
      %v2674 = vmul.f32 %v2672, 0.044715
      %v2675 = vadd.f32 %v2661, %v2673
      %v2676 = vadd.f32 %v2666, %v2674
      %v2677 = vmul.f32 %v2675, 0.7978846
      %v2678 = vmul.f32 %v2676, 0.7978846
      %v2679 = vtanh.pop %v2677
      %v2680 = vtanh.pop %v2678
      %v2681 = vadd.f32 %v2679, 1.0
      %v2682 = vadd.f32 %v2680, 1.0
      %v2683 = vmul.f32 %v2681, 0.5
      %v2684 = vmul.f32 %v2682, 0.5
      %v2685 = vmul.f32 %v2661, %v2683
      %v2686 = vmul.f32 %v2666, %v2684
      %v2687 = vld [vmem:[%s669] sm:$0xff]
      %v2688 = vld [vmem:[%s669 + $0x8] sm:$0xff]
      %v2689 = vld [vmem:[%s669 + $0x10] sm:$0xff]
      %v2690 = vld [vmem:[%s669 + $0x18] sm:$0xff]
      %v2691 = vld [vmem:[%s669 + $0x20] sm:$0xff]
      %v2692 = vld [vmem:[%s669 + $0x28] sm:$0xff]
      %v2693 = vld [vmem:[%s669 + $0x30] sm:$0xff]
      %v2694 = vld [vmem:[%s669 + $0x38] sm:$0xff]
      %v2695 = vld [vmem:[%s672] sm:$0x1]
      %v2697 = vlaneseq
      %v2698 = vshrl.u32 %v2697, 7
      %v2699 = vsub.s32 0, %v2698
      %v2700 = vrot.slane %v2695, %v2699
      %vm2702 = vcmask 523264
      %v2704 = vsel %vm2702, %v2685, 0
      %v2707 = vsel %vm2702, %v2686, 0
      %2709 = vmatprep.subr.mxu0 0.0
      %2710 = vmatpush1.msra.mxu0 0.0
      %2711 = vmatprep.subr.mxu0 0.0
      %2712 = vmatpush1.msra.mxu0 0.0
      %2713 = vmatprep.subr.mxu0 0.0
      %2714 = vmatpush1.msra.mxu0 0.0
      %2715 = vmatprep.subr.mxu0 0.0
      %2716 = vmatpush1.msra.mxu0 0.0
      %2717 = vmatprep.subr.mxu0 0.0
      %2718 = vmatpush1.msra.mxu0 0.0
      %2719 = vmatprep.subr.mxu0 0.0
      %2720 = vmatpush1.msra.mxu0 0.0
      %2721 = vmatprep.subr.mxu0 0.0
      %2722 = vmatpush1.msra.mxu0 0.0
      %2723 = vmatprep.subr.mxu0 0.0
      %2724 = vmatpush1.msra.mxu0 0.0
      %2725 = vmatprep.subr.mxu0 0.0
      %2726 = vmatpush1.msra.mxu0 %v2694
      %2727 = vmatprep.subr.mxu0 0.0
      %2728 = vmatpush1.msra.mxu0 %v2693
      %2729 = vmatprep.subr.mxu0 0.0
      %2730 = vmatpush1.msra.mxu0 %v2692
      %2731 = vmatprep.subr.mxu0 0.0
      %2732 = vmatpush1.msra.mxu0 %v2691
      %2733 = vmatprep.subr.mxu0 0.0
      %2734 = vmatpush1.msra.mxu0 %v2690
      %2735 = vmatprep.subr.mxu0 0.0
      %2736 = vmatpush1.msra.mxu0 %v2689
      %2737 = vmatprep.subr.mxu0 0.0
      %2738 = vmatpush1.msra.mxu0 %v2688
      %2739 = vmatprep.subr.mxu0 0.0
      %2740 = vmatpush1.msra.mxu0 %v2687
      %2741 = vmatprep.subr.mxu0 0.0
      %2742 = vmatpush2.msra.mxu0 0.0
      %2743 = vmatprep.subr.mxu0 0.0
      %2744 = vmatpush2.msra.mxu0 0.0
      %2745 = vmatprep.subr.mxu0 0.0
      %2746 = vmatpush2.msra.mxu0 0.0
      %2747 = vmatprep.subr.mxu0 0.0
      %2748 = vmatpush2.msra.mxu0 0.0
      %2749 = vmatprep.subr.mxu0 0.0
      %2750 = vmatpush2.msra.mxu0 0.0
      %2751 = vmatprep.subr.mxu0 0.0
      %2752 = vmatpush2.msra.mxu0 0.0
      %2753 = vmatprep.subr.mxu0 0.0
      %2754 = vmatpush2.msra.mxu0 0.0
      %2755 = vmatprep.subr.mxu0 0.0
      %2756 = vmatpush2.msra.mxu0 0.0
      %2757 = vmatprep.subr.mxu0 0.0
      %2758 = vmatpush2.msra.mxu0 0.0
      %2759 = vmatprep.subr.mxu0 0.0
      %2760 = vmatpush2.msra.mxu0 0.0
      %2761 = vmatprep.subr.mxu0 0.0
      %2762 = vmatpush2.msra.mxu0 0.0
      %2763 = vmatprep.subr.mxu0 0.0
      %2764 = vmatpush2.msra.mxu0 0.0
      %2765 = vmatprep.subr.mxu0 0.0
      %2766 = vmatpush2.msra.mxu0 0.0
      %2767 = vmatprep.subr.mxu0 0.0
      %2768 = vmatpush2.msra.mxu0 0.0
      %2769 = vmatprep.subr.mxu0 0.0
      %2770 = vmatpush2.msra.mxu0 0.0
      %2771 = vmatprep.subr.mxu0 0.0
      %2772 = vmatpush2.msra.mxu0 0.0
      %2773 = vmatprep.mubr.f32.mxu0 0.0
      %2774 = vmatmul.mubr.f32.gmra.mxu0 %v2704
      %v2775 = vpop.f32.mrf.mxu0
      %v2776 = vadd.f32 %v2700, %v2775
      %v2777 = vpop.f32.mrf.mxu0
      %2778 = vmatprep.mubr.f32.mxu0 0.0
      %2779 = vmatmul.mubr.f32.gmra.mxu0 %v2707
      %v2780 = vpop.f32.mrf.mxu0
      %v2781 = vadd.f32 %v2700, %v2780
      %v2782 = vpop.f32.mrf.mxu0
      %2783 = vdwg.mxu0
      %v2784 = vadd.f32 %v2575, %v2776
      %v2785 = vadd.f32 %v2576, %v2781
      %v2786 = vld [vmem:[%s675] sm:$0x1]
      %v2787 = vld [vmem:[%s678] sm:$0x1]
      %v2788 = vsel %vm757, %v2784, 0.0
      %2789 = vadd.xlane.f32.xlu0 %v2788
      %v2790 = vpop.xlane.xlu0 %2789
      %v2791 = vsel %vm757, %v2785, 0.0
      %2792 = vadd.xlane.f32.xlu0 %v2791
      %v2793 = vpop.xlane.xlu0 %2792
      %v2794 = vmul.f32 %v2790, %v2540
      %v2795 = vmul.f32 %v2793, %v2540
      %v2796 = vsub.f32 %v2784, %v2794
      %v2797 = vsub.f32 %v2785, %v2795
      %v2798 = vmul.f32 %v2796, %v2796
      %v2799 = vmul.f32 %v2797, %v2797
      %v2800 = vsel %vm757, %v2798, 0.0
      %2801 = vadd.xlane.f32.xlu0 %v2800
      %v2802 = vpop.xlane.xlu0 %2801
      %v2803 = vsel %vm757, %v2799, 0.0
      %2804 = vadd.xlane.f32.xlu0 %v2803
      %v2805 = vpop.xlane.xlu0 %2804
      %v2806 = vmul.f32 %v2802, %v2540
      %v2807 = vmul.f32 %v2805, %v2540
      %v2808 = vadd.f32 %v2806, 1e-12
      %v2809 = vadd.f32 %v2807, 1e-12
      %v2810 = vrsqrt.pop %v2808
      %v2811 = vrsqrt.pop %v2809
      %v2812 = vmul.f32 %v2796, %v2810
      %v2813 = vmul.f32 %v2797, %v2811
      %v2815 = vlaneseq
      %v2816 = vshrl.u32 %v2815, 7
      %v2817 = vsub.s32 0, %v2816
      %v2818 = vrot.slane %v2786, %v2817
      %v2820 = vmul.f32 %v2812, %v2818
      %v2821 = vmul.f32 %v2813, %v2818
      %v2823 = vlaneseq
      %v2824 = vshrl.u32 %v2823, 7
      %v2825 = vsub.s32 0, %v2824
      %v2826 = vrot.slane %v2787, %v2825
      %v2828 = vadd.f32 %v2820, %v2826
      %v2829 = vadd.f32 %v2821, %v2826
      %2830 = vst.msk [vmem:[#allocation2] sm:$0xff] %vm757, %v2828
      %2831 = vst.msk [vmem:[#allocation2 + $0x8] sm:$0xff] %vm757, %v2829
      %p2832 = scmp.eq.s32.totalorder %s27, 1
      // Predicated region
      $region89: #{_lambda_.2} parent=83 // pred_check
        %p2833 = pneg %p2832
      $region90: #{_lambda_.2} parent=83 // pred_check_branch
        %2835 = sbr.rel (%p2833) target = $region92
      $region91: #{_lambda_.2} parent=83 // pred_region
        %2836 = vst.msk [vmem:[%s16] sm:$0xff] %vm757, %v2828
        %2837 = vst.msk [vmem:[%s16 + $0x8] sm:$0xff] %vm757, %v2829
      $region92: #{_lambda_.2} parent=83 // pred_fallthru
        _
      // Predicated region
      $region93: #{_lambda_.2} parent=83 // pred_check
        %p2838 = pneg %p436
      $region94: #{_lambda_.2} parent=83 // pred_check_branch
        %2840 = sbr.rel (%p2838) target = $region96
      $region95: #{_lambda_.2} parent=83 // pred_region
        _
      $region96: #{_lambda_.2} parent=83 // pred_fallthru
        _
      // Predicated region
      $region97: #{_lambda_.2} parent=83 // pred_check
        %p2841 = pneg %p436
      $region98: #{_lambda_.2} parent=83 // pred_check_branch
        %2843 = sbr.rel (%p2841) target = $region100
      $region99: #{_lambda_.2} parent=83 // pred_region
        _
      $region100: #{_lambda_.2} parent=83 // pred_fallthru
        _
    $region84: #{_lambda_.2} parent=5 // pred_fallthru
      _
    %p2844 = scmp.le.s32.totalorder 2, %s22
    // Predicated region
    $region101: #{_lambda_.2} parent=5 // pred_check
      %p2845 = pneg %p2844
    $region102: #{_lambda_.2} parent=5 // pred_check_branch
      %2847 = sbr.rel (%p2845) target = $region104
    $region103: #{_lambda_.2} parent=5 // pred_region
      %s2848 = ssub.s32 %s22, 2
    $region104: #{_lambda_.2} parent=5 // pred_fallthru
      _
  $region6: #{_lambda_.2} parent=0 // loop_footer
    %s26 = sadd.s32 1, %s22
  $region7: #{_lambda_.2} parent=0 // loop_footer_branch
    %21 = sbr.rel target = $region3
  $region8: #{_lambda_.2} parent=0 // loop_exit
    _

</llo_original>
